<compile_context>
chip_gen: v7x
topology: tpu7x:2x2x1
jax: 0.10.0
libtpu: 0.0.40
codegen_flags: <defaults>
</compile_context>

<pallas_src>
import functools

import jax
import jax.numpy as jnp
from jax.experimental import pallas as pl
from jax.experimental.pallas import tpu as pltpu


# ---------------------------------------------------------------------------
# Kernel 1: fused synthetic encoder.
#   inputs : img_flat (B, 3, H*W)  -- NCHW flattened (free reshape), channels on
#            sublanes, pixels on lanes.
#   outputs: poly (B,1,H*W), tg2 (B, Hs*Ws, 128), class logits (B,1,2)
# ---------------------------------------------------------------------------
def _enc_kernel(img_ref, selt_ref, wp_ref, wf_ref, bf_ref, wc_ref, bc_ref,
                poly_ref, tg2_ref, cls_ref):
    x = img_ref[0]                                      # (3, HW)

    # poly_logits: 1x1 conv C=3 -> 1 as a VPU weighted sum (K=3 would waste the
    # MXU; output is lane-dense: pixels on lanes).
    poly = (wp_ref[0] * x[0:1, :] + wp_ref[1] * x[1:2, :]
            + wp_ref[2] * x[2:3, :] + wp_ref[3])        # (1, HW)
    poly_ref[0] = poly

    # tg2: stride-2 subsample expressed as a static 0/1 selection matmul
    # (full K = HW on the MXU, A @ B^T contraction), then C=3 -> 128 channel
    # mix as a VPU outer-product sum (again avoiding a K=3 MXU pass).
    xs_t = jax.lax.dot_general(
        selt_ref[...], x, (((1,), (1,)), ((), ())),
        preferred_element_type=jnp.float32)             # (Ps, 3)
    tg2 = (xs_t[:, 0:1] * wf_ref[0:1, :]
           + xs_t[:, 1:2] * wf_ref[1:2, :]
           + xs_t[:, 2:3] * wf_ref[2:3, :]
           + bf_ref[...])                               # (Ps, 128) lane-dense
    tg2_ref[0] = tg2

    # class_prob: global mean pool + linear + sigmoid.
    pooled = jnp.mean(x, axis=1, keepdims=True)                          # (3, 1)
    logits = jnp.sum(pooled * wc_ref[...], axis=0, keepdims=True) + bc_ref[...]
    cls_ref[0] = jax.nn.sigmoid(logits)                                  # (1, 2)


def enc_model_forward(img, params):
    """Synthetic encoder stand-in (TODO(synk): real enc_model unavailable)."""
    B, C, H, W = img.shape
    assert C == 3
    HW = H * W
    Hs, Ws = H // 2, W // 2
    Ps = Hs * Ws
    Cf = params["w_feat"].shape[1]                      # 128 (120 logical, padded)

    img_flat = img.reshape(B, C, HW).astype(jnp.float32)   # free reshape of NCHW

    # Static stride-2 pixel selection matrix (subsampled pixel q -> source pixel).
    # TODO(synk): for production image sizes this would be a strided DMA /
    # row-indexed BlockSpec rather than a dense (HW, Ps) one-hot matrix.
    q = jnp.arange(Ps)
    src = (2 * (q // Ws)) * W + 2 * (q % Ws)
    sel_t = (src[:, None] == jnp.arange(HW)[None, :]).astype(jnp.float32)  # (Ps, HW)

    wp = jnp.concatenate([params["w_poly"].reshape(3),
                          params["b_poly"].reshape(1)]).astype(jnp.float32)  # SMEM scalars
    wf = params["w_feat"].astype(jnp.float32)           # (3, 128)
    bf = params["b_feat"].reshape(1, Cf).astype(jnp.float32)
    wc = params["w_cls"].astype(jnp.float32)            # (3, 2)
    bc = params["b_cls"].reshape(1, 2).astype(jnp.float32)

    poly_out, tg2_out, cls_out = pl.pallas_call(
        _enc_kernel,
        out_shape=(
            jax.ShapeDtypeStruct((B, 1, HW), jnp.float32),
            jax.ShapeDtypeStruct((B, Ps, Cf), jnp.float32),
            jax.ShapeDtypeStruct((B, 1, 2), jnp.float32),
        ),
        grid=(B,),
        in_specs=[
            pl.BlockSpec((1, C, HW), lambda b: (b, 0, 0)),
            pl.BlockSpec((Ps, HW), lambda b: (0, 0)),
            pl.BlockSpec(memory_space=pltpu.MemorySpace.SMEM),   # [w0,w1,w2,b] poly
            pl.BlockSpec((C, Cf), lambda b: (0, 0)),
            pl.BlockSpec((1, Cf), lambda b: (0, 0)),
            pl.BlockSpec((C, 2), lambda b: (0, 0)),
            pl.BlockSpec((1, 2), lambda b: (0, 0)),
        ],
        out_specs=(
            pl.BlockSpec((1, 1, HW), lambda b: (b, 0, 0)),
            pl.BlockSpec((1, Ps, Cf), lambda b: (b, 0, 0)),
            pl.BlockSpec((1, 1, 2), lambda b: (b, 0, 0)),
        ),
        compiler_params=pltpu.CompilerParams(dimension_semantics=("parallel",)),
    )(img_flat, sel_t, wp, wf, bf, wc, bc)

    poly_logits = poly_out.reshape(B, 1, H, W)          # public NCHW (free reshape)
    class_prob = cls_out.reshape(B, 2)
    return tg2_out, poly_logits, class_prob             # tg2 kept flat (B, Ps, 128)


# ---------------------------------------------------------------------------
# Kernel 2: fused GCN head — manual DMA gather of hull-vertex feature rows from
# HBM + linear head + binary_hull offset, all in one grid step.
# ---------------------------------------------------------------------------
def _gcn_kernel(idx_ref, bin_ref, w_ref, b_ref, tg2_hbm, out_ref, gbuf, sems,
                *, n_rows):
    copies = []
    for i in range(n_rows):                             # static, small n_rows
        row = idx_ref[i]                                # SMEM scalar index
        copies.append(pltpu.make_async_copy(
            tg2_hbm.at[pl.ds(row, 1)], gbuf.at[pl.ds(i, 1)], sems.at[i]))
    for c in copies:
        c.start()
    for c in copies:
        c.wait()
    offs = jnp.dot(gbuf[...], w_ref[...],
                   preferred_element_type=jnp.float32) + b_ref[...]   # (BP, 2)
    out_ref[...] = bin_ref[...] + offs


def gcn_forward(tg2, feature_hull, binary_hull, params, feat_h, feat_w):
    """Synthetic PolyGNN stand-in (TODO(synk)): feature sample + linear head."""
    B, Ps, Cf = tg2.shape
    P = feature_hull.shape[1]
    BP = B * P

    fy = jnp.clip(feature_hull[..., 0], 0, feat_h - 1)
    fx = jnp.clip(feature_hull[..., 1], 0, feat_w - 1)
    flat_idx = (jnp.arange(B, dtype=jnp.int32)[:, None] * Ps
                + fy.astype(jnp.int32) * feat_w
                + fx.astype(jnp.int32)).reshape(BP)

    tg2_rows = tg2.reshape(B * Ps, Cf)                  # free reshape, stays in HBM
    binh = binary_hull.reshape(BP, 2).astype(jnp.float32)
    w = params["w_gcn"].astype(jnp.float32)             # (128, 2), rows >=120 zero
    b = params["b_gcn"].reshape(1, 2).astype(jnp.float32)

    pred = pl.pallas_call(
        functools.partial(_gcn_kernel, n_rows=BP),
        out_shape=jax.ShapeDtypeStruct((BP, 2), jnp.float32),
        grid=(1,),
        in_specs=[
            pl.BlockSpec(memory_space=pltpu.MemorySpace.SMEM),   # flat row indices
            pl.BlockSpec((BP, 2), lambda i: (0, 0)),             # binary hull
            pl.BlockSpec((Cf, 2), lambda i: (0, 0)),             # w_gcn
            pl.BlockSpec((1, 2), lambda i: (0, 0)),              # b_gcn
            pl.BlockSpec(memory_space=pl.ANY),                   # tg2 rows (HBM)
        ],
        out_specs=pl.BlockSpec((BP, 2), lambda i: (0, 0)),
        scratch_shapes=[
            pltpu.VMEM((BP, Cf), jnp.float32),
            pltpu.SemaphoreType.DMA((BP,)),
        ],
        compiler_params=pltpu.CompilerParams(dimension_semantics=("arbitrary",)),
    )(flat_idx, binh, w, b, tg2_rows)

    return {"pred_polys": pred.reshape(B, P, 2)}


# ---------------------------------------------------------------------------
# get_hull coordinate transforms — tiny (B*P*2 elements), done in plain jnp per
# review (a per-batch Pallas kernel here was pure launch overhead).
# ---------------------------------------------------------------------------
def hull_transforms(hull_xy, bbox, h1, w1, feat_h1, feat_w1):
    x = hull_xy[..., 0]                                 # i[0]
    y = hull_xy[..., 1]                                 # i[1]
    w = jnp.maximum(bbox[:, 2:3], 1e-6)                 # guard zero-sized boxes
    h = jnp.maximum(bbox[:, 3:4], 1e-6)
    # original: int() => trunc toward zero; feature: math.floor (coords here are
    # non-negative so both coincide, matching the reference).
    original = jnp.stack([y, x], axis=-1).astype(jnp.int32)
    binary = jnp.stack([y / h, x / w], axis=-1).astype(jnp.float32)
    feature = jnp.stack([jnp.floor(y * feat_h1 / h),
                         jnp.floor(x * feat_w1 / w)], axis=-1).astype(jnp.int32)
    return original, binary, feature


def synthetic_hull(bbox, num_points=8):
    # TODO(synk): testing_hull (data-dependent convex hull of poly_logits) is not
    # defined in the reference; emit deterministic boundary points per box.
    t = jnp.linspace(0.0, 2.0 * jnp.pi, num_points, endpoint=False)
    ux = 0.5 + 0.45 * jnp.cos(t)
    uy = 0.5 + 0.45 * jnp.sin(t)
    w = bbox[:, 2:3]
    h = bbox[:, 3:4]
    x = jnp.floor(ux[None, :] * w)                      # (B, P)  i[0]
    y = jnp.floor(uy[None, :] * h)                      # (B, P)  i[1]
    return jnp.stack([x, y], axis=-1).astype(jnp.float32)


# ---------------------------------------------------------------------------
# Full Model.forward equivalent.
# ---------------------------------------------------------------------------
def model_forward(img, bbox, params, mode="test", num_hull_points=8):
    tg2, poly_logits, class_prob = enc_model_forward(img, params)
    B, _, H, W = img.shape
    Hs, Ws = H // 2, W // 2
    h1, w1 = H, W                                       # poly_logits spatial dims
    feat_h1, feat_w1 = Hs, Ws                           # tg2 spatial dims

    hull_xy = synthetic_hull(bbox, num_points=num_hull_points)          # (B,P,2)
    original_hull, binary_hull, feature_hull = hull_transforms(
        hull_xy, bbox, h1, w1, feat_h1, feat_w1)

    output_dict = gcn_forward(tg2, feature_hull, binary_hull, params, Hs, Ws)
    output_dict["original_hull"] = original_hull
    output_dict["binary_hull"] = binary_hull
    output_dict["feature_hull"] = feature_hull
    return output_dict, poly_logits, class_prob


def init_params(key):
    ks = jax.random.split(key, 4)

    def init(k, shape, scale=0.1):
        return scale * jax.random.normal(k, shape, dtype=jnp.float32)

    state_dim = 120          # logical feature channels (reference state_dim)
    padded = 128             # lane-dense padding; extra channels are zero
    w_feat = jnp.zeros((3, padded), jnp.float32).at[:, :state_dim].set(
        init(ks[1], (3, state_dim)))
    w_gcn = jnp.zeros((padded, 2), jnp.float32).at[:state_dim, :].set(
        init(ks[3], (state_dim, 2)))
    return {
        "w_poly": init(ks[0], (3,)),
        "b_poly": jnp.zeros((1,), jnp.float32),
        "w_feat": w_feat,
        "b_feat": jnp.zeros((padded,), jnp.float32),
        "w_cls": init(ks[2], (3, 2)),
        "b_cls": jnp.zeros((2,), jnp.float32),
        "w_gcn": w_gcn,
        "b_gcn": jnp.zeros((2,), jnp.float32),
    }


if __name__ == "__main__":
    key = jax.random.PRNGKey(0)
    kimg, kpar = jax.random.split(key)

    B, C, H, W = 2, 3, 16, 16
    img = jax.random.normal(kimg, (B, C, H, W), dtype=jnp.float32)   # NCHW, like torch
    bbox = jnp.array([[0.0, 0.0, 16.0, 16.0],
                      [2.0, 3.0, 12.0, 10.0]], dtype=jnp.float32)    # (x0, y0, w, h)
    params = init_params(kpar)

    fwd = jax.jit(functools.partial(model_forward, mode="test", num_hull_points=8))
    output_dict, poly_logits, class_prob = fwd(img, bbox, params)
    jax.block_until_ready((output_dict["pred_polys"],
                           output_dict["feature_hull"],
                           poly_logits, class_prob))
    print("KERNEL_OK")
</pallas_src>

<mosaic_0001>
module attributes {stable_mosaic.version = 11 : i64} {
  func.func @_enc_kernel(%arg0: i32, %arg1: memref<1x3x256xf32, #tpu.memory_space<vmem>>, %arg2: memref<64x256xf32, #tpu.memory_space<vmem>>, %arg3: memref<4xf32, #tpu.memory_space<smem>>, %arg4: memref<3x128xf32, #tpu.memory_space<vmem>>, %arg5: memref<1x128xf32, #tpu.memory_space<vmem>>, %arg6: memref<3x2xf32, #tpu.memory_space<vmem>>, %arg7: memref<1x2xf32, #tpu.memory_space<vmem>>, %arg8: memref<1x1x256xf32, #tpu.memory_space<vmem>>, %arg9: memref<1x64x128xf32, #tpu.memory_space<vmem>>, %arg10: memref<1x1x2xf32, #tpu.memory_space<vmem>>) attributes {dimension_semantics = [#tpu.dimension_semantics<parallel>], iteration_bounds = array<i64: 2>, scalar_prefetch = 0 : i64, scratch_operands = 0 : i64, tpu.core_type = #tpu.core_type<tc>, window_params = [{transform_indices = @transform_0, window_bounds = array<i64: 1, 3, 256>}, {pipeline_mode = #tpu.pipeline_mode<synchronous>, transform_indices = @transform_1, window_bounds = array<i64: 64, 256>}, {transform_indices = @transform_2, window_bounds = array<i64: 4>}, {pipeline_mode = #tpu.pipeline_mode<synchronous>, transform_indices = @transform_3, window_bounds = array<i64: 3, 128>}, {pipeline_mode = #tpu.pipeline_mode<synchronous>, transform_indices = @transform_4, window_bounds = array<i64: 1, 128>}, {pipeline_mode = #tpu.pipeline_mode<synchronous>, transform_indices = @transform_5, window_bounds = array<i64: 3, 2>}, {pipeline_mode = #tpu.pipeline_mode<synchronous>, transform_indices = @transform_6, window_bounds = array<i64: 1, 2>}, {transform_indices = @transform_7, window_bounds = array<i64: 1, 1, 256>}, {transform_indices = @transform_8, window_bounds = array<i64: 1, 64, 128>}, {transform_indices = @transform_9, window_bounds = array<i64: 1, 1, 2>}]} {
    %c0 = arith.constant 0 : index
    %c0_0 = arith.constant 0 : index
    %c0_1 = arith.constant 0 : index
    %0 = vector.load %arg1[%c0, %c0_0, %c0_1] : memref<1x3x256xf32, #tpu.memory_space<vmem>>, vector<1x3x256xf32>
    %1 = vector.shape_cast %0 : vector<1x3x256xf32> to vector<3x256xf32>
    %c0_2 = arith.constant 0 : index
    %2 = memref.load %arg3[%c0_2] : memref<4xf32, #tpu.memory_space<smem>>
    %3 = vector.extract_strided_slice %1 {offsets = [0, 0], sizes = [1, 256], strides = [1, 1]} : vector<3x256xf32> to vector<1x256xf32>
    %4 = vector.broadcast %2 : f32 to vector<1x256xf32>
    %5 = arith.mulf %4, %3 : vector<1x256xf32>
    %c1 = arith.constant 1 : index
    %6 = memref.load %arg3[%c1] : memref<4xf32, #tpu.memory_space<smem>>
    %7 = vector.extract_strided_slice %1 {offsets = [1, 0], sizes = [1, 256], strides = [1, 1]} : vector<3x256xf32> to vector<1x256xf32>
    %8 = vector.broadcast %6 : f32 to vector<1x256xf32>
    %9 = arith.mulf %8, %7 : vector<1x256xf32>
    %10 = arith.addf %5, %9 : vector<1x256xf32>
    %c2 = arith.constant 2 : index
    %11 = memref.load %arg3[%c2] : memref<4xf32, #tpu.memory_space<smem>>
    %12 = vector.extract_strided_slice %1 {offsets = [2, 0], sizes = [1, 256], strides = [1, 1]} : vector<3x256xf32> to vector<1x256xf32>
    %13 = vector.broadcast %11 : f32 to vector<1x256xf32>
    %14 = arith.mulf %13, %12 : vector<1x256xf32>
    %15 = arith.addf %10, %14 : vector<1x256xf32>
    %c3 = arith.constant 3 : index
    %16 = memref.load %arg3[%c3] : memref<4xf32, #tpu.memory_space<smem>>
    %17 = vector.broadcast %16 : f32 to vector<1x256xf32>
    %18 = arith.addf %15, %17 : vector<1x256xf32>
    %c0_3 = arith.constant 0 : index
    %c0_4 = arith.constant 0 : index
    %c0_5 = arith.constant 0 : index
    %19 = vector.load %arg8[%c0_3, %c0_4, %c0_5] : memref<1x1x256xf32, #tpu.memory_space<vmem>>, vector<1x1x256xf32>
    %20 = vector.shape_cast %19 : vector<1x1x256xf32> to vector<1x256xf32>
    %21 = vector.shape_cast %18 : vector<1x256xf32> to vector<1x1x256xf32>
    tpu.vector_store %arg8[%c0_3, %c0_4, %c0_5], %21 {strides = array<i32>} : memref<1x1x256xf32, #tpu.memory_space<vmem>>, vector<1x1x256xf32>,
    %c0_6 = arith.constant 0 : index
    %c0_7 = arith.constant 0 : index
    %22 = vector.load %arg2[%c0_6, %c0_7] : memref<64x256xf32, #tpu.memory_space<vmem>>, vector<64x256xf32>
    %cst = arith.constant dense<0.000000e+00> : vector<64x3xf32>
    %23 = tpu.matmul %22, %1, %cst {dimension_numbers = #tpu.dot_dimension_numbers<[1], [1], [0], [0], [0, 0, 1, 0], [], []>} : vector<64x256xf32>, vector<3x256xf32>, vector<64x3xf32> -> vector<64x3xf32>
    %24 = vector.extract_strided_slice %23 {offsets = [0, 0], sizes = [64, 1], strides = [1, 1]} : vector<64x3xf32> to vector<64x1xf32>
    %c0_8 = arith.constant 0 : index
    %c0_9 = arith.constant 0 : index
    %25 = vector.load %arg4[%c0_8, %c0_9] : memref<3x128xf32, #tpu.memory_space<vmem>>, vector<1x128xf32>
    %26 = vector.broadcast %24 : vector<64x1xf32> to vector<64x128xf32>
    %27 = vector.broadcast %25 : vector<1x128xf32> to vector<64x128xf32>
    %28 = arith.mulf %26, %27 : vector<64x128xf32>
    %29 = vector.extract_strided_slice %23 {offsets = [0, 1], sizes = [64, 1], strides = [1, 1]} : vector<64x3xf32> to vector<64x1xf32>
    %c1_10 = arith.constant 1 : index
    %c0_11 = arith.constant 0 : index
    %30 = vector.load %arg4[%c1_10, %c0_11] : memref<3x128xf32, #tpu.memory_space<vmem>>, vector<1x128xf32>
    %31 = vector.broadcast %29 : vector<64x1xf32> to vector<64x128xf32>
    %32 = vector.broadcast %30 : vector<1x128xf32> to vector<64x128xf32>
    %33 = arith.mulf %31, %32 : vector<64x128xf32>
    %34 = arith.addf %28, %33 : vector<64x128xf32>
    %35 = vector.extract_strided_slice %23 {offsets = [0, 2], sizes = [64, 1], strides = [1, 1]} : vector<64x3xf32> to vector<64x1xf32>
    %c2_12 = arith.constant 2 : index
    %c0_13 = arith.constant 0 : index
    %36 = vector.load %arg4[%c2_12, %c0_13] : memref<3x128xf32, #tpu.memory_space<vmem>>, vector<1x128xf32>
    %37 = vector.broadcast %35 : vector<64x1xf32> to vector<64x128xf32>
    %38 = vector.broadcast %36 : vector<1x128xf32> to vector<64x128xf32>
    %39 = arith.mulf %37, %38 : vector<64x128xf32>
    %40 = arith.addf %34, %39 : vector<64x128xf32>
    %c0_14 = arith.constant 0 : index
    %c0_15 = arith.constant 0 : index
    %41 = vector.load %arg5[%c0_14, %c0_15] : memref<1x128xf32, #tpu.memory_space<vmem>>, vector<1x128xf32>
    %42 = vector.broadcast %41 : vector<1x128xf32> to vector<64x128xf32>
    %43 = arith.addf %40, %42 : vector<64x128xf32>
    %c0_16 = arith.constant 0 : index
    %c0_17 = arith.constant 0 : index
    %c0_18 = arith.constant 0 : index
    %44 = vector.load %arg9[%c0_16, %c0_17, %c0_18] : memref<1x64x128xf32, #tpu.memory_space<vmem>>, vector<1x64x128xf32>
    %45 = vector.shape_cast %44 : vector<1x64x128xf32> to vector<64x128xf32>
    %46 = vector.shape_cast %43 : vector<64x128xf32> to vector<1x64x128xf32>
    tpu.vector_store %arg9[%c0_16, %c0_17, %c0_18], %46 {strides = array<i32>} : memref<1x64x128xf32, #tpu.memory_space<vmem>>, vector<1x64x128xf32>,
    %cst_19 = arith.constant dense<0.000000e+00> : vector<3xf32>
    %47 = vector.multi_reduction <add>, %1, %cst_19 [1] : vector<3x256xf32> to vector<3xf32>
    %48 = vector.shape_cast %47 : vector<3xf32> to vector<3x1xf32>
    %cst_20 = arith.constant 2.560000e+02 : f32
    %49 = vector.broadcast %cst_20 : f32 to vector<3x1xf32>
    %50 = arith.divf %48, %49 : vector<3x1xf32>
    %c0_21 = arith.constant 0 : index
    %c0_22 = arith.constant 0 : index
    %51 = vector.load %arg6[%c0_21, %c0_22] : memref<3x2xf32, #tpu.memory_space<vmem>>, vector<3x2xf32>
    %52 = vector.broadcast %50 : vector<3x1xf32> to vector<3x2xf32>
    %53 = arith.mulf %52, %51 : vector<3x2xf32>
    %cst_23 = arith.constant dense<0.000000e+00> : vector<2xf32>
    %54 = vector.multi_reduction <add>, %53, %cst_23 [0] : vector<3x2xf32> to vector<2xf32>
    %55 = vector.shape_cast %54 : vector<2xf32> to vector<1x2xf32>
    %c0_24 = arith.constant 0 : index
    %c0_25 = arith.constant 0 : index
    %56 = vector.load %arg7[%c0_24, %c0_25] : memref<1x2xf32, #tpu.memory_space<vmem>>, vector<1x2xf32>
    %57 = arith.addf %55, %56 : vector<1x2xf32>
    %58 = arith.negf %57 : vector<1x2xf32>
    %59 = math.exp %58 : vector<1x2xf32>
    %cst_26 = arith.constant 1.000000e+00 : f32
    %60 = vector.broadcast %cst_26 : f32 to vector<1x2xf32>
    %61 = arith.addf %60, %59 : vector<1x2xf32>
    %62 = arith.divf %60, %61 : vector<1x2xf32>
    %c0_27 = arith.constant 0 : index
    %c0_28 = arith.constant 0 : index
    %c0_29 = arith.constant 0 : index
    %63 = vector.load %arg10[%c0_27, %c0_28, %c0_29] : memref<1x1x2xf32, #tpu.memory_space<vmem>>, vector<1x1x2xf32>
    %64 = vector.shape_cast %63 : vector<1x1x2xf32> to vector<1x2xf32>
    %65 = vector.shape_cast %62 : vector<1x2xf32> to vector<1x1x2xf32>
    tpu.vector_store %arg10[%c0_27, %c0_28, %c0_29], %65 {strides = array<i32>} : memref<1x1x2xf32, #tpu.memory_space<vmem>>, vector<1x1x2xf32>,
    return
  }
  func.func @transform_0(%arg0: i32) -> (i32, i32, i32) {
    %c0_i32 = arith.constant 0 : i32
    %c0_i32_0 = arith.constant 0 : i32
    %c0_i32_1 = arith.constant 0 : i32
    return %arg0, %c0_i32, %c0_i32_0 : i32, i32, i32
  }
  func.func @transform_1(%arg0: i32) -> (i32, i32) {
    %c0_i32 = arith.constant 0 : i32
    %c0_i32_0 = arith.constant 0 : i32
    %c0_i32_1 = arith.constant 0 : i32
    return %c0_i32, %c0_i32_0 : i32, i32
  }
  func.func @transform_2(%arg0: i32) -> i32 {
    %c0_i32 = arith.constant 0 : i32
    %c0_i32_0 = arith.constant 0 : i32
    return %c0_i32 : i32
  }
  func.func @transform_3(%arg0: i32) -> (i32, i32) {
    %c0_i32 = arith.constant 0 : i32
    %c0_i32_0 = arith.constant 0 : i32
    %c0_i32_1 = arith.constant 0 : i32
    return %c0_i32, %c0_i32_0 : i32, i32
  }
  func.func @transform_4(%arg0: i32) -> (i32, i32) {
    %c0_i32 = arith.constant 0 : i32
    %c0_i32_0 = arith.constant 0 : i32
    %c0_i32_1 = arith.constant 0 : i32
    return %c0_i32, %c0_i32_0 : i32, i32
  }
  func.func @transform_5(%arg0: i32) -> (i32, i32) {
    %c0_i32 = arith.constant 0 : i32
    %c0_i32_0 = arith.constant 0 : i32
    %c0_i32_1 = arith.constant 0 : i32
    return %c0_i32, %c0_i32_0 : i32, i32
  }
  func.func @transform_6(%arg0: i32) -> (i32, i32) {
    %c0_i32 = arith.constant 0 : i32
    %c0_i32_0 = arith.constant 0 : i32
    %c0_i32_1 = arith.constant 0 : i32
    return %c0_i32, %c0_i32_0 : i32, i32
  }
  func.func @transform_7(%arg0: i32) -> (i32, i32, i32) {
    %c0_i32 = arith.constant 0 : i32
    %c0_i32_0 = arith.constant 0 : i32
    %c0_i32_1 = arith.constant 0 : i32
    return %arg0, %c0_i32, %c0_i32_0 : i32, i32, i32
  }
  func.func @transform_8(%arg0: i32) -> (i32, i32, i32) {
    %c0_i32 = arith.constant 0 : i32
    %c0_i32_0 = arith.constant 0 : i32
    %c0_i32_1 = arith.constant 0 : i32
    return %arg0, %c0_i32, %c0_i32_0 : i32, i32, i32
  }
  func.func @transform_9(%arg0: i32) -> (i32, i32, i32) {
    %c0_i32 = arith.constant 0 : i32
    %c0_i32_0 = arith.constant 0 : i32
    %c0_i32_1 = arith.constant 0 : i32
    return %arg0, %c0_i32, %c0_i32_0 : i32, i32, i32
  }
}

module attributes {stable_mosaic.version = 11 : i64} {
  func.func @_gcn_kernel(%arg0: i32, %arg1: memref<16xi32, #tpu.memory_space<smem>>, %arg2: memref<16x2xf32, #tpu.memory_space<vmem>>, %arg3: memref<128x2xf32, #tpu.memory_space<vmem>>, %arg4: memref<1x2xf32, #tpu.memory_space<vmem>>, %arg5: memref<128x128xf32, #tpu.memory_space<any>>, %arg6: memref<16x2xf32, #tpu.memory_space<vmem>>, %arg7: memref<16x128xf32, #tpu.memory_space<vmem>>, %arg8: memref<16x!tpu.dma_semaphore, #tpu.memory_space<semaphore_mem>>) attributes {dimension_semantics = [#tpu.dimension_semantics<arbitrary>], iteration_bounds = array<i64: 1>, scalar_prefetch = 0 : i64, scratch_operands = 2 : i64, tpu.core_type = #tpu.core_type<tc>, window_params = [{transform_indices = @transform_0, window_bounds = array<i64: 16>}, {pipeline_mode = #tpu.pipeline_mode<synchronous>, transform_indices = @transform_1, window_bounds = array<i64: 16, 2>}, {pipeline_mode = #tpu.pipeline_mode<synchronous>, transform_indices = @transform_2, window_bounds = array<i64: 128, 2>}, {pipeline_mode = #tpu.pipeline_mode<synchronous>, transform_indices = @transform_3, window_bounds = array<i64: 1, 2>}, {}, {pipeline_mode = #tpu.pipeline_mode<synchronous>, transform_indices = @transform_5, window_bounds = array<i64: 16, 2>}]} {
    %c0 = arith.constant 0 : index
    %0 = memref.load %arg1[%c0] : memref<16xi32, #tpu.memory_space<smem>>
    %c1 = arith.constant 1 : index
    %1 = memref.load %arg1[%c1] : memref<16xi32, #tpu.memory_space<smem>>
    %c2 = arith.constant 2 : index
    %2 = memref.load %arg1[%c2] : memref<16xi32, #tpu.memory_space<smem>>
    %c3 = arith.constant 3 : index
    %3 = memref.load %arg1[%c3] : memref<16xi32, #tpu.memory_space<smem>>
    %c4 = arith.constant 4 : index
    %4 = memref.load %arg1[%c4] : memref<16xi32, #tpu.memory_space<smem>>
    %c5 = arith.constant 5 : index
    %5 = memref.load %arg1[%c5] : memref<16xi32, #tpu.memory_space<smem>>
    %c6 = arith.constant 6 : index
    %6 = memref.load %arg1[%c6] : memref<16xi32, #tpu.memory_space<smem>>
    %c7 = arith.constant 7 : index
    %7 = memref.load %arg1[%c7] : memref<16xi32, #tpu.memory_space<smem>>
    %c8 = arith.constant 8 : index
    %8 = memref.load %arg1[%c8] : memref<16xi32, #tpu.memory_space<smem>>
    %c9 = arith.constant 9 : index
    %9 = memref.load %arg1[%c9] : memref<16xi32, #tpu.memory_space<smem>>
    %c10 = arith.constant 10 : index
    %10 = memref.load %arg1[%c10] : memref<16xi32, #tpu.memory_space<smem>>
    %c11 = arith.constant 11 : index
    %11 = memref.load %arg1[%c11] : memref<16xi32, #tpu.memory_space<smem>>
    %c12 = arith.constant 12 : index
    %12 = memref.load %arg1[%c12] : memref<16xi32, #tpu.memory_space<smem>>
    %c13 = arith.constant 13 : index
    %13 = memref.load %arg1[%c13] : memref<16xi32, #tpu.memory_space<smem>>
    %c14 = arith.constant 14 : index
    %14 = memref.load %arg1[%c14] : memref<16xi32, #tpu.memory_space<smem>>
    %c15 = arith.constant 15 : index
    %15 = memref.load %arg1[%c15] : memref<16xi32, #tpu.memory_space<smem>>
    %c0_i32 = arith.constant 0 : i32
    %c0_i32_0 = arith.constant 0 : i32
    %16 = tpu.memref_slice %arg5[%0, %c0_i32_0] : memref<128x128xf32, #tpu.memory_space<any>> -> memref<1x128xf32, #tpu.memory_space<any>>
    %c0_i32_1 = arith.constant 0 : i32
    %c0_i32_2 = arith.constant 0 : i32
    %17 = tpu.memref_slice %arg7[%c0_i32_1, %c0_i32_2] : memref<16x128xf32, #tpu.memory_space<vmem>> -> memref<1x128xf32, #tpu.memory_space<vmem>>
    %18 = tpu.memref_slice %arg8[%c0_i32] : memref<16x!tpu.dma_semaphore, #tpu.memory_space<semaphore_mem>> -> memref<1x!tpu.dma_semaphore, #tpu.memory_space<semaphore_mem>>
    %19 = tpu.memref_squeeze %18 : memref<1x!tpu.dma_semaphore, #tpu.memory_space<semaphore_mem>> -> memref<!tpu.dma_semaphore, #tpu.memory_space<semaphore_mem>>
    tpu.enqueue_dma source(%16 : memref<1x128xf32, #tpu.memory_space<any>>) target(%17 : memref<1x128xf32, #tpu.memory_space<vmem>>) target_semaphore(%19 : memref<!tpu.dma_semaphore, #tpu.memory_space<semaphore_mem>>)
    %c1_i32 = arith.constant 1 : i32
    %c0_i32_3 = arith.constant 0 : i32
    %20 = tpu.memref_slice %arg5[%1, %c0_i32_3] : memref<128x128xf32, #tpu.memory_space<any>> -> memref<1x128xf32, #tpu.memory_space<any>>
    %c1_i32_4 = arith.constant 1 : i32
    %c0_i32_5 = arith.constant 0 : i32
    %21 = tpu.memref_slice %arg7[%c1_i32_4, %c0_i32_5] : memref<16x128xf32, #tpu.memory_space<vmem>> -> memref<1x128xf32, #tpu.memory_space<vmem>>
    %22 = tpu.memref_slice %arg8[%c1_i32] : memref<16x!tpu.dma_semaphore, #tpu.memory_space<semaphore_mem>> -> memref<1x!tpu.dma_semaphore, #tpu.memory_space<semaphore_mem>>
    %23 = tpu.memref_squeeze %22 : memref<1x!tpu.dma_semaphore, #tpu.memory_space<semaphore_mem>> -> memref<!tpu.dma_semaphore, #tpu.memory_space<semaphore_mem>>
    tpu.enqueue_dma source(%20 : memref<1x128xf32, #tpu.memory_space<any>>) target(%21 : memref<1x128xf32, #tpu.memory_space<vmem>>) target_semaphore(%23 : memref<!tpu.dma_semaphore, #tpu.memory_space<semaphore_mem>>)
    %c2_i32 = arith.constant 2 : i32
    %c0_i32_6 = arith.constant 0 : i32
    %24 = tpu.memref_slice %arg5[%2, %c0_i32_6] : memref<128x128xf32, #tpu.memory_space<any>> -> memref<1x128xf32, #tpu.memory_space<any>>
    %c2_i32_7 = arith.constant 2 : i32
    %c0_i32_8 = arith.constant 0 : i32
    %25 = tpu.memref_slice %arg7[%c2_i32_7, %c0_i32_8] : memref<16x128xf32, #tpu.memory_space<vmem>> -> memref<1x128xf32, #tpu.memory_space<vmem>>
    %26 = tpu.memref_slice %arg8[%c2_i32] : memref<16x!tpu.dma_semaphore, #tpu.memory_space<semaphore_mem>> -> memref<1x!tpu.dma_semaphore, #tpu.memory_space<semaphore_mem>>
    %27 = tpu.memref_squeeze %26 : memref<1x!tpu.dma_semaphore, #tpu.memory_space<semaphore_mem>> -> memref<!tpu.dma_semaphore, #tpu.memory_space<semaphore_mem>>
    tpu.enqueue_dma source(%24 : memref<1x128xf32, #tpu.memory_space<any>>) target(%25 : memref<1x128xf32, #tpu.memory_space<vmem>>) target_semaphore(%27 : memref<!tpu.dma_semaphore, #tpu.memory_space<semaphore_mem>>)
    %c3_i32 = arith.constant 3 : i32
    %c0_i32_9 = arith.constant 0 : i32
    %28 = tpu.memref_slice %arg5[%3, %c0_i32_9] : memref<128x128xf32, #tpu.memory_space<any>> -> memref<1x128xf32, #tpu.memory_space<any>>
    %c3_i32_10 = arith.constant 3 : i32
    %c0_i32_11 = arith.constant 0 : i32
    %29 = tpu.memref_slice %arg7[%c3_i32_10, %c0_i32_11] : memref<16x128xf32, #tpu.memory_space<vmem>> -> memref<1x128xf32, #tpu.memory_space<vmem>>
    %30 = tpu.memref_slice %arg8[%c3_i32] : memref<16x!tpu.dma_semaphore, #tpu.memory_space<semaphore_mem>> -> memref<1x!tpu.dma_semaphore, #tpu.memory_space<semaphore_mem>>
    %31 = tpu.memref_squeeze %30 : memref<1x!tpu.dma_semaphore, #tpu.memory_space<semaphore_mem>> -> memref<!tpu.dma_semaphore, #tpu.memory_space<semaphore_mem>>
    tpu.enqueue_dma source(%28 : memref<1x128xf32, #tpu.memory_space<any>>) target(%29 : memref<1x128xf32, #tpu.memory_space<vmem>>) target_semaphore(%31 : memref<!tpu.dma_semaphore, #tpu.memory_space<semaphore_mem>>)
    %c4_i32 = arith.constant 4 : i32
    %c0_i32_12 = arith.constant 0 : i32
    %32 = tpu.memref_slice %arg5[%4, %c0_i32_12] : memref<128x128xf32, #tpu.memory_space<any>> -> memref<1x128xf32, #tpu.memory_space<any>>
    %c4_i32_13 = arith.constant 4 : i32
    %c0_i32_14 = arith.constant 0 : i32
    %33 = tpu.memref_slice %arg7[%c4_i32_13, %c0_i32_14] : memref<16x128xf32, #tpu.memory_space<vmem>> -> memref<1x128xf32, #tpu.memory_space<vmem>>
    %34 = tpu.memref_slice %arg8[%c4_i32] : memref<16x!tpu.dma_semaphore, #tpu.memory_space<semaphore_mem>> -> memref<1x!tpu.dma_semaphore, #tpu.memory_space<semaphore_mem>>
    %35 = tpu.memref_squeeze %34 : memref<1x!tpu.dma_semaphore, #tpu.memory_space<semaphore_mem>> -> memref<!tpu.dma_semaphore, #tpu.memory_space<semaphore_mem>>
    tpu.enqueue_dma source(%32 : memref<1x128xf32, #tpu.memory_space<any>>) target(%33 : memref<1x128xf32, #tpu.memory_space<vmem>>) target_semaphore(%35 : memref<!tpu.dma_semaphore, #tpu.memory_space<semaphore_mem>>)
    %c5_i32 = arith.constant 5 : i32
    %c0_i32_15 = arith.constant 0 : i32
    %36 = tpu.memref_slice %arg5[%5, %c0_i32_15] : memref<128x128xf32, #tpu.memory_space<any>> -> memref<1x128xf32, #tpu.memory_space<any>>
    %c5_i32_16 = arith.constant 5 : i32
    %c0_i32_17 = arith.constant 0 : i32
    %37 = tpu.memref_slice %arg7[%c5_i32_16, %c0_i32_17] : memref<16x128xf32, #tpu.memory_space<vmem>> -> memref<1x128xf32, #tpu.memory_space<vmem>>
    %38 = tpu.memref_slice %arg8[%c5_i32] : memref<16x!tpu.dma_semaphore, #tpu.memory_space<semaphore_mem>> -> memref<1x!tpu.dma_semaphore, #tpu.memory_space<semaphore_mem>>
    %39 = tpu.memref_squeeze %38 : memref<1x!tpu.dma_semaphore, #tpu.memory_space<semaphore_mem>> -> memref<!tpu.dma_semaphore, #tpu.memory_space<semaphore_mem>>
    tpu.enqueue_dma source(%36 : memref<1x128xf32, #tpu.memory_space<any>>) target(%37 : memref<1x128xf32, #tpu.memory_space<vmem>>) target_semaphore(%39 : memref<!tpu.dma_semaphore, #tpu.memory_space<semaphore_mem>>)
    %c6_i32 = arith.constant 6 : i32
    %c0_i32_18 = arith.constant 0 : i32
    %40 = tpu.memref_slice %arg5[%6, %c0_i32_18] : memref<128x128xf32, #tpu.memory_space<any>> -> memref<1x128xf32, #tpu.memory_space<any>>
    %c6_i32_19 = arith.constant 6 : i32
    %c0_i32_20 = arith.constant 0 : i32
    %41 = tpu.memref_slice %arg7[%c6_i32_19, %c0_i32_20] : memref<16x128xf32, #tpu.memory_space<vmem>> -> memref<1x128xf32, #tpu.memory_space<vmem>>
    %42 = tpu.memref_slice %arg8[%c6_i32] : memref<16x!tpu.dma_semaphore, #tpu.memory_space<semaphore_mem>> -> memref<1x!tpu.dma_semaphore, #tpu.memory_space<semaphore_mem>>
    %43 = tpu.memref_squeeze %42 : memref<1x!tpu.dma_semaphore, #tpu.memory_space<semaphore_mem>> -> memref<!tpu.dma_semaphore, #tpu.memory_space<semaphore_mem>>
    tpu.enqueue_dma source(%40 : memref<1x128xf32, #tpu.memory_space<any>>) target(%41 : memref<1x128xf32, #tpu.memory_space<vmem>>) target_semaphore(%43 : memref<!tpu.dma_semaphore, #tpu.memory_space<semaphore_mem>>)
    %c7_i32 = arith.constant 7 : i32
    %c0_i32_21 = arith.constant 0 : i32
    %44 = tpu.memref_slice %arg5[%7, %c0_i32_21] : memref<128x128xf32, #tpu.memory_space<any>> -> memref<1x128xf32, #tpu.memory_space<any>>
    %c7_i32_22 = arith.constant 7 : i32
    %c0_i32_23 = arith.constant 0 : i32
    %45 = tpu.memref_slice %arg7[%c7_i32_22, %c0_i32_23] : memref<16x128xf32, #tpu.memory_space<vmem>> -> memref<1x128xf32, #tpu.memory_space<vmem>>
    %46 = tpu.memref_slice %arg8[%c7_i32] : memref<16x!tpu.dma_semaphore, #tpu.memory_space<semaphore_mem>> -> memref<1x!tpu.dma_semaphore, #tpu.memory_space<semaphore_mem>>
    %47 = tpu.memref_squeeze %46 : memref<1x!tpu.dma_semaphore, #tpu.memory_space<semaphore_mem>> -> memref<!tpu.dma_semaphore, #tpu.memory_space<semaphore_mem>>
    tpu.enqueue_dma source(%44 : memref<1x128xf32, #tpu.memory_space<any>>) target(%45 : memref<1x128xf32, #tpu.memory_space<vmem>>) target_semaphore(%47 : memref<!tpu.dma_semaphore, #tpu.memory_space<semaphore_mem>>)
    %c8_i32 = arith.constant 8 : i32
    %c0_i32_24 = arith.constant 0 : i32
    %48 = tpu.memref_slice %arg5[%8, %c0_i32_24] : memref<128x128xf32, #tpu.memory_space<any>> -> memref<1x128xf32, #tpu.memory_space<any>>
    %c8_i32_25 = arith.constant 8 : i32
    %c0_i32_26 = arith.constant 0 : i32
    %49 = tpu.memref_slice %arg7[%c8_i32_25, %c0_i32_26] : memref<16x128xf32, #tpu.memory_space<vmem>> -> memref<1x128xf32, #tpu.memory_space<vmem>>
    %50 = tpu.memref_slice %arg8[%c8_i32] : memref<16x!tpu.dma_semaphore, #tpu.memory_space<semaphore_mem>> -> memref<1x!tpu.dma_semaphore, #tpu.memory_space<semaphore_mem>>
    %51 = tpu.memref_squeeze %50 : memref<1x!tpu.dma_semaphore, #tpu.memory_space<semaphore_mem>> -> memref<!tpu.dma_semaphore, #tpu.memory_space<semaphore_mem>>
    tpu.enqueue_dma source(%48 : memref<1x128xf32, #tpu.memory_space<any>>) target(%49 : memref<1x128xf32, #tpu.memory_space<vmem>>) target_semaphore(%51 : memref<!tpu.dma_semaphore, #tpu.memory_space<semaphore_mem>>)
    %c9_i32 = arith.constant 9 : i32
    %c0_i32_27 = arith.constant 0 : i32
    %52 = tpu.memref_slice %arg5[%9, %c0_i32_27] : memref<128x128xf32, #tpu.memory_space<any>> -> memref<1x128xf32, #tpu.memory_space<any>>
    %c9_i32_28 = arith.constant 9 : i32
    %c0_i32_29 = arith.constant 0 : i32
    %53 = tpu.memref_slice %arg7[%c9_i32_28, %c0_i32_29] : memref<16x128xf32, #tpu.memory_space<vmem>> -> memref<1x128xf32, #tpu.memory_space<vmem>>
    %54 = tpu.memref_slice %arg8[%c9_i32] : memref<16x!tpu.dma_semaphore, #tpu.memory_space<semaphore_mem>> -> memref<1x!tpu.dma_semaphore, #tpu.memory_space<semaphore_mem>>
    %55 = tpu.memref_squeeze %54 : memref<1x!tpu.dma_semaphore, #tpu.memory_space<semaphore_mem>> -> memref<!tpu.dma_semaphore, #tpu.memory_space<semaphore_mem>>
    tpu.enqueue_dma source(%52 : memref<1x128xf32, #tpu.memory_space<any>>) target(%53 : memref<1x128xf32, #tpu.memory_space<vmem>>) target_semaphore(%55 : memref<!tpu.dma_semaphore, #tpu.memory_space<semaphore_mem>>)
    %c10_i32 = arith.constant 10 : i32
    %c0_i32_30 = arith.constant 0 : i32
    %56 = tpu.memref_slice %arg5[%10, %c0_i32_30] : memref<128x128xf32, #tpu.memory_space<any>> -> memref<1x128xf32, #tpu.memory_space<any>>
    %c10_i32_31 = arith.constant 10 : i32
    %c0_i32_32 = arith.constant 0 : i32
    %57 = tpu.memref_slice %arg7[%c10_i32_31, %c0_i32_32] : memref<16x128xf32, #tpu.memory_space<vmem>> -> memref<1x128xf32, #tpu.memory_space<vmem>>
    %58 = tpu.memref_slice %arg8[%c10_i32] : memref<16x!tpu.dma_semaphore, #tpu.memory_space<semaphore_mem>> -> memref<1x!tpu.dma_semaphore, #tpu.memory_space<semaphore_mem>>
    %59 = tpu.memref_squeeze %58 : memref<1x!tpu.dma_semaphore, #tpu.memory_space<semaphore_mem>> -> memref<!tpu.dma_semaphore, #tpu.memory_space<semaphore_mem>>
    tpu.enqueue_dma source(%56 : memref<1x128xf32, #tpu.memory_space<any>>) target(%57 : memref<1x128xf32, #tpu.memory_space<vmem>>) target_semaphore(%59 : memref<!tpu.dma_semaphore, #tpu.memory_space<semaphore_mem>>)
    %c11_i32 = arith.constant 11 : i32
    %c0_i32_33 = arith.constant 0 : i32
    %60 = tpu.memref_slice %arg5[%11, %c0_i32_33] : memref<128x128xf32, #tpu.memory_space<any>> -> memref<1x128xf32, #tpu.memory_space<any>>
    %c11_i32_34 = arith.constant 11 : i32
    %c0_i32_35 = arith.constant 0 : i32
    %61 = tpu.memref_slice %arg7[%c11_i32_34, %c0_i32_35] : memref<16x128xf32, #tpu.memory_space<vmem>> -> memref<1x128xf32, #tpu.memory_space<vmem>>
    %62 = tpu.memref_slice %arg8[%c11_i32] : memref<16x!tpu.dma_semaphore, #tpu.memory_space<semaphore_mem>> -> memref<1x!tpu.dma_semaphore, #tpu.memory_space<semaphore_mem>>
    %63 = tpu.memref_squeeze %62 : memref<1x!tpu.dma_semaphore, #tpu.memory_space<semaphore_mem>> -> memref<!tpu.dma_semaphore, #tpu.memory_space<semaphore_mem>>
    tpu.enqueue_dma source(%60 : memref<1x128xf32, #tpu.memory_space<any>>) target(%61 : memref<1x128xf32, #tpu.memory_space<vmem>>) target_semaphore(%63 : memref<!tpu.dma_semaphore, #tpu.memory_space<semaphore_mem>>)
    %c12_i32 = arith.constant 12 : i32
    %c0_i32_36 = arith.constant 0 : i32
    %64 = tpu.memref_slice %arg5[%12, %c0_i32_36] : memref<128x128xf32, #tpu.memory_space<any>> -> memref<1x128xf32, #tpu.memory_space<any>>
    %c12_i32_37 = arith.constant 12 : i32
    %c0_i32_38 = arith.constant 0 : i32
    %65 = tpu.memref_slice %arg7[%c12_i32_37, %c0_i32_38] : memref<16x128xf32, #tpu.memory_space<vmem>> -> memref<1x128xf32, #tpu.memory_space<vmem>>
    %66 = tpu.memref_slice %arg8[%c12_i32] : memref<16x!tpu.dma_semaphore, #tpu.memory_space<semaphore_mem>> -> memref<1x!tpu.dma_semaphore, #tpu.memory_space<semaphore_mem>>
    %67 = tpu.memref_squeeze %66 : memref<1x!tpu.dma_semaphore, #tpu.memory_space<semaphore_mem>> -> memref<!tpu.dma_semaphore, #tpu.memory_space<semaphore_mem>>
    tpu.enqueue_dma source(%64 : memref<1x128xf32, #tpu.memory_space<any>>) target(%65 : memref<1x128xf32, #tpu.memory_space<vmem>>) target_semaphore(%67 : memref<!tpu.dma_semaphore, #tpu.memory_space<semaphore_mem>>)
    %c13_i32 = arith.constant 13 : i32
    %c0_i32_39 = arith.constant 0 : i32
    %68 = tpu.memref_slice %arg5[%13, %c0_i32_39] : memref<128x128xf32, #tpu.memory_space<any>> -> memref<1x128xf32, #tpu.memory_space<any>>
    %c13_i32_40 = arith.constant 13 : i32
    %c0_i32_41 = arith.constant 0 : i32
    %69 = tpu.memref_slice %arg7[%c13_i32_40, %c0_i32_41] : memref<16x128xf32, #tpu.memory_space<vmem>> -> memref<1x128xf32, #tpu.memory_space<vmem>>
    %70 = tpu.memref_slice %arg8[%c13_i32] : memref<16x!tpu.dma_semaphore, #tpu.memory_space<semaphore_mem>> -> memref<1x!tpu.dma_semaphore, #tpu.memory_space<semaphore_mem>>
    %71 = tpu.memref_squeeze %70 : memref<1x!tpu.dma_semaphore, #tpu.memory_space<semaphore_mem>> -> memref<!tpu.dma_semaphore, #tpu.memory_space<semaphore_mem>>
    tpu.enqueue_dma source(%68 : memref<1x128xf32, #tpu.memory_space<any>>) target(%69 : memref<1x128xf32, #tpu.memory_space<vmem>>) target_semaphore(%71 : memref<!tpu.dma_semaphore, #tpu.memory_space<semaphore_mem>>)
    %c14_i32 = arith.constant 14 : i32
    %c0_i32_42 = arith.constant 0 : i32
    %72 = tpu.memref_slice %arg5[%14, %c0_i32_42] : memref<128x128xf32, #tpu.memory_space<any>> -> memref<1x128xf32, #tpu.memory_space<any>>
    %c14_i32_43 = arith.constant 14 : i32
    %c0_i32_44 = arith.constant 0 : i32
    %73 = tpu.memref_slice %arg7[%c14_i32_43, %c0_i32_44] : memref<16x128xf32, #tpu.memory_space<vmem>> -> memref<1x128xf32, #tpu.memory_space<vmem>>
    %74 = tpu.memref_slice %arg8[%c14_i32] : memref<16x!tpu.dma_semaphore, #tpu.memory_space<semaphore_mem>> -> memref<1x!tpu.dma_semaphore, #tpu.memory_space<semaphore_mem>>
    %75 = tpu.memref_squeeze %74 : memref<1x!tpu.dma_semaphore, #tpu.memory_space<semaphore_mem>> -> memref<!tpu.dma_semaphore, #tpu.memory_space<semaphore_mem>>
    tpu.enqueue_dma source(%72 : memref<1x128xf32, #tpu.memory_space<any>>) target(%73 : memref<1x128xf32, #tpu.memory_space<vmem>>) target_semaphore(%75 : memref<!tpu.dma_semaphore, #tpu.memory_space<semaphore_mem>>)
    %c15_i32 = arith.constant 15 : i32
    %c0_i32_45 = arith.constant 0 : i32
    %76 = tpu.memref_slice %arg5[%15, %c0_i32_45] : memref<128x128xf32, #tpu.memory_space<any>> -> memref<1x128xf32, #tpu.memory_space<any>>
    %c15_i32_46 = arith.constant 15 : i32
    %c0_i32_47 = arith.constant 0 : i32
    %77 = tpu.memref_slice %arg7[%c15_i32_46, %c0_i32_47] : memref<16x128xf32, #tpu.memory_space<vmem>> -> memref<1x128xf32, #tpu.memory_space<vmem>>
    %78 = tpu.memref_slice %arg8[%c15_i32] : memref<16x!tpu.dma_semaphore, #tpu.memory_space<semaphore_mem>> -> memref<1x!tpu.dma_semaphore, #tpu.memory_space<semaphore_mem>>
    %79 = tpu.memref_squeeze %78 : memref<1x!tpu.dma_semaphore, #tpu.memory_space<semaphore_mem>> -> memref<!tpu.dma_semaphore, #tpu.memory_space<semaphore_mem>>
    tpu.enqueue_dma source(%76 : memref<1x128xf32, #tpu.memory_space<any>>) target(%77 : memref<1x128xf32, #tpu.memory_space<vmem>>) target_semaphore(%79 : memref<!tpu.dma_semaphore, #tpu.memory_space<semaphore_mem>>)
    %c0_i32_48 = arith.constant 0 : i32
    %c0_i32_49 = arith.constant 0 : i32
    %80 = tpu.memref_slice %arg5[%0, %c0_i32_49] : memref<128x128xf32, #tpu.memory_space<any>> -> memref<1x128xf32, #tpu.memory_space<any>>
    %c0_i32_50 = arith.constant 0 : i32
    %c0_i32_51 = arith.constant 0 : i32
    %81 = tpu.memref_slice %arg7[%c0_i32_50, %c0_i32_51] : memref<16x128xf32, #tpu.memory_space<vmem>> -> memref<1x128xf32, #tpu.memory_space<vmem>>
    %82 = tpu.memref_slice %arg8[%c0_i32_48] : memref<16x!tpu.dma_semaphore, #tpu.memory_space<semaphore_mem>> -> memref<1x!tpu.dma_semaphore, #tpu.memory_space<semaphore_mem>>
    %83 = tpu.memref_squeeze %82 : memref<1x!tpu.dma_semaphore, #tpu.memory_space<semaphore_mem>> -> memref<!tpu.dma_semaphore, #tpu.memory_space<semaphore_mem>>
    tpu.wait_dma2 semaphore(%83 : memref<!tpu.dma_semaphore, #tpu.memory_space<semaphore_mem>>) src(%80 : memref<1x128xf32, #tpu.memory_space<any>>) dst(%81 : memref<1x128xf32, #tpu.memory_space<vmem>>)
    %c1_i32_52 = arith.constant 1 : i32
    %c0_i32_53 = arith.constant 0 : i32
    %84 = tpu.memref_slice %arg5[%1, %c0_i32_53] : memref<128x128xf32, #tpu.memory_space<any>> -> memref<1x128xf32, #tpu.memory_space<any>>
    %c1_i32_54 = arith.constant 1 : i32
    %c0_i32_55 = arith.constant 0 : i32
    %85 = tpu.memref_slice %arg7[%c1_i32_54, %c0_i32_55] : memref<16x128xf32, #tpu.memory_space<vmem>> -> memref<1x128xf32, #tpu.memory_space<vmem>>
    %86 = tpu.memref_slice %arg8[%c1_i32_52] : memref<16x!tpu.dma_semaphore, #tpu.memory_space<semaphore_mem>> -> memref<1x!tpu.dma_semaphore, #tpu.memory_space<semaphore_mem>>
    %87 = tpu.memref_squeeze %86 : memref<1x!tpu.dma_semaphore, #tpu.memory_space<semaphore_mem>> -> memref<!tpu.dma_semaphore, #tpu.memory_space<semaphore_mem>>
    tpu.wait_dma2 semaphore(%87 : memref<!tpu.dma_semaphore, #tpu.memory_space<semaphore_mem>>) src(%84 : memref<1x128xf32, #tpu.memory_space<any>>) dst(%85 : memref<1x128xf32, #tpu.memory_space<vmem>>)
    %c2_i32_56 = arith.constant 2 : i32
    %c0_i32_57 = arith.constant 0 : i32
    %88 = tpu.memref_slice %arg5[%2, %c0_i32_57] : memref<128x128xf32, #tpu.memory_space<any>> -> memref<1x128xf32, #tpu.memory_space<any>>
    %c2_i32_58 = arith.constant 2 : i32
    %c0_i32_59 = arith.constant 0 : i32
    %89 = tpu.memref_slice %arg7[%c2_i32_58, %c0_i32_59] : memref<16x128xf32, #tpu.memory_space<vmem>> -> memref<1x128xf32, #tpu.memory_space<vmem>>
    %90 = tpu.memref_slice %arg8[%c2_i32_56] : memref<16x!tpu.dma_semaphore, #tpu.memory_space<semaphore_mem>> -> memref<1x!tpu.dma_semaphore, #tpu.memory_space<semaphore_mem>>
    %91 = tpu.memref_squeeze %90 : memref<1x!tpu.dma_semaphore, #tpu.memory_space<semaphore_mem>> -> memref<!tpu.dma_semaphore, #tpu.memory_space<semaphore_mem>>
    tpu.wait_dma2 semaphore(%91 : memref<!tpu.dma_semaphore, #tpu.memory_space<semaphore_mem>>) src(%88 : memref<1x128xf32, #tpu.memory_space<any>>) dst(%89 : memref<1x128xf32, #tpu.memory_space<vmem>>)
    %c3_i32_60 = arith.constant 3 : i32
    %c0_i32_61 = arith.constant 0 : i32
    %92 = tpu.memref_slice %arg5[%3, %c0_i32_61] : memref<128x128xf32, #tpu.memory_space<any>> -> memref<1x128xf32, #tpu.memory_space<any>>
    %c3_i32_62 = arith.constant 3 : i32
    %c0_i32_63 = arith.constant 0 : i32
    %93 = tpu.memref_slice %arg7[%c3_i32_62, %c0_i32_63] : memref<16x128xf32, #tpu.memory_space<vmem>> -> memref<1x128xf32, #tpu.memory_space<vmem>>
    %94 = tpu.memref_slice %arg8[%c3_i32_60] : memref<16x!tpu.dma_semaphore, #tpu.memory_space<semaphore_mem>> -> memref<1x!tpu.dma_semaphore, #tpu.memory_space<semaphore_mem>>
    %95 = tpu.memref_squeeze %94 : memref<1x!tpu.dma_semaphore, #tpu.memory_space<semaphore_mem>> -> memref<!tpu.dma_semaphore, #tpu.memory_space<semaphore_mem>>
    tpu.wait_dma2 semaphore(%95 : memref<!tpu.dma_semaphore, #tpu.memory_space<semaphore_mem>>) src(%92 : memref<1x128xf32, #tpu.memory_space<any>>) dst(%93 : memref<1x128xf32, #tpu.memory_space<vmem>>)
    %c4_i32_64 = arith.constant 4 : i32
    %c0_i32_65 = arith.constant 0 : i32
    %96 = tpu.memref_slice %arg5[%4, %c0_i32_65] : memref<128x128xf32, #tpu.memory_space<any>> -> memref<1x128xf32, #tpu.memory_space<any>>
    %c4_i32_66 = arith.constant 4 : i32
    %c0_i32_67 = arith.constant 0 : i32
    %97 = tpu.memref_slice %arg7[%c4_i32_66, %c0_i32_67] : memref<16x128xf32, #tpu.memory_space<vmem>> -> memref<1x128xf32, #tpu.memory_space<vmem>>
    %98 = tpu.memref_slice %arg8[%c4_i32_64] : memref<16x!tpu.dma_semaphore, #tpu.memory_space<semaphore_mem>> -> memref<1x!tpu.dma_semaphore, #tpu.memory_space<semaphore_mem>>
    %99 = tpu.memref_squeeze %98 : memref<1x!tpu.dma_semaphore, #tpu.memory_space<semaphore_mem>> -> memref<!tpu.dma_semaphore, #tpu.memory_space<semaphore_mem>>
    tpu.wait_dma2 semaphore(%99 : memref<!tpu.dma_semaphore, #tpu.memory_space<semaphore_mem>>) src(%96 : memref<1x128xf32, #tpu.memory_space<any>>) dst(%97 : memref<1x128xf32, #tpu.memory_space<vmem>>)
    %c5_i32_68 = arith.constant 5 : i32
    %c0_i32_69 = arith.constant 0 : i32
    %100 = tpu.memref_slice %arg5[%5, %c0_i32_69] : memref<128x128xf32, #tpu.memory_space<any>> -> memref<1x128xf32, #tpu.memory_space<any>>
    %c5_i32_70 = arith.constant 5 : i32
    %c0_i32_71 = arith.constant 0 : i32
    %101 = tpu.memref_slice %arg7[%c5_i32_70, %c0_i32_71] : memref<16x128xf32, #tpu.memory_space<vmem>> -> memref<1x128xf32, #tpu.memory_space<vmem>>
    %102 = tpu.memref_slice %arg8[%c5_i32_68] : memref<16x!tpu.dma_semaphore, #tpu.memory_space<semaphore_mem>> -> memref<1x!tpu.dma_semaphore, #tpu.memory_space<semaphore_mem>>
    %103 = tpu.memref_squeeze %102 : memref<1x!tpu.dma_semaphore, #tpu.memory_space<semaphore_mem>> -> memref<!tpu.dma_semaphore, #tpu.memory_space<semaphore_mem>>
    tpu.wait_dma2 semaphore(%103 : memref<!tpu.dma_semaphore, #tpu.memory_space<semaphore_mem>>) src(%100 : memref<1x128xf32, #tpu.memory_space<any>>) dst(%101 : memref<1x128xf32, #tpu.memory_space<vmem>>)
    %c6_i32_72 = arith.constant 6 : i32
    %c0_i32_73 = arith.constant 0 : i32
    %104 = tpu.memref_slice %arg5[%6, %c0_i32_73] : memref<128x128xf32, #tpu.memory_space<any>> -> memref<1x128xf32, #tpu.memory_space<any>>
    %c6_i32_74 = arith.constant 6 : i32
    %c0_i32_75 = arith.constant 0 : i32
    %105 = tpu.memref_slice %arg7[%c6_i32_74, %c0_i32_75] : memref<16x128xf32, #tpu.memory_space<vmem>> -> memref<1x128xf32, #tpu.memory_space<vmem>>
    %106 = tpu.memref_slice %arg8[%c6_i32_72] : memref<16x!tpu.dma_semaphore, #tpu.memory_space<semaphore_mem>> -> memref<1x!tpu.dma_semaphore, #tpu.memory_space<semaphore_mem>>
    %107 = tpu.memref_squeeze %106 : memref<1x!tpu.dma_semaphore, #tpu.memory_space<semaphore_mem>> -> memref<!tpu.dma_semaphore, #tpu.memory_space<semaphore_mem>>
    tpu.wait_dma2 semaphore(%107 : memref<!tpu.dma_semaphore, #tpu.memory_space<semaphore_mem>>) src(%104 : memref<1x128xf32, #tpu.memory_space<any>>) dst(%105 : memref<1x128xf32, #tpu.memory_space<vmem>>)
    %c7_i32_76 = arith.constant 7 : i32
    %c0_i32_77 = arith.constant 0 : i32
    %108 = tpu.memref_slice %arg5[%7, %c0_i32_77] : memref<128x128xf32, #tpu.memory_space<any>> -> memref<1x128xf32, #tpu.memory_space<any>>
    %c7_i32_78 = arith.constant 7 : i32
    %c0_i32_79 = arith.constant 0 : i32
    %109 = tpu.memref_slice %arg7[%c7_i32_78, %c0_i32_79] : memref<16x128xf32, #tpu.memory_space<vmem>> -> memref<1x128xf32, #tpu.memory_space<vmem>>
    %110 = tpu.memref_slice %arg8[%c7_i32_76] : memref<16x!tpu.dma_semaphore, #tpu.memory_space<semaphore_mem>> -> memref<1x!tpu.dma_semaphore, #tpu.memory_space<semaphore_mem>>
    %111 = tpu.memref_squeeze %110 : memref<1x!tpu.dma_semaphore, #tpu.memory_space<semaphore_mem>> -> memref<!tpu.dma_semaphore, #tpu.memory_space<semaphore_mem>>
    tpu.wait_dma2 semaphore(%111 : memref<!tpu.dma_semaphore, #tpu.memory_space<semaphore_mem>>) src(%108 : memref<1x128xf32, #tpu.memory_space<any>>) dst(%109 : memref<1x128xf32, #tpu.memory_space<vmem>>)
    %c8_i32_80 = arith.constant 8 : i32
    %c0_i32_81 = arith.constant 0 : i32
    %112 = tpu.memref_slice %arg5[%8, %c0_i32_81] : memref<128x128xf32, #tpu.memory_space<any>> -> memref<1x128xf32, #tpu.memory_space<any>>
    %c8_i32_82 = arith.constant 8 : i32
    %c0_i32_83 = arith.constant 0 : i32
    %113 = tpu.memref_slice %arg7[%c8_i32_82, %c0_i32_83] : memref<16x128xf32, #tpu.memory_space<vmem>> -> memref<1x128xf32, #tpu.memory_space<vmem>>
    %114 = tpu.memref_slice %arg8[%c8_i32_80] : memref<16x!tpu.dma_semaphore, #tpu.memory_space<semaphore_mem>> -> memref<1x!tpu.dma_semaphore, #tpu.memory_space<semaphore_mem>>
    %115 = tpu.memref_squeeze %114 : memref<1x!tpu.dma_semaphore, #tpu.memory_space<semaphore_mem>> -> memref<!tpu.dma_semaphore, #tpu.memory_space<semaphore_mem>>
    tpu.wait_dma2 semaphore(%115 : memref<!tpu.dma_semaphore, #tpu.memory_space<semaphore_mem>>) src(%112 : memref<1x128xf32, #tpu.memory_space<any>>) dst(%113 : memref<1x128xf32, #tpu.memory_space<vmem>>)
    %c9_i32_84 = arith.constant 9 : i32
    %c0_i32_85 = arith.constant 0 : i32
    %116 = tpu.memref_slice %arg5[%9, %c0_i32_85] : memref<128x128xf32, #tpu.memory_space<any>> -> memref<1x128xf32, #tpu.memory_space<any>>
    %c9_i32_86 = arith.constant 9 : i32
    %c0_i32_87 = arith.constant 0 : i32
    %117 = tpu.memref_slice %arg7[%c9_i32_86, %c0_i32_87] : memref<16x128xf32, #tpu.memory_space<vmem>> -> memref<1x128xf32, #tpu.memory_space<vmem>>
    %118 = tpu.memref_slice %arg8[%c9_i32_84] : memref<16x!tpu.dma_semaphore, #tpu.memory_space<semaphore_mem>> -> memref<1x!tpu.dma_semaphore, #tpu.memory_space<semaphore_mem>>
    %119 = tpu.memref_squeeze %118 : memref<1x!tpu.dma_semaphore, #tpu.memory_space<semaphore_mem>> -> memref<!tpu.dma_semaphore, #tpu.memory_space<semaphore_mem>>
    tpu.wait_dma2 semaphore(%119 : memref<!tpu.dma_semaphore, #tpu.memory_space<semaphore_mem>>) src(%116 : memref<1x128xf32, #tpu.memory_space<any>>) dst(%117 : memref<1x128xf32, #tpu.memory_space<vmem>>)
    %c10_i32_88 = arith.constant 10 : i32
    %c0_i32_89 = arith.constant 0 : i32
    %120 = tpu.memref_slice %arg5[%10, %c0_i32_89] : memref<128x128xf32, #tpu.memory_space<any>> -> memref<1x128xf32, #tpu.memory_space<any>>
    %c10_i32_90 = arith.constant 10 : i32
    %c0_i32_91 = arith.constant 0 : i32
    %121 = tpu.memref_slice %arg7[%c10_i32_90, %c0_i32_91] : memref<16x128xf32, #tpu.memory_space<vmem>> -> memref<1x128xf32, #tpu.memory_space<vmem>>
    %122 = tpu.memref_slice %arg8[%c10_i32_88] : memref<16x!tpu.dma_semaphore, #tpu.memory_space<semaphore_mem>> -> memref<1x!tpu.dma_semaphore, #tpu.memory_space<semaphore_mem>>
    %123 = tpu.memref_squeeze %122 : memref<1x!tpu.dma_semaphore, #tpu.memory_space<semaphore_mem>> -> memref<!tpu.dma_semaphore, #tpu.memory_space<semaphore_mem>>
    tpu.wait_dma2 semaphore(%123 : memref<!tpu.dma_semaphore, #tpu.memory_space<semaphore_mem>>) src(%120 : memref<1x128xf32, #tpu.memory_space<any>>) dst(%121 : memref<1x128xf32, #tpu.memory_space<vmem>>)
    %c11_i32_92 = arith.constant 11 : i32
    %c0_i32_93 = arith.constant 0 : i32
    %124 = tpu.memref_slice %arg5[%11, %c0_i32_93] : memref<128x128xf32, #tpu.memory_space<any>> -> memref<1x128xf32, #tpu.memory_space<any>>
    %c11_i32_94 = arith.constant 11 : i32
    %c0_i32_95 = arith.constant 0 : i32
    %125 = tpu.memref_slice %arg7[%c11_i32_94, %c0_i32_95] : memref<16x128xf32, #tpu.memory_space<vmem>> -> memref<1x128xf32, #tpu.memory_space<vmem>>
    %126 = tpu.memref_slice %arg8[%c11_i32_92] : memref<16x!tpu.dma_semaphore, #tpu.memory_space<semaphore_mem>> -> memref<1x!tpu.dma_semaphore, #tpu.memory_space<semaphore_mem>>
    %127 = tpu.memref_squeeze %126 : memref<1x!tpu.dma_semaphore, #tpu.memory_space<semaphore_mem>> -> memref<!tpu.dma_semaphore, #tpu.memory_space<semaphore_mem>>
    tpu.wait_dma2 semaphore(%127 : memref<!tpu.dma_semaphore, #tpu.memory_space<semaphore_mem>>) src(%124 : memref<1x128xf32, #tpu.memory_space<any>>) dst(%125 : memref<1x128xf32, #tpu.memory_space<vmem>>)
    %c12_i32_96 = arith.constant 12 : i32
    %c0_i32_97 = arith.constant 0 : i32
    %128 = tpu.memref_slice %arg5[%12, %c0_i32_97] : memref<128x128xf32, #tpu.memory_space<any>> -> memref<1x128xf32, #tpu.memory_space<any>>
    %c12_i32_98 = arith.constant 12 : i32
    %c0_i32_99 = arith.constant 0 : i32
    %129 = tpu.memref_slice %arg7[%c12_i32_98, %c0_i32_99] : memref<16x128xf32, #tpu.memory_space<vmem>> -> memref<1x128xf32, #tpu.memory_space<vmem>>
    %130 = tpu.memref_slice %arg8[%c12_i32_96] : memref<16x!tpu.dma_semaphore, #tpu.memory_space<semaphore_mem>> -> memref<1x!tpu.dma_semaphore, #tpu.memory_space<semaphore_mem>>
    %131 = tpu.memref_squeeze %130 : memref<1x!tpu.dma_semaphore, #tpu.memory_space<semaphore_mem>> -> memref<!tpu.dma_semaphore, #tpu.memory_space<semaphore_mem>>
    tpu.wait_dma2 semaphore(%131 : memref<!tpu.dma_semaphore, #tpu.memory_space<semaphore_mem>>) src(%128 : memref<1x128xf32, #tpu.memory_space<any>>) dst(%129 : memref<1x128xf32, #tpu.memory_space<vmem>>)
    %c13_i32_100 = arith.constant 13 : i32
    %c0_i32_101 = arith.constant 0 : i32
    %132 = tpu.memref_slice %arg5[%13, %c0_i32_101] : memref<128x128xf32, #tpu.memory_space<any>> -> memref<1x128xf32, #tpu.memory_space<any>>
    %c13_i32_102 = arith.constant 13 : i32
    %c0_i32_103 = arith.constant 0 : i32
    %133 = tpu.memref_slice %arg7[%c13_i32_102, %c0_i32_103] : memref<16x128xf32, #tpu.memory_space<vmem>> -> memref<1x128xf32, #tpu.memory_space<vmem>>
    %134 = tpu.memref_slice %arg8[%c13_i32_100] : memref<16x!tpu.dma_semaphore, #tpu.memory_space<semaphore_mem>> -> memref<1x!tpu.dma_semaphore, #tpu.memory_space<semaphore_mem>>
    %135 = tpu.memref_squeeze %134 : memref<1x!tpu.dma_semaphore, #tpu.memory_space<semaphore_mem>> -> memref<!tpu.dma_semaphore, #tpu.memory_space<semaphore_mem>>
    tpu.wait_dma2 semaphore(%135 : memref<!tpu.dma_semaphore, #tpu.memory_space<semaphore_mem>>) src(%132 : memref<1x128xf32, #tpu.memory_space<any>>) dst(%133 : memref<1x128xf32, #tpu.memory_space<vmem>>)
    %c14_i32_104 = arith.constant 14 : i32
    %c0_i32_105 = arith.constant 0 : i32
    %136 = tpu.memref_slice %arg5[%14, %c0_i32_105] : memref<128x128xf32, #tpu.memory_space<any>> -> memref<1x128xf32, #tpu.memory_space<any>>
    %c14_i32_106 = arith.constant 14 : i32
    %c0_i32_107 = arith.constant 0 : i32
    %137 = tpu.memref_slice %arg7[%c14_i32_106, %c0_i32_107] : memref<16x128xf32, #tpu.memory_space<vmem>> -> memref<1x128xf32, #tpu.memory_space<vmem>>
    %138 = tpu.memref_slice %arg8[%c14_i32_104] : memref<16x!tpu.dma_semaphore, #tpu.memory_space<semaphore_mem>> -> memref<1x!tpu.dma_semaphore, #tpu.memory_space<semaphore_mem>>
    %139 = tpu.memref_squeeze %138 : memref<1x!tpu.dma_semaphore, #tpu.memory_space<semaphore_mem>> -> memref<!tpu.dma_semaphore, #tpu.memory_space<semaphore_mem>>
    tpu.wait_dma2 semaphore(%139 : memref<!tpu.dma_semaphore, #tpu.memory_space<semaphore_mem>>) src(%136 : memref<1x128xf32, #tpu.memory_space<any>>) dst(%137 : memref<1x128xf32, #tpu.memory_space<vmem>>)
    %c15_i32_108 = arith.constant 15 : i32
    %c0_i32_109 = arith.constant 0 : i32
    %140 = tpu.memref_slice %arg5[%15, %c0_i32_109] : memref<128x128xf32, #tpu.memory_space<any>> -> memref<1x128xf32, #tpu.memory_space<any>>
    %c15_i32_110 = arith.constant 15 : i32
    %c0_i32_111 = arith.constant 0 : i32
    %141 = tpu.memref_slice %arg7[%c15_i32_110, %c0_i32_111] : memref<16x128xf32, #tpu.memory_space<vmem>> -> memref<1x128xf32, #tpu.memory_space<vmem>>
    %142 = tpu.memref_slice %arg8[%c15_i32_108] : memref<16x!tpu.dma_semaphore, #tpu.memory_space<semaphore_mem>> -> memref<1x!tpu.dma_semaphore, #tpu.memory_space<semaphore_mem>>
    %143 = tpu.memref_squeeze %142 : memref<1x!tpu.dma_semaphore, #tpu.memory_space<semaphore_mem>> -> memref<!tpu.dma_semaphore, #tpu.memory_space<semaphore_mem>>
    tpu.wait_dma2 semaphore(%143 : memref<!tpu.dma_semaphore, #tpu.memory_space<semaphore_mem>>) src(%140 : memref<1x128xf32, #tpu.memory_space<any>>) dst(%141 : memref<1x128xf32, #tpu.memory_space<vmem>>)
    %c0_112 = arith.constant 0 : index
    %c0_113 = arith.constant 0 : index
    %144 = vector.load %arg7[%c0_112, %c0_113] : memref<16x128xf32, #tpu.memory_space<vmem>>, vector<16x128xf32>
    %c0_114 = arith.constant 0 : index
    %c0_115 = arith.constant 0 : index
    %145 = vector.load %arg3[%c0_114, %c0_115] : memref<128x2xf32, #tpu.memory_space<vmem>>, vector<128x2xf32>
    %cst = arith.constant dense<0.000000e+00> : vector<16x2xf32>
    %146 = tpu.matmul %144, %145, %cst {dimension_numbers = #tpu.dot_dimension_numbers<[1], [0], [0], [1], [0, 0, 1, 1], [], []>} : vector<16x128xf32>, vector<128x2xf32>, vector<16x2xf32> -> vector<16x2xf32>
    %c0_116 = arith.constant 0 : index
    %c0_117 = arith.constant 0 : index
    %147 = vector.load %arg4[%c0_116, %c0_117] : memref<1x2xf32, #tpu.memory_space<vmem>>, vector<1x2xf32>
    %148 = vector.broadcast %147 : vector<1x2xf32> to vector<16x2xf32>
    %149 = arith.addf %146, %148 : vector<16x2xf32>
    %c0_118 = arith.constant 0 : index
    %c0_119 = arith.constant 0 : index
    %150 = vector.load %arg2[%c0_118, %c0_119] : memref<16x2xf32, #tpu.memory_space<vmem>>, vector<16x2xf32>
    %151 = arith.addf %150, %149 : vector<16x2xf32>
    %c0_120 = arith.constant 0 : index
    %c0_121 = arith.constant 0 : index
    %152 = vector.load %arg6[%c0_120, %c0_121] : memref<16x2xf32, #tpu.memory_space<vmem>>, vector<16x2xf32>
    tpu.vector_store %arg6[%c0_120, %c0_121], %151 {strides = array<i32>} : memref<16x2xf32, #tpu.memory_space<vmem>>, vector<16x2xf32>,
    return
  }
  func.func @transform_0(%arg0: i32) -> i32 {
    %c0_i32 = arith.constant 0 : i32
    %c0_i32_0 = arith.constant 0 : i32
    return %c0_i32 : i32
  }
  func.func @transform_1(%arg0: i32) -> (i32, i32) {
    %c0_i32 = arith.constant 0 : i32
    %c0_i32_0 = arith.constant 0 : i32
    %c0_i32_1 = arith.constant 0 : i32
    return %c0_i32, %c0_i32_0 : i32, i32
  }
  func.func @transform_2(%arg0: i32) -> (i32, i32) {
    %c0_i32 = arith.constant 0 : i32
    %c0_i32_0 = arith.constant 0 : i32
    %c0_i32_1 = arith.constant 0 : i32
    return %c0_i32, %c0_i32_0 : i32, i32
  }
  func.func @transform_3(%arg0: i32) -> (i32, i32) {
    %c0_i32 = arith.constant 0 : i32
    %c0_i32_0 = arith.constant 0 : i32
    %c0_i32_1 = arith.constant 0 : i32
    return %c0_i32, %c0_i32_0 : i32, i32
  }
  func.func @transform_5(%arg0: i32) -> (i32, i32) {
    %c0_i32 = arith.constant 0 : i32
    %c0_i32_0 = arith.constant 0 : i32
    %c0_i32_1 = arith.constant 0 : i32
    return %c0_i32, %c0_i32_0 : i32, i32
  }
}

</mosaic_0001>

<llo_original>
// kernel: model_forward.3
$region0: #{model_forward.3}
  #allocation0 [shape = 'u32[]', space=smem, size = 0x4, offset = 0x4, fixed_abs, tag = 'smem constant byte address 0x4 - core index']
  #allocation1 [shape = 'u32[144,128]{1,0:T(1,128)}', space=vmem, size = 0x12000, scoped, tag = 'internal scratch']
  #allocation2 [shape = 'f32[16,128]{1,0:T(8,128)}', space=vmem, size = 0x2000, scoped, tag = 'scratch operand']
  #allocation3 [shape = 's32[16]{0}', space=sflag, size = 0x40, scoped, tag = 'scratch operand']
  #allocation6 [shape = 's32[]', space=sflag, size = 0x4, offset = 0, fixed_abs, tag = 'sflag constant byte address 0x0 - dummy sync flag']
  #allocation7 [shape = 's32[]', space=sflag, size = 0x4, offset = 0, fixed_abs, tag = 'sflag constant byte address 0x0 - dummy sync flag']
  #allocation8 [shape = 's32[]', space=sflag, size = 0x4, offset = 0, fixed_abs, tag = 'sflag constant byte address 0x0 - dummy sync flag']
  #allocation9 [shape = 's32[]', space=sflag, size = 0x4, offset = 0, fixed_abs, tag = 'sflag constant byte address 0x0 - dummy sync flag']
  #allocation10 [shape = 's32[]', space=sflag, size = 0x4, offset = 0, fixed_abs, tag = 'sflag constant byte address 0x0 - dummy sync flag']
  #allocation11 [shape = 's32[]', space=sflag, size = 0x4, offset = 0, fixed_abs, tag = 'sflag constant byte address 0x0 - dummy sync flag']
  #allocation12 [shape = 's32[]', space=sflag, size = 0x4, offset = 0, fixed_abs, tag = 'sflag constant byte address 0x0 - dummy sync flag']
  #allocation13 [shape = 's32[]', space=sflag, size = 0x4, offset = 0, fixed_abs, tag = 'sflag constant byte address 0x0 - dummy sync flag']
  #allocation14 [shape = 's32[]', space=sflag, size = 0x4, offset = 0, fixed_abs, tag = 'sflag constant byte address 0x0 - dummy sync flag']
  #allocation15 [shape = 's32[]', space=sflag, size = 0x4, offset = 0, fixed_abs, tag = 'sflag constant byte address 0x0 - dummy sync flag']
  #allocation16 [shape = 's32[]', space=sflag, size = 0x4, offset = 0, fixed_abs, tag = 'sflag constant byte address 0x0 - dummy sync flag']
  #allocation17 [shape = 's32[]', space=sflag, size = 0x4, offset = 0, fixed_abs, tag = 'sflag constant byte address 0x0 - dummy sync flag']
  #allocation18 [shape = 's32[]', space=sflag, size = 0x4, offset = 0, fixed_abs, tag = 'sflag constant byte address 0x0 - dummy sync flag']
  #allocation19 [shape = 's32[]', space=sflag, size = 0x4, offset = 0, fixed_abs, tag = 'sflag constant byte address 0x0 - dummy sync flag']
  #allocation20 [shape = 's32[]', space=sflag, size = 0x4, offset = 0, fixed_abs, tag = 'sflag constant byte address 0x0 - dummy sync flag']
  #allocation21 [shape = 's32[]', space=sflag, size = 0x4, offset = 0, fixed_abs, tag = 'sflag constant byte address 0x0 - dummy sync flag']
  %s0 = inlined_call_operand.vmem [shape: s32[16], index: 0, kind: input, shape index: {}]
  %s1 = inlined_call_operand.vmem [shape: f32[16,2], index: 1, kind: input, shape index: {}]
  %s2 = inlined_call_operand.vmem [shape: f32[128,2], index: 2, kind: input, shape index: {}]
  %s3 = inlined_call_operand.vmem [shape: f32[1,2], index: 3, kind: input, shape index: {}]
  %s4 = inlined_call_operand.vmem [shape: f32[128,128], index: 4, kind: input, shape index: {}]
  %s5 = inlined_call_operand.vmem [shape: f32[16,2], index: 5, kind: output, shape index: {}]
  %s6 = sld [smem:[#allocation0]]
  $region510: #{model_forward.3} parent=0
    _
  %s8 = ssub.s32 1, %s6
  %s9 = scalar_select 0, %s8, %s6
  $region1: #{model_forward.3} parent=0
    #allocation4 [shape = 'u8[512]{0}', space=smem, size = 0x200, scoped, tag = 'input window, operand 0, single buffered']
    #allocation5 [shape = 's32[1]{0}', space=sflag, size = 0x4, scoped, tag = 'scoped memory for model_forward.3']
    %10 = vsyncpa [#allocation5], 0
    // Predicated region
    $region2: #{model_forward.3} parent=1 // pred_check
      _
    $region3: #{model_forward.3} parent=1 // pred_check_branch
      %12 = sbr.rel (0) target = $region5
    $region4: #{model_forward.3} parent=1 // pred_region
      %s14 = ssub.s32 16, 16
      %15 = vsyncadd [#allocation5], %s14
      %s17 = sshll.u32 %s0, 4
      %s18 = int_to_ptr.vmem [resolvable:$true] %s17
      %20 = dma.vmem_to_smem %s18, 16, [#allocation4], [#allocation5]
    $region5: #{model_forward.3} parent=1 // pred_fallthru
      _
    // Predicated region
    $region6: #{model_forward.3} parent=1 // pred_check
      _
    $region7: #{model_forward.3} parent=1 // pred_check_branch
      %22 = sbr.rel (0) target = $region9
    $region8: #{model_forward.3} parent=1 // pred_region
      _
    $region9: #{model_forward.3} parent=1 // pred_fallthru
      _
    // Predicated region
    $region10: #{model_forward.3} parent=1 // pred_check
      _
    $region11: #{model_forward.3} parent=1 // pred_check_branch
      %24 = sbr.rel (0) target = $region13
    $region12: #{model_forward.3} parent=1 // pred_region
      _
    $region13: #{model_forward.3} parent=1 // pred_fallthru
      _
    // Predicated region
    $region14: #{model_forward.3} parent=1 // pred_check
      _
    $region15: #{model_forward.3} parent=1 // pred_check_branch
      %26 = sbr.rel (0) target = $region17
    $region16: #{model_forward.3} parent=1 // pred_region
      _
    $region17: #{model_forward.3} parent=1 // pred_fallthru
      _
    // Predicated region
    $region18: #{model_forward.3} parent=1 // pred_check
      _
    $region19: #{model_forward.3} parent=1 // pred_check_branch
      %28 = sbr.rel (0) target = $region21
    $region20: #{model_forward.3} parent=1 // pred_region
      %29 = dma.done [#allocation5], 16
    $region21: #{model_forward.3} parent=1 // pred_fallthru
      _
    %30 = sfence
    %s31 = sld [smem:[#allocation4]]
    %s32 = sld [smem:[#allocation4 + $0x1]]
    %s33 = sld [smem:[#allocation4 + $0x2]]
    %s34 = sld [smem:[#allocation4 + $0x3]]
    %s35 = sld [smem:[#allocation4 + $0x4]]
    %s36 = sld [smem:[#allocation4 + $0x5]]
    %s37 = sld [smem:[#allocation4 + $0x6]]
    %s38 = sld [smem:[#allocation4 + $0x7]]
    %s39 = sld [smem:[#allocation4 + $0x8]]
    %s40 = sld [smem:[#allocation4 + $0x9]]
    %s41 = sld [smem:[#allocation4 + $0xa]]
    %s42 = sld [smem:[#allocation4 + $0xb]]
    %s43 = sld [smem:[#allocation4 + $0xc]]
    %s44 = sld [smem:[#allocation4 + $0xd]]
    %s45 = sld [smem:[#allocation4 + $0xe]]
    %s46 = sld [smem:[#allocation4 + $0xf]]
    %s47 = scalar_lea.vmem %s4, %s31
    %p49 = scmp.lt.u32.totalorder 1, 8
    %p50 = pneg %p49
    // Predicated region
    $region22: #{model_forward.3} parent=1 // pred_check
      _
    $region23: #{model_forward.3} parent=1 // pred_check_branch
      %52 = sbr.rel (%p49) target = $region25
    $region24: #{model_forward.3} parent=1 // pred_region
      %s67 = sand.u32 1, 7
      %p68 = scmp.eq.s32.totalorder %s67, 0
      %p69 = pneg %p68
      // Predicated region
      $region37: #{model_forward.3} parent=24 // pred_check
        _
      $region38: #{model_forward.3} parent=24 // pred_check_branch
        %71 = sbr.rel (%p68) target = $region40
      $region39: #{model_forward.3} parent=24 // pred_region
        %s72 = sand.u32 1, 7
        %s73 = ssub.s32 1, %s72
        %s74 = scalar_lea.vmem %s47, %s73
        %s75 = ssub.s32 1, %s72
        %s76 = scalar_lea.vmem [#allocation2], %s75
        %s77 = sshllo.u32 0, %s72
        loop: start=0, step=1, limit=1
        $region41: #{model_forward.3} parent=39 // loop_pre_header
          _
        $region42: #{model_forward.3} parent=39 // loop_header
          %s79 = sphi 0, %s83
          %p80 = scmp.ge.s32.totalorder %s79, 1
          %s84 = sphi %s74, %s74
          %s85 = sphi %s76, %s76
        $region43: #{model_forward.3} parent=39 // loop_header_branch
          %82 = sbr.rel (%p80) target = $region47
        $region44: #{model_forward.3} parent=39 // loop_body
          %v86 = vld [vmem:[%s84] sm:%s77]
          %87 = vst [vmem:[%s85] sm:%s77] %v86
        $region45: #{model_forward.3} parent=39 // loop_footer
          %s83 = sadd.s32 1, %s79
        $region46: #{model_forward.3} parent=39 // loop_footer_branch
          %78 = sbr.rel target = $region42
        $region47: #{model_forward.3} parent=39 // loop_exit
          _
      $region40: #{model_forward.3} parent=24 // pred_fallthru
        _
    $region25: #{model_forward.3} parent=1 // pred_fallthru
      _
    // Predicated region
    $region26: #{model_forward.3} parent=1 // pred_check
      %p53 = pneg %p49
    $region27: #{model_forward.3} parent=1 // pred_check_branch
      %55 = sbr.rel (%p53) target = $region29
    $region28: #{model_forward.3} parent=1 // pred_region
      %s56 = sshllo.u32 0, 1
      loop: start=0, step=1, limit=1
      $region30: #{model_forward.3} parent=28 // loop_pre_header
        _
      $region31: #{model_forward.3} parent=28 // loop_header
        %s58 = sphi 0, %s62
        %p59 = scmp.ge.s32.totalorder %s58, 1
        %s63 = sphi %s47, %s47
        %s64 = sphi [#allocation2], [#allocation2]
      $region32: #{model_forward.3} parent=28 // loop_header_branch
        %61 = sbr.rel (%p59) target = $region36
      $region33: #{model_forward.3} parent=28 // loop_body
        %v65 = vld [vmem:[%s63] sm:%s56]
        %66 = vst [vmem:[%s64] sm:%s56] %v65
      $region34: #{model_forward.3} parent=28 // loop_footer
        %s62 = sadd.s32 1, %s58
      $region35: #{model_forward.3} parent=28 // loop_footer_branch
        %57 = sbr.rel target = $region31
      $region36: #{model_forward.3} parent=28 // loop_exit
        _
    $region29: #{model_forward.3} parent=1 // pred_fallthru
      _
    // Predicated region
    $region48: #{model_forward.3} parent=1 // pred_check
      _
    $region49: #{model_forward.3} parent=1 // pred_check_branch
      %90 = sbr.rel (0) target = $region51
    $region50: #{model_forward.3} parent=1 // pred_region
      %91 = vsyncadd [#allocation3], 16
    $region51: #{model_forward.3} parent=1 // pred_fallthru
      _
    %s92 = scalar_lea.vmem %s4, %s32
    %s93 = scalar_lea.vmem [#allocation2], 1
    %s94 = scalar_lea.sflag [#allocation3], 1
    %p96 = scmp.lt.u32.totalorder 1, 8
    %p97 = pneg %p96
    // Predicated region
    $region52: #{model_forward.3} parent=1 // pred_check
      _
    $region53: #{model_forward.3} parent=1 // pred_check_branch
      %99 = sbr.rel (%p96) target = $region55
    $region54: #{model_forward.3} parent=1 // pred_region
      %s114 = sand.u32 1, 7
      %p115 = scmp.eq.s32.totalorder %s114, 0
      %p116 = pneg %p115
      // Predicated region
      $region67: #{model_forward.3} parent=54 // pred_check
        _
      $region68: #{model_forward.3} parent=54 // pred_check_branch
        %118 = sbr.rel (%p115) target = $region70
      $region69: #{model_forward.3} parent=54 // pred_region
        %s119 = sand.u32 1, 7
        %s120 = ssub.s32 1, %s119
        %s121 = scalar_lea.vmem %s92, %s120
        %s122 = ssub.s32 1, %s119
        %s123 = scalar_lea.vmem %s93, %s122 [#allocation2]
        %s124 = sshllo.u32 0, %s119
        loop: start=0, step=1, limit=1
        $region71: #{model_forward.3} parent=69 // loop_pre_header
          _
        $region72: #{model_forward.3} parent=69 // loop_header
          %s126 = sphi 0, %s130
          %p127 = scmp.ge.s32.totalorder %s126, 1
          %s131 = sphi %s121, %s121
          %s132 = sphi %s123, %s123
        $region73: #{model_forward.3} parent=69 // loop_header_branch
          %129 = sbr.rel (%p127) target = $region77
        $region74: #{model_forward.3} parent=69 // loop_body
          %v133 = vld [vmem:[%s131] sm:%s124]
          %134 = vst [vmem:[%s132] sm:%s124] %v133
        $region75: #{model_forward.3} parent=69 // loop_footer
          %s130 = sadd.s32 1, %s126
        $region76: #{model_forward.3} parent=69 // loop_footer_branch
          %125 = sbr.rel target = $region72
        $region77: #{model_forward.3} parent=69 // loop_exit
          _
      $region70: #{model_forward.3} parent=54 // pred_fallthru
        _
    $region55: #{model_forward.3} parent=1 // pred_fallthru
      _
    // Predicated region
    $region56: #{model_forward.3} parent=1 // pred_check
      %p100 = pneg %p96
    $region57: #{model_forward.3} parent=1 // pred_check_branch
      %102 = sbr.rel (%p100) target = $region59
    $region58: #{model_forward.3} parent=1 // pred_region
      %s103 = sshllo.u32 0, 1
      loop: start=0, step=1, limit=1
      $region60: #{model_forward.3} parent=58 // loop_pre_header
        _
      $region61: #{model_forward.3} parent=58 // loop_header
        %s105 = sphi 0, %s109
        %p106 = scmp.ge.s32.totalorder %s105, 1
        %s110 = sphi %s92, %s92
        %s111 = sphi %s93, %s93
      $region62: #{model_forward.3} parent=58 // loop_header_branch
        %108 = sbr.rel (%p106) target = $region66
      $region63: #{model_forward.3} parent=58 // loop_body
        %v112 = vld [vmem:[%s110] sm:%s103]
        %113 = vst [vmem:[%s111] sm:%s103] %v112
      $region64: #{model_forward.3} parent=58 // loop_footer
        %s109 = sadd.s32 1, %s105
      $region65: #{model_forward.3} parent=58 // loop_footer_branch
        %104 = sbr.rel target = $region61
      $region66: #{model_forward.3} parent=58 // loop_exit
        _
    $region59: #{model_forward.3} parent=1 // pred_fallthru
      _
    // Predicated region
    $region78: #{model_forward.3} parent=1 // pred_check
      _
    $region79: #{model_forward.3} parent=1 // pred_check_branch
      %137 = sbr.rel (0) target = $region81
    $region80: #{model_forward.3} parent=1 // pred_region
      %138 = vsyncadd %s94, 16
    $region81: #{model_forward.3} parent=1 // pred_fallthru
      _
    %s139 = scalar_lea.vmem %s4, %s33
    %s140 = scalar_lea.vmem [#allocation2], 2
    %s141 = scalar_lea.sflag [#allocation3], 2
    %p143 = scmp.lt.u32.totalorder 1, 8
    %p144 = pneg %p143
    // Predicated region
    $region82: #{model_forward.3} parent=1 // pred_check
      _
    $region83: #{model_forward.3} parent=1 // pred_check_branch
      %146 = sbr.rel (%p143) target = $region85
    $region84: #{model_forward.3} parent=1 // pred_region
      %s161 = sand.u32 1, 7
      %p162 = scmp.eq.s32.totalorder %s161, 0
      %p163 = pneg %p162
      // Predicated region
      $region97: #{model_forward.3} parent=84 // pred_check
        _
      $region98: #{model_forward.3} parent=84 // pred_check_branch
        %165 = sbr.rel (%p162) target = $region100
      $region99: #{model_forward.3} parent=84 // pred_region
        %s166 = sand.u32 1, 7
        %s167 = ssub.s32 1, %s166
        %s168 = scalar_lea.vmem %s139, %s167
        %s169 = ssub.s32 1, %s166
        %s170 = scalar_lea.vmem %s140, %s169 [#allocation2]
        %s171 = sshllo.u32 0, %s166
        loop: start=0, step=1, limit=1
        $region101: #{model_forward.3} parent=99 // loop_pre_header
          _
        $region102: #{model_forward.3} parent=99 // loop_header
          %s173 = sphi 0, %s177
          %p174 = scmp.ge.s32.totalorder %s173, 1
          %s178 = sphi %s168, %s168
          %s179 = sphi %s170, %s170
        $region103: #{model_forward.3} parent=99 // loop_header_branch
          %176 = sbr.rel (%p174) target = $region107
        $region104: #{model_forward.3} parent=99 // loop_body
          %v180 = vld [vmem:[%s178] sm:%s171]
          %181 = vst [vmem:[%s179] sm:%s171] %v180
        $region105: #{model_forward.3} parent=99 // loop_footer
          %s177 = sadd.s32 1, %s173
        $region106: #{model_forward.3} parent=99 // loop_footer_branch
          %172 = sbr.rel target = $region102
        $region107: #{model_forward.3} parent=99 // loop_exit
          _
      $region100: #{model_forward.3} parent=84 // pred_fallthru
        _
    $region85: #{model_forward.3} parent=1 // pred_fallthru
      _
    // Predicated region
    $region86: #{model_forward.3} parent=1 // pred_check
      %p147 = pneg %p143
    $region87: #{model_forward.3} parent=1 // pred_check_branch
      %149 = sbr.rel (%p147) target = $region89
    $region88: #{model_forward.3} parent=1 // pred_region
      %s150 = sshllo.u32 0, 1
      loop: start=0, step=1, limit=1
      $region90: #{model_forward.3} parent=88 // loop_pre_header
        _
      $region91: #{model_forward.3} parent=88 // loop_header
        %s152 = sphi 0, %s156
        %p153 = scmp.ge.s32.totalorder %s152, 1
        %s157 = sphi %s139, %s139
        %s158 = sphi %s140, %s140
      $region92: #{model_forward.3} parent=88 // loop_header_branch
        %155 = sbr.rel (%p153) target = $region96
      $region93: #{model_forward.3} parent=88 // loop_body
        %v159 = vld [vmem:[%s157] sm:%s150]
        %160 = vst [vmem:[%s158] sm:%s150] %v159
      $region94: #{model_forward.3} parent=88 // loop_footer
        %s156 = sadd.s32 1, %s152
      $region95: #{model_forward.3} parent=88 // loop_footer_branch
        %151 = sbr.rel target = $region91
      $region96: #{model_forward.3} parent=88 // loop_exit
        _
    $region89: #{model_forward.3} parent=1 // pred_fallthru
      _
    // Predicated region
    $region108: #{model_forward.3} parent=1 // pred_check
      _
    $region109: #{model_forward.3} parent=1 // pred_check_branch
      %184 = sbr.rel (0) target = $region111
    $region110: #{model_forward.3} parent=1 // pred_region
      %185 = vsyncadd %s141, 16
    $region111: #{model_forward.3} parent=1 // pred_fallthru
      _
    %s186 = scalar_lea.vmem %s4, %s34
    %s187 = scalar_lea.vmem [#allocation2], 3
    %s188 = scalar_lea.sflag [#allocation3], 3
    %p190 = scmp.lt.u32.totalorder 1, 8
    %p191 = pneg %p190
    // Predicated region
    $region112: #{model_forward.3} parent=1 // pred_check
      _
    $region113: #{model_forward.3} parent=1 // pred_check_branch
      %193 = sbr.rel (%p190) target = $region115
    $region114: #{model_forward.3} parent=1 // pred_region
      %s208 = sand.u32 1, 7
      %p209 = scmp.eq.s32.totalorder %s208, 0
      %p210 = pneg %p209
      // Predicated region
      $region127: #{model_forward.3} parent=114 // pred_check
        _
      $region128: #{model_forward.3} parent=114 // pred_check_branch
        %212 = sbr.rel (%p209) target = $region130
      $region129: #{model_forward.3} parent=114 // pred_region
        %s213 = sand.u32 1, 7
        %s214 = ssub.s32 1, %s213
        %s215 = scalar_lea.vmem %s186, %s214
        %s216 = ssub.s32 1, %s213
        %s217 = scalar_lea.vmem %s187, %s216 [#allocation2]
        %s218 = sshllo.u32 0, %s213
        loop: start=0, step=1, limit=1
        $region131: #{model_forward.3} parent=129 // loop_pre_header
          _
        $region132: #{model_forward.3} parent=129 // loop_header
          %s220 = sphi 0, %s224
          %p221 = scmp.ge.s32.totalorder %s220, 1
          %s225 = sphi %s215, %s215
          %s226 = sphi %s217, %s217
        $region133: #{model_forward.3} parent=129 // loop_header_branch
          %223 = sbr.rel (%p221) target = $region137
        $region134: #{model_forward.3} parent=129 // loop_body
          %v227 = vld [vmem:[%s225] sm:%s218]
          %228 = vst [vmem:[%s226] sm:%s218] %v227
        $region135: #{model_forward.3} parent=129 // loop_footer
          %s224 = sadd.s32 1, %s220
        $region136: #{model_forward.3} parent=129 // loop_footer_branch
          %219 = sbr.rel target = $region132
        $region137: #{model_forward.3} parent=129 // loop_exit
          _
      $region130: #{model_forward.3} parent=114 // pred_fallthru
        _
    $region115: #{model_forward.3} parent=1 // pred_fallthru
      _
    // Predicated region
    $region116: #{model_forward.3} parent=1 // pred_check
      %p194 = pneg %p190
    $region117: #{model_forward.3} parent=1 // pred_check_branch
      %196 = sbr.rel (%p194) target = $region119
    $region118: #{model_forward.3} parent=1 // pred_region
      %s197 = sshllo.u32 0, 1
      loop: start=0, step=1, limit=1
      $region120: #{model_forward.3} parent=118 // loop_pre_header
        _
      $region121: #{model_forward.3} parent=118 // loop_header
        %s199 = sphi 0, %s203
        %p200 = scmp.ge.s32.totalorder %s199, 1
        %s204 = sphi %s186, %s186
        %s205 = sphi %s187, %s187
      $region122: #{model_forward.3} parent=118 // loop_header_branch
        %202 = sbr.rel (%p200) target = $region126
      $region123: #{model_forward.3} parent=118 // loop_body
        %v206 = vld [vmem:[%s204] sm:%s197]
        %207 = vst [vmem:[%s205] sm:%s197] %v206
      $region124: #{model_forward.3} parent=118 // loop_footer
        %s203 = sadd.s32 1, %s199
      $region125: #{model_forward.3} parent=118 // loop_footer_branch
        %198 = sbr.rel target = $region121
      $region126: #{model_forward.3} parent=118 // loop_exit
        _
    $region119: #{model_forward.3} parent=1 // pred_fallthru
      _
    // Predicated region
    $region138: #{model_forward.3} parent=1 // pred_check
      _
    $region139: #{model_forward.3} parent=1 // pred_check_branch
      %231 = sbr.rel (0) target = $region141
    $region140: #{model_forward.3} parent=1 // pred_region
      %232 = vsyncadd %s188, 16
    $region141: #{model_forward.3} parent=1 // pred_fallthru
      _
    %s233 = scalar_lea.vmem %s4, %s35
    %s234 = scalar_lea.vmem [#allocation2], 4
    %s235 = scalar_lea.sflag [#allocation3], 4
    %p237 = scmp.lt.u32.totalorder 1, 8
    %p238 = pneg %p237
    // Predicated region
    $region142: #{model_forward.3} parent=1 // pred_check
      _
    $region143: #{model_forward.3} parent=1 // pred_check_branch
      %240 = sbr.rel (%p237) target = $region145
    $region144: #{model_forward.3} parent=1 // pred_region
      %s255 = sand.u32 1, 7
      %p256 = scmp.eq.s32.totalorder %s255, 0
      %p257 = pneg %p256
      // Predicated region
      $region157: #{model_forward.3} parent=144 // pred_check
        _
      $region158: #{model_forward.3} parent=144 // pred_check_branch
        %259 = sbr.rel (%p256) target = $region160
      $region159: #{model_forward.3} parent=144 // pred_region
        %s260 = sand.u32 1, 7
        %s261 = ssub.s32 1, %s260
        %s262 = scalar_lea.vmem %s233, %s261
        %s263 = ssub.s32 1, %s260
        %s264 = scalar_lea.vmem %s234, %s263 [#allocation2]
        %s265 = sshllo.u32 0, %s260
        loop: start=0, step=1, limit=1
        $region161: #{model_forward.3} parent=159 // loop_pre_header
          _
        $region162: #{model_forward.3} parent=159 // loop_header
          %s267 = sphi 0, %s271
          %p268 = scmp.ge.s32.totalorder %s267, 1
          %s272 = sphi %s262, %s262
          %s273 = sphi %s264, %s264
        $region163: #{model_forward.3} parent=159 // loop_header_branch
          %270 = sbr.rel (%p268) target = $region167
        $region164: #{model_forward.3} parent=159 // loop_body
          %v274 = vld [vmem:[%s272] sm:%s265]
          %275 = vst [vmem:[%s273] sm:%s265] %v274
        $region165: #{model_forward.3} parent=159 // loop_footer
          %s271 = sadd.s32 1, %s267
        $region166: #{model_forward.3} parent=159 // loop_footer_branch
          %266 = sbr.rel target = $region162
        $region167: #{model_forward.3} parent=159 // loop_exit
          _
      $region160: #{model_forward.3} parent=144 // pred_fallthru
        _
    $region145: #{model_forward.3} parent=1 // pred_fallthru
      _
    // Predicated region
    $region146: #{model_forward.3} parent=1 // pred_check
      %p241 = pneg %p237
    $region147: #{model_forward.3} parent=1 // pred_check_branch
      %243 = sbr.rel (%p241) target = $region149
    $region148: #{model_forward.3} parent=1 // pred_region
      %s244 = sshllo.u32 0, 1
      loop: start=0, step=1, limit=1
      $region150: #{model_forward.3} parent=148 // loop_pre_header
        _
      $region151: #{model_forward.3} parent=148 // loop_header
        %s246 = sphi 0, %s250
        %p247 = scmp.ge.s32.totalorder %s246, 1
        %s251 = sphi %s233, %s233
        %s252 = sphi %s234, %s234
      $region152: #{model_forward.3} parent=148 // loop_header_branch
        %249 = sbr.rel (%p247) target = $region156
      $region153: #{model_forward.3} parent=148 // loop_body
        %v253 = vld [vmem:[%s251] sm:%s244]
        %254 = vst [vmem:[%s252] sm:%s244] %v253
      $region154: #{model_forward.3} parent=148 // loop_footer
        %s250 = sadd.s32 1, %s246
      $region155: #{model_forward.3} parent=148 // loop_footer_branch
        %245 = sbr.rel target = $region151
      $region156: #{model_forward.3} parent=148 // loop_exit
        _
    $region149: #{model_forward.3} parent=1 // pred_fallthru
      _
    // Predicated region
    $region168: #{model_forward.3} parent=1 // pred_check
      _
    $region169: #{model_forward.3} parent=1 // pred_check_branch
      %278 = sbr.rel (0) target = $region171
    $region170: #{model_forward.3} parent=1 // pred_region
      %279 = vsyncadd %s235, 16
    $region171: #{model_forward.3} parent=1 // pred_fallthru
      _
    %s280 = scalar_lea.vmem %s4, %s36
    %s281 = scalar_lea.vmem [#allocation2], 5
    %s282 = scalar_lea.sflag [#allocation3], 5
    %p284 = scmp.lt.u32.totalorder 1, 8
    %p285 = pneg %p284
    // Predicated region
    $region172: #{model_forward.3} parent=1 // pred_check
      _
    $region173: #{model_forward.3} parent=1 // pred_check_branch
      %287 = sbr.rel (%p284) target = $region175
    $region174: #{model_forward.3} parent=1 // pred_region
      %s302 = sand.u32 1, 7
      %p303 = scmp.eq.s32.totalorder %s302, 0
      %p304 = pneg %p303
      // Predicated region
      $region187: #{model_forward.3} parent=174 // pred_check
        _
      $region188: #{model_forward.3} parent=174 // pred_check_branch
        %306 = sbr.rel (%p303) target = $region190
      $region189: #{model_forward.3} parent=174 // pred_region
        %s307 = sand.u32 1, 7
        %s308 = ssub.s32 1, %s307
        %s309 = scalar_lea.vmem %s280, %s308
        %s310 = ssub.s32 1, %s307
        %s311 = scalar_lea.vmem %s281, %s310 [#allocation2]
        %s312 = sshllo.u32 0, %s307
        loop: start=0, step=1, limit=1
        $region191: #{model_forward.3} parent=189 // loop_pre_header
          _
        $region192: #{model_forward.3} parent=189 // loop_header
          %s314 = sphi 0, %s318
          %p315 = scmp.ge.s32.totalorder %s314, 1
          %s319 = sphi %s309, %s309
          %s320 = sphi %s311, %s311
        $region193: #{model_forward.3} parent=189 // loop_header_branch
          %317 = sbr.rel (%p315) target = $region197
        $region194: #{model_forward.3} parent=189 // loop_body
          %v321 = vld [vmem:[%s319] sm:%s312]
          %322 = vst [vmem:[%s320] sm:%s312] %v321
        $region195: #{model_forward.3} parent=189 // loop_footer
          %s318 = sadd.s32 1, %s314
        $region196: #{model_forward.3} parent=189 // loop_footer_branch
          %313 = sbr.rel target = $region192
        $region197: #{model_forward.3} parent=189 // loop_exit
          _
      $region190: #{model_forward.3} parent=174 // pred_fallthru
        _
    $region175: #{model_forward.3} parent=1 // pred_fallthru
      _
    // Predicated region
    $region176: #{model_forward.3} parent=1 // pred_check
      %p288 = pneg %p284
    $region177: #{model_forward.3} parent=1 // pred_check_branch
      %290 = sbr.rel (%p288) target = $region179
    $region178: #{model_forward.3} parent=1 // pred_region
      %s291 = sshllo.u32 0, 1
      loop: start=0, step=1, limit=1
      $region180: #{model_forward.3} parent=178 // loop_pre_header
        _
      $region181: #{model_forward.3} parent=178 // loop_header
        %s293 = sphi 0, %s297
        %p294 = scmp.ge.s32.totalorder %s293, 1
        %s298 = sphi %s280, %s280
        %s299 = sphi %s281, %s281
      $region182: #{model_forward.3} parent=178 // loop_header_branch
        %296 = sbr.rel (%p294) target = $region186
      $region183: #{model_forward.3} parent=178 // loop_body
        %v300 = vld [vmem:[%s298] sm:%s291]
        %301 = vst [vmem:[%s299] sm:%s291] %v300
      $region184: #{model_forward.3} parent=178 // loop_footer
        %s297 = sadd.s32 1, %s293
      $region185: #{model_forward.3} parent=178 // loop_footer_branch
        %292 = sbr.rel target = $region181
      $region186: #{model_forward.3} parent=178 // loop_exit
        _
    $region179: #{model_forward.3} parent=1 // pred_fallthru
      _
    // Predicated region
    $region198: #{model_forward.3} parent=1 // pred_check
      _
    $region199: #{model_forward.3} parent=1 // pred_check_branch
      %325 = sbr.rel (0) target = $region201
    $region200: #{model_forward.3} parent=1 // pred_region
      %326 = vsyncadd %s282, 16
    $region201: #{model_forward.3} parent=1 // pred_fallthru
      _
    %s327 = scalar_lea.vmem %s4, %s37
    %s328 = scalar_lea.vmem [#allocation2], 6
    %s329 = scalar_lea.sflag [#allocation3], 6
    %p331 = scmp.lt.u32.totalorder 1, 8
    %p332 = pneg %p331
    // Predicated region
    $region202: #{model_forward.3} parent=1 // pred_check
      _
    $region203: #{model_forward.3} parent=1 // pred_check_branch
      %334 = sbr.rel (%p331) target = $region205
    $region204: #{model_forward.3} parent=1 // pred_region
      %s349 = sand.u32 1, 7
      %p350 = scmp.eq.s32.totalorder %s349, 0
      %p351 = pneg %p350
      // Predicated region
      $region217: #{model_forward.3} parent=204 // pred_check
        _
      $region218: #{model_forward.3} parent=204 // pred_check_branch
        %353 = sbr.rel (%p350) target = $region220
      $region219: #{model_forward.3} parent=204 // pred_region
        %s354 = sand.u32 1, 7
        %s355 = ssub.s32 1, %s354
        %s356 = scalar_lea.vmem %s327, %s355
        %s357 = ssub.s32 1, %s354
        %s358 = scalar_lea.vmem %s328, %s357 [#allocation2]
        %s359 = sshllo.u32 0, %s354
        loop: start=0, step=1, limit=1
        $region221: #{model_forward.3} parent=219 // loop_pre_header
          _
        $region222: #{model_forward.3} parent=219 // loop_header
          %s361 = sphi 0, %s365
          %p362 = scmp.ge.s32.totalorder %s361, 1
          %s366 = sphi %s356, %s356
          %s367 = sphi %s358, %s358
        $region223: #{model_forward.3} parent=219 // loop_header_branch
          %364 = sbr.rel (%p362) target = $region227
        $region224: #{model_forward.3} parent=219 // loop_body
          %v368 = vld [vmem:[%s366] sm:%s359]
          %369 = vst [vmem:[%s367] sm:%s359] %v368
        $region225: #{model_forward.3} parent=219 // loop_footer
          %s365 = sadd.s32 1, %s361
        $region226: #{model_forward.3} parent=219 // loop_footer_branch
          %360 = sbr.rel target = $region222
        $region227: #{model_forward.3} parent=219 // loop_exit
          _
      $region220: #{model_forward.3} parent=204 // pred_fallthru
        _
    $region205: #{model_forward.3} parent=1 // pred_fallthru
      _
    // Predicated region
    $region206: #{model_forward.3} parent=1 // pred_check
      %p335 = pneg %p331
    $region207: #{model_forward.3} parent=1 // pred_check_branch
      %337 = sbr.rel (%p335) target = $region209
    $region208: #{model_forward.3} parent=1 // pred_region
      %s338 = sshllo.u32 0, 1
      loop: start=0, step=1, limit=1
      $region210: #{model_forward.3} parent=208 // loop_pre_header
        _
      $region211: #{model_forward.3} parent=208 // loop_header
        %s340 = sphi 0, %s344
        %p341 = scmp.ge.s32.totalorder %s340, 1
        %s345 = sphi %s327, %s327
        %s346 = sphi %s328, %s328
      $region212: #{model_forward.3} parent=208 // loop_header_branch
        %343 = sbr.rel (%p341) target = $region216
      $region213: #{model_forward.3} parent=208 // loop_body
        %v347 = vld [vmem:[%s345] sm:%s338]
        %348 = vst [vmem:[%s346] sm:%s338] %v347
      $region214: #{model_forward.3} parent=208 // loop_footer
        %s344 = sadd.s32 1, %s340
      $region215: #{model_forward.3} parent=208 // loop_footer_branch
        %339 = sbr.rel target = $region211
      $region216: #{model_forward.3} parent=208 // loop_exit
        _
    $region209: #{model_forward.3} parent=1 // pred_fallthru
      _
    // Predicated region
    $region228: #{model_forward.3} parent=1 // pred_check
      _
    $region229: #{model_forward.3} parent=1 // pred_check_branch
      %372 = sbr.rel (0) target = $region231
    $region230: #{model_forward.3} parent=1 // pred_region
      %373 = vsyncadd %s329, 16
    $region231: #{model_forward.3} parent=1 // pred_fallthru
      _
    %s374 = scalar_lea.vmem %s4, %s38
    %s375 = scalar_lea.vmem [#allocation2], 7
    %s376 = scalar_lea.sflag [#allocation3], 7
    %p378 = scmp.lt.u32.totalorder 1, 8
    %p379 = pneg %p378
    // Predicated region
    $region232: #{model_forward.3} parent=1 // pred_check
      _
    $region233: #{model_forward.3} parent=1 // pred_check_branch
      %381 = sbr.rel (%p378) target = $region235
    $region234: #{model_forward.3} parent=1 // pred_region
      %s396 = sand.u32 1, 7
      %p397 = scmp.eq.s32.totalorder %s396, 0
      %p398 = pneg %p397
      // Predicated region
      $region247: #{model_forward.3} parent=234 // pred_check
        _
      $region248: #{model_forward.3} parent=234 // pred_check_branch
        %400 = sbr.rel (%p397) target = $region250
      $region249: #{model_forward.3} parent=234 // pred_region
        %s401 = sand.u32 1, 7
        %s402 = ssub.s32 1, %s401
        %s403 = scalar_lea.vmem %s374, %s402
        %s404 = ssub.s32 1, %s401
        %s405 = scalar_lea.vmem %s375, %s404 [#allocation2]
        %s406 = sshllo.u32 0, %s401
        loop: start=0, step=1, limit=1
        $region251: #{model_forward.3} parent=249 // loop_pre_header
          _
        $region252: #{model_forward.3} parent=249 // loop_header
          %s408 = sphi 0, %s412
          %p409 = scmp.ge.s32.totalorder %s408, 1
          %s413 = sphi %s403, %s403
          %s414 = sphi %s405, %s405
        $region253: #{model_forward.3} parent=249 // loop_header_branch
          %411 = sbr.rel (%p409) target = $region257
        $region254: #{model_forward.3} parent=249 // loop_body
          %v415 = vld [vmem:[%s413] sm:%s406]
          %416 = vst [vmem:[%s414] sm:%s406] %v415
        $region255: #{model_forward.3} parent=249 // loop_footer
          %s412 = sadd.s32 1, %s408
        $region256: #{model_forward.3} parent=249 // loop_footer_branch
          %407 = sbr.rel target = $region252
        $region257: #{model_forward.3} parent=249 // loop_exit
          _
      $region250: #{model_forward.3} parent=234 // pred_fallthru
        _
    $region235: #{model_forward.3} parent=1 // pred_fallthru
      _
    // Predicated region
    $region236: #{model_forward.3} parent=1 // pred_check
      %p382 = pneg %p378
    $region237: #{model_forward.3} parent=1 // pred_check_branch
      %384 = sbr.rel (%p382) target = $region239
    $region238: #{model_forward.3} parent=1 // pred_region
      %s385 = sshllo.u32 0, 1
      loop: start=0, step=1, limit=1
      $region240: #{model_forward.3} parent=238 // loop_pre_header
        _
      $region241: #{model_forward.3} parent=238 // loop_header
        %s387 = sphi 0, %s391
        %p388 = scmp.ge.s32.totalorder %s387, 1
        %s392 = sphi %s374, %s374
        %s393 = sphi %s375, %s375
      $region242: #{model_forward.3} parent=238 // loop_header_branch
        %390 = sbr.rel (%p388) target = $region246
      $region243: #{model_forward.3} parent=238 // loop_body
        %v394 = vld [vmem:[%s392] sm:%s385]
        %395 = vst [vmem:[%s393] sm:%s385] %v394
      $region244: #{model_forward.3} parent=238 // loop_footer
        %s391 = sadd.s32 1, %s387
      $region245: #{model_forward.3} parent=238 // loop_footer_branch
        %386 = sbr.rel target = $region241
      $region246: #{model_forward.3} parent=238 // loop_exit
        _
    $region239: #{model_forward.3} parent=1 // pred_fallthru
      _
    // Predicated region
    $region258: #{model_forward.3} parent=1 // pred_check
      _
    $region259: #{model_forward.3} parent=1 // pred_check_branch
      %419 = sbr.rel (0) target = $region261
    $region260: #{model_forward.3} parent=1 // pred_region
      %420 = vsyncadd %s376, 16
    $region261: #{model_forward.3} parent=1 // pred_fallthru
      _
    %s421 = scalar_lea.vmem %s4, %s39
    %s422 = scalar_lea.vmem [#allocation2], 8
    %s423 = scalar_lea.sflag [#allocation3], 8
    %p425 = scmp.lt.u32.totalorder 1, 8
    %p426 = pneg %p425
    // Predicated region
    $region262: #{model_forward.3} parent=1 // pred_check
      _
    $region263: #{model_forward.3} parent=1 // pred_check_branch
      %428 = sbr.rel (%p425) target = $region265
    $region264: #{model_forward.3} parent=1 // pred_region
      %s443 = sand.u32 1, 7
      %p444 = scmp.eq.s32.totalorder %s443, 0
      %p445 = pneg %p444
      // Predicated region
      $region277: #{model_forward.3} parent=264 // pred_check
        _
      $region278: #{model_forward.3} parent=264 // pred_check_branch
        %447 = sbr.rel (%p444) target = $region280
      $region279: #{model_forward.3} parent=264 // pred_region
        %s448 = sand.u32 1, 7
        %s449 = ssub.s32 1, %s448
        %s450 = scalar_lea.vmem %s421, %s449
        %s451 = ssub.s32 1, %s448
        %s452 = scalar_lea.vmem %s422, %s451 [#allocation2]
        %s453 = sshllo.u32 0, %s448
        loop: start=0, step=1, limit=1
        $region281: #{model_forward.3} parent=279 // loop_pre_header
          _
        $region282: #{model_forward.3} parent=279 // loop_header
          %s455 = sphi 0, %s459
          %p456 = scmp.ge.s32.totalorder %s455, 1
          %s460 = sphi %s450, %s450
          %s461 = sphi %s452, %s452
        $region283: #{model_forward.3} parent=279 // loop_header_branch
          %458 = sbr.rel (%p456) target = $region287
        $region284: #{model_forward.3} parent=279 // loop_body
          %v462 = vld [vmem:[%s460] sm:%s453]
          %463 = vst [vmem:[%s461] sm:%s453] %v462
        $region285: #{model_forward.3} parent=279 // loop_footer
          %s459 = sadd.s32 1, %s455
        $region286: #{model_forward.3} parent=279 // loop_footer_branch
          %454 = sbr.rel target = $region282
        $region287: #{model_forward.3} parent=279 // loop_exit
          _
      $region280: #{model_forward.3} parent=264 // pred_fallthru
        _
    $region265: #{model_forward.3} parent=1 // pred_fallthru
      _
    // Predicated region
    $region266: #{model_forward.3} parent=1 // pred_check
      %p429 = pneg %p425
    $region267: #{model_forward.3} parent=1 // pred_check_branch
      %431 = sbr.rel (%p429) target = $region269
    $region268: #{model_forward.3} parent=1 // pred_region
      %s432 = sshllo.u32 0, 1
      loop: start=0, step=1, limit=1
      $region270: #{model_forward.3} parent=268 // loop_pre_header
        _
      $region271: #{model_forward.3} parent=268 // loop_header
        %s434 = sphi 0, %s438
        %p435 = scmp.ge.s32.totalorder %s434, 1
        %s439 = sphi %s421, %s421
        %s440 = sphi %s422, %s422
      $region272: #{model_forward.3} parent=268 // loop_header_branch
        %437 = sbr.rel (%p435) target = $region276
      $region273: #{model_forward.3} parent=268 // loop_body
        %v441 = vld [vmem:[%s439] sm:%s432]
        %442 = vst [vmem:[%s440] sm:%s432] %v441
      $region274: #{model_forward.3} parent=268 // loop_footer
        %s438 = sadd.s32 1, %s434
      $region275: #{model_forward.3} parent=268 // loop_footer_branch
        %433 = sbr.rel target = $region271
      $region276: #{model_forward.3} parent=268 // loop_exit
        _
    $region269: #{model_forward.3} parent=1 // pred_fallthru
      _
    // Predicated region
    $region288: #{model_forward.3} parent=1 // pred_check
      _
    $region289: #{model_forward.3} parent=1 // pred_check_branch
      %466 = sbr.rel (0) target = $region291
    $region290: #{model_forward.3} parent=1 // pred_region
      %467 = vsyncadd %s423, 16
    $region291: #{model_forward.3} parent=1 // pred_fallthru
      _
    %s468 = scalar_lea.vmem %s4, %s40
    %s469 = scalar_lea.vmem [#allocation2], 9
    %s470 = scalar_lea.sflag [#allocation3], 9
    %p472 = scmp.lt.u32.totalorder 1, 8
    %p473 = pneg %p472
    // Predicated region
    $region292: #{model_forward.3} parent=1 // pred_check
      _
    $region293: #{model_forward.3} parent=1 // pred_check_branch
      %475 = sbr.rel (%p472) target = $region295
    $region294: #{model_forward.3} parent=1 // pred_region
      %s490 = sand.u32 1, 7
      %p491 = scmp.eq.s32.totalorder %s490, 0
      %p492 = pneg %p491
      // Predicated region
      $region307: #{model_forward.3} parent=294 // pred_check
        _
      $region308: #{model_forward.3} parent=294 // pred_check_branch
        %494 = sbr.rel (%p491) target = $region310
      $region309: #{model_forward.3} parent=294 // pred_region
        %s495 = sand.u32 1, 7
        %s496 = ssub.s32 1, %s495
        %s497 = scalar_lea.vmem %s468, %s496
        %s498 = ssub.s32 1, %s495
        %s499 = scalar_lea.vmem %s469, %s498 [#allocation2]
        %s500 = sshllo.u32 0, %s495
        loop: start=0, step=1, limit=1
        $region311: #{model_forward.3} parent=309 // loop_pre_header
          _
        $region312: #{model_forward.3} parent=309 // loop_header
          %s502 = sphi 0, %s506
          %p503 = scmp.ge.s32.totalorder %s502, 1
          %s507 = sphi %s497, %s497
          %s508 = sphi %s499, %s499
        $region313: #{model_forward.3} parent=309 // loop_header_branch
          %505 = sbr.rel (%p503) target = $region317
        $region314: #{model_forward.3} parent=309 // loop_body
          %v509 = vld [vmem:[%s507] sm:%s500]
          %510 = vst [vmem:[%s508] sm:%s500] %v509
        $region315: #{model_forward.3} parent=309 // loop_footer
          %s506 = sadd.s32 1, %s502
        $region316: #{model_forward.3} parent=309 // loop_footer_branch
          %501 = sbr.rel target = $region312
        $region317: #{model_forward.3} parent=309 // loop_exit
          _
      $region310: #{model_forward.3} parent=294 // pred_fallthru
        _
    $region295: #{model_forward.3} parent=1 // pred_fallthru
      _
    // Predicated region
    $region296: #{model_forward.3} parent=1 // pred_check
      %p476 = pneg %p472
    $region297: #{model_forward.3} parent=1 // pred_check_branch
      %478 = sbr.rel (%p476) target = $region299
    $region298: #{model_forward.3} parent=1 // pred_region
      %s479 = sshllo.u32 0, 1
      loop: start=0, step=1, limit=1
      $region300: #{model_forward.3} parent=298 // loop_pre_header
        _
      $region301: #{model_forward.3} parent=298 // loop_header
        %s481 = sphi 0, %s485
        %p482 = scmp.ge.s32.totalorder %s481, 1
        %s486 = sphi %s468, %s468
        %s487 = sphi %s469, %s469
      $region302: #{model_forward.3} parent=298 // loop_header_branch
        %484 = sbr.rel (%p482) target = $region306
      $region303: #{model_forward.3} parent=298 // loop_body
        %v488 = vld [vmem:[%s486] sm:%s479]
        %489 = vst [vmem:[%s487] sm:%s479] %v488
      $region304: #{model_forward.3} parent=298 // loop_footer
        %s485 = sadd.s32 1, %s481
      $region305: #{model_forward.3} parent=298 // loop_footer_branch
        %480 = sbr.rel target = $region301
      $region306: #{model_forward.3} parent=298 // loop_exit
        _
    $region299: #{model_forward.3} parent=1 // pred_fallthru
      _
    // Predicated region
    $region318: #{model_forward.3} parent=1 // pred_check
      _
    $region319: #{model_forward.3} parent=1 // pred_check_branch
      %513 = sbr.rel (0) target = $region321
    $region320: #{model_forward.3} parent=1 // pred_region
      %514 = vsyncadd %s470, 16
    $region321: #{model_forward.3} parent=1 // pred_fallthru
      _
    %s515 = scalar_lea.vmem %s4, %s41
    %s516 = scalar_lea.vmem [#allocation2], 10
    %s517 = scalar_lea.sflag [#allocation3], 10
    %p519 = scmp.lt.u32.totalorder 1, 8
    %p520 = pneg %p519
    // Predicated region
    $region322: #{model_forward.3} parent=1 // pred_check
      _
    $region323: #{model_forward.3} parent=1 // pred_check_branch
      %522 = sbr.rel (%p519) target = $region325
    $region324: #{model_forward.3} parent=1 // pred_region
      %s537 = sand.u32 1, 7
      %p538 = scmp.eq.s32.totalorder %s537, 0
      %p539 = pneg %p538
      // Predicated region
      $region337: #{model_forward.3} parent=324 // pred_check
        _
      $region338: #{model_forward.3} parent=324 // pred_check_branch
        %541 = sbr.rel (%p538) target = $region340
      $region339: #{model_forward.3} parent=324 // pred_region
        %s542 = sand.u32 1, 7
        %s543 = ssub.s32 1, %s542
        %s544 = scalar_lea.vmem %s515, %s543
        %s545 = ssub.s32 1, %s542
        %s546 = scalar_lea.vmem %s516, %s545 [#allocation2]
        %s547 = sshllo.u32 0, %s542
        loop: start=0, step=1, limit=1
        $region341: #{model_forward.3} parent=339 // loop_pre_header
          _
        $region342: #{model_forward.3} parent=339 // loop_header
          %s549 = sphi 0, %s553
          %p550 = scmp.ge.s32.totalorder %s549, 1
          %s554 = sphi %s544, %s544
          %s555 = sphi %s546, %s546
        $region343: #{model_forward.3} parent=339 // loop_header_branch
          %552 = sbr.rel (%p550) target = $region347
        $region344: #{model_forward.3} parent=339 // loop_body
          %v556 = vld [vmem:[%s554] sm:%s547]
          %557 = vst [vmem:[%s555] sm:%s547] %v556
        $region345: #{model_forward.3} parent=339 // loop_footer
          %s553 = sadd.s32 1, %s549
        $region346: #{model_forward.3} parent=339 // loop_footer_branch
          %548 = sbr.rel target = $region342
        $region347: #{model_forward.3} parent=339 // loop_exit
          _
      $region340: #{model_forward.3} parent=324 // pred_fallthru
        _
    $region325: #{model_forward.3} parent=1 // pred_fallthru
      _
    // Predicated region
    $region326: #{model_forward.3} parent=1 // pred_check
      %p523 = pneg %p519
    $region327: #{model_forward.3} parent=1 // pred_check_branch
      %525 = sbr.rel (%p523) target = $region329
    $region328: #{model_forward.3} parent=1 // pred_region
      %s526 = sshllo.u32 0, 1
      loop: start=0, step=1, limit=1
      $region330: #{model_forward.3} parent=328 // loop_pre_header
        _
      $region331: #{model_forward.3} parent=328 // loop_header
        %s528 = sphi 0, %s532
        %p529 = scmp.ge.s32.totalorder %s528, 1
        %s533 = sphi %s515, %s515
        %s534 = sphi %s516, %s516
      $region332: #{model_forward.3} parent=328 // loop_header_branch
        %531 = sbr.rel (%p529) target = $region336
      $region333: #{model_forward.3} parent=328 // loop_body
        %v535 = vld [vmem:[%s533] sm:%s526]
        %536 = vst [vmem:[%s534] sm:%s526] %v535
      $region334: #{model_forward.3} parent=328 // loop_footer
        %s532 = sadd.s32 1, %s528
      $region335: #{model_forward.3} parent=328 // loop_footer_branch
        %527 = sbr.rel target = $region331
      $region336: #{model_forward.3} parent=328 // loop_exit
        _
    $region329: #{model_forward.3} parent=1 // pred_fallthru
      _
    // Predicated region
    $region348: #{model_forward.3} parent=1 // pred_check
      _
    $region349: #{model_forward.3} parent=1 // pred_check_branch
      %560 = sbr.rel (0) target = $region351
    $region350: #{model_forward.3} parent=1 // pred_region
      %561 = vsyncadd %s517, 16
    $region351: #{model_forward.3} parent=1 // pred_fallthru
      _
    %s562 = scalar_lea.vmem %s4, %s42
    %s563 = scalar_lea.vmem [#allocation2], 11
    %s564 = scalar_lea.sflag [#allocation3], 11
    %p566 = scmp.lt.u32.totalorder 1, 8
    %p567 = pneg %p566
    // Predicated region
    $region352: #{model_forward.3} parent=1 // pred_check
      _
    $region353: #{model_forward.3} parent=1 // pred_check_branch
      %569 = sbr.rel (%p566) target = $region355
    $region354: #{model_forward.3} parent=1 // pred_region
      %s584 = sand.u32 1, 7
      %p585 = scmp.eq.s32.totalorder %s584, 0
      %p586 = pneg %p585
      // Predicated region
      $region367: #{model_forward.3} parent=354 // pred_check
        _
      $region368: #{model_forward.3} parent=354 // pred_check_branch
        %588 = sbr.rel (%p585) target = $region370
      $region369: #{model_forward.3} parent=354 // pred_region
        %s589 = sand.u32 1, 7
        %s590 = ssub.s32 1, %s589
        %s591 = scalar_lea.vmem %s562, %s590
        %s592 = ssub.s32 1, %s589
        %s593 = scalar_lea.vmem %s563, %s592 [#allocation2]
        %s594 = sshllo.u32 0, %s589
        loop: start=0, step=1, limit=1
        $region371: #{model_forward.3} parent=369 // loop_pre_header
          _
        $region372: #{model_forward.3} parent=369 // loop_header
          %s596 = sphi 0, %s600
          %p597 = scmp.ge.s32.totalorder %s596, 1
          %s601 = sphi %s591, %s591
          %s602 = sphi %s593, %s593
        $region373: #{model_forward.3} parent=369 // loop_header_branch
          %599 = sbr.rel (%p597) target = $region377
        $region374: #{model_forward.3} parent=369 // loop_body
          %v603 = vld [vmem:[%s601] sm:%s594]
          %604 = vst [vmem:[%s602] sm:%s594] %v603
        $region375: #{model_forward.3} parent=369 // loop_footer
          %s600 = sadd.s32 1, %s596
        $region376: #{model_forward.3} parent=369 // loop_footer_branch
          %595 = sbr.rel target = $region372
        $region377: #{model_forward.3} parent=369 // loop_exit
          _
      $region370: #{model_forward.3} parent=354 // pred_fallthru
        _
    $region355: #{model_forward.3} parent=1 // pred_fallthru
      _
    // Predicated region
    $region356: #{model_forward.3} parent=1 // pred_check
      %p570 = pneg %p566
    $region357: #{model_forward.3} parent=1 // pred_check_branch
      %572 = sbr.rel (%p570) target = $region359
    $region358: #{model_forward.3} parent=1 // pred_region
      %s573 = sshllo.u32 0, 1
      loop: start=0, step=1, limit=1
      $region360: #{model_forward.3} parent=358 // loop_pre_header
        _
      $region361: #{model_forward.3} parent=358 // loop_header
        %s575 = sphi 0, %s579
        %p576 = scmp.ge.s32.totalorder %s575, 1
        %s580 = sphi %s562, %s562
        %s581 = sphi %s563, %s563
      $region362: #{model_forward.3} parent=358 // loop_header_branch
        %578 = sbr.rel (%p576) target = $region366
      $region363: #{model_forward.3} parent=358 // loop_body
        %v582 = vld [vmem:[%s580] sm:%s573]
        %583 = vst [vmem:[%s581] sm:%s573] %v582
      $region364: #{model_forward.3} parent=358 // loop_footer
        %s579 = sadd.s32 1, %s575
      $region365: #{model_forward.3} parent=358 // loop_footer_branch
        %574 = sbr.rel target = $region361
      $region366: #{model_forward.3} parent=358 // loop_exit
        _
    $region359: #{model_forward.3} parent=1 // pred_fallthru
      _
    // Predicated region
    $region378: #{model_forward.3} parent=1 // pred_check
      _
    $region379: #{model_forward.3} parent=1 // pred_check_branch
      %607 = sbr.rel (0) target = $region381
    $region380: #{model_forward.3} parent=1 // pred_region
      %608 = vsyncadd %s564, 16
    $region381: #{model_forward.3} parent=1 // pred_fallthru
      _
    %s609 = scalar_lea.vmem %s4, %s43
    %s610 = scalar_lea.vmem [#allocation2], 12
    %s611 = scalar_lea.sflag [#allocation3], 12
    %p613 = scmp.lt.u32.totalorder 1, 8
    %p614 = pneg %p613
    // Predicated region
    $region382: #{model_forward.3} parent=1 // pred_check
      _
    $region383: #{model_forward.3} parent=1 // pred_check_branch
      %616 = sbr.rel (%p613) target = $region385
    $region384: #{model_forward.3} parent=1 // pred_region
      %s631 = sand.u32 1, 7
      %p632 = scmp.eq.s32.totalorder %s631, 0
      %p633 = pneg %p632
      // Predicated region
      $region397: #{model_forward.3} parent=384 // pred_check
        _
      $region398: #{model_forward.3} parent=384 // pred_check_branch
        %635 = sbr.rel (%p632) target = $region400
      $region399: #{model_forward.3} parent=384 // pred_region
        %s636 = sand.u32 1, 7
        %s637 = ssub.s32 1, %s636
        %s638 = scalar_lea.vmem %s609, %s637
        %s639 = ssub.s32 1, %s636
        %s640 = scalar_lea.vmem %s610, %s639 [#allocation2]
        %s641 = sshllo.u32 0, %s636
        loop: start=0, step=1, limit=1
        $region401: #{model_forward.3} parent=399 // loop_pre_header
          _
        $region402: #{model_forward.3} parent=399 // loop_header
          %s643 = sphi 0, %s647
          %p644 = scmp.ge.s32.totalorder %s643, 1
          %s648 = sphi %s638, %s638
          %s649 = sphi %s640, %s640
        $region403: #{model_forward.3} parent=399 // loop_header_branch
          %646 = sbr.rel (%p644) target = $region407
        $region404: #{model_forward.3} parent=399 // loop_body
          %v650 = vld [vmem:[%s648] sm:%s641]
          %651 = vst [vmem:[%s649] sm:%s641] %v650
        $region405: #{model_forward.3} parent=399 // loop_footer
          %s647 = sadd.s32 1, %s643
        $region406: #{model_forward.3} parent=399 // loop_footer_branch
          %642 = sbr.rel target = $region402
        $region407: #{model_forward.3} parent=399 // loop_exit
          _
      $region400: #{model_forward.3} parent=384 // pred_fallthru
        _
    $region385: #{model_forward.3} parent=1 // pred_fallthru
      _
    // Predicated region
    $region386: #{model_forward.3} parent=1 // pred_check
      %p617 = pneg %p613
    $region387: #{model_forward.3} parent=1 // pred_check_branch
      %619 = sbr.rel (%p617) target = $region389
    $region388: #{model_forward.3} parent=1 // pred_region
      %s620 = sshllo.u32 0, 1
      loop: start=0, step=1, limit=1
      $region390: #{model_forward.3} parent=388 // loop_pre_header
        _
      $region391: #{model_forward.3} parent=388 // loop_header
        %s622 = sphi 0, %s626
        %p623 = scmp.ge.s32.totalorder %s622, 1
        %s627 = sphi %s609, %s609
        %s628 = sphi %s610, %s610
      $region392: #{model_forward.3} parent=388 // loop_header_branch
        %625 = sbr.rel (%p623) target = $region396
      $region393: #{model_forward.3} parent=388 // loop_body
        %v629 = vld [vmem:[%s627] sm:%s620]
        %630 = vst [vmem:[%s628] sm:%s620] %v629
      $region394: #{model_forward.3} parent=388 // loop_footer
        %s626 = sadd.s32 1, %s622
      $region395: #{model_forward.3} parent=388 // loop_footer_branch
        %621 = sbr.rel target = $region391
      $region396: #{model_forward.3} parent=388 // loop_exit
        _
    $region389: #{model_forward.3} parent=1 // pred_fallthru
      _
    // Predicated region
    $region408: #{model_forward.3} parent=1 // pred_check
      _
    $region409: #{model_forward.3} parent=1 // pred_check_branch
      %654 = sbr.rel (0) target = $region411
    $region410: #{model_forward.3} parent=1 // pred_region
      %655 = vsyncadd %s611, 16
    $region411: #{model_forward.3} parent=1 // pred_fallthru
      _
    %s656 = scalar_lea.vmem %s4, %s44
    %s657 = scalar_lea.vmem [#allocation2], 13
    %s658 = scalar_lea.sflag [#allocation3], 13
    %p660 = scmp.lt.u32.totalorder 1, 8
    %p661 = pneg %p660
    // Predicated region
    $region412: #{model_forward.3} parent=1 // pred_check
      _
    $region413: #{model_forward.3} parent=1 // pred_check_branch
      %663 = sbr.rel (%p660) target = $region415
    $region414: #{model_forward.3} parent=1 // pred_region
      %s678 = sand.u32 1, 7
      %p679 = scmp.eq.s32.totalorder %s678, 0
      %p680 = pneg %p679
      // Predicated region
      $region427: #{model_forward.3} parent=414 // pred_check
        _
      $region428: #{model_forward.3} parent=414 // pred_check_branch
        %682 = sbr.rel (%p679) target = $region430
      $region429: #{model_forward.3} parent=414 // pred_region
        %s683 = sand.u32 1, 7
        %s684 = ssub.s32 1, %s683
        %s685 = scalar_lea.vmem %s656, %s684
        %s686 = ssub.s32 1, %s683
        %s687 = scalar_lea.vmem %s657, %s686 [#allocation2]
        %s688 = sshllo.u32 0, %s683
        loop: start=0, step=1, limit=1
        $region431: #{model_forward.3} parent=429 // loop_pre_header
          _
        $region432: #{model_forward.3} parent=429 // loop_header
          %s690 = sphi 0, %s694
          %p691 = scmp.ge.s32.totalorder %s690, 1
          %s695 = sphi %s685, %s685
          %s696 = sphi %s687, %s687
        $region433: #{model_forward.3} parent=429 // loop_header_branch
          %693 = sbr.rel (%p691) target = $region437
        $region434: #{model_forward.3} parent=429 // loop_body
          %v697 = vld [vmem:[%s695] sm:%s688]
          %698 = vst [vmem:[%s696] sm:%s688] %v697
        $region435: #{model_forward.3} parent=429 // loop_footer
          %s694 = sadd.s32 1, %s690
        $region436: #{model_forward.3} parent=429 // loop_footer_branch
          %689 = sbr.rel target = $region432
        $region437: #{model_forward.3} parent=429 // loop_exit
          _
      $region430: #{model_forward.3} parent=414 // pred_fallthru
        _
    $region415: #{model_forward.3} parent=1 // pred_fallthru
      _
    // Predicated region
    $region416: #{model_forward.3} parent=1 // pred_check
      %p664 = pneg %p660
    $region417: #{model_forward.3} parent=1 // pred_check_branch
      %666 = sbr.rel (%p664) target = $region419
    $region418: #{model_forward.3} parent=1 // pred_region
      %s667 = sshllo.u32 0, 1
      loop: start=0, step=1, limit=1
      $region420: #{model_forward.3} parent=418 // loop_pre_header
        _
      $region421: #{model_forward.3} parent=418 // loop_header
        %s669 = sphi 0, %s673
        %p670 = scmp.ge.s32.totalorder %s669, 1
        %s674 = sphi %s656, %s656
        %s675 = sphi %s657, %s657
      $region422: #{model_forward.3} parent=418 // loop_header_branch
        %672 = sbr.rel (%p670) target = $region426
      $region423: #{model_forward.3} parent=418 // loop_body
        %v676 = vld [vmem:[%s674] sm:%s667]
        %677 = vst [vmem:[%s675] sm:%s667] %v676
      $region424: #{model_forward.3} parent=418 // loop_footer
        %s673 = sadd.s32 1, %s669
      $region425: #{model_forward.3} parent=418 // loop_footer_branch
        %668 = sbr.rel target = $region421
      $region426: #{model_forward.3} parent=418 // loop_exit
        _
    $region419: #{model_forward.3} parent=1 // pred_fallthru
      _
    // Predicated region
    $region438: #{model_forward.3} parent=1 // pred_check
      _
    $region439: #{model_forward.3} parent=1 // pred_check_branch
      %701 = sbr.rel (0) target = $region441
    $region440: #{model_forward.3} parent=1 // pred_region
      %702 = vsyncadd %s658, 16
    $region441: #{model_forward.3} parent=1 // pred_fallthru
      _
    %s703 = scalar_lea.vmem %s4, %s45
    %s704 = scalar_lea.vmem [#allocation2], 14
    %s705 = scalar_lea.sflag [#allocation3], 14
    %p707 = scmp.lt.u32.totalorder 1, 8
    %p708 = pneg %p707
    // Predicated region
    $region442: #{model_forward.3} parent=1 // pred_check
      _
    $region443: #{model_forward.3} parent=1 // pred_check_branch
      %710 = sbr.rel (%p707) target = $region445
    $region444: #{model_forward.3} parent=1 // pred_region
      %s725 = sand.u32 1, 7
      %p726 = scmp.eq.s32.totalorder %s725, 0
      %p727 = pneg %p726
      // Predicated region
      $region457: #{model_forward.3} parent=444 // pred_check
        _
      $region458: #{model_forward.3} parent=444 // pred_check_branch
        %729 = sbr.rel (%p726) target = $region460
      $region459: #{model_forward.3} parent=444 // pred_region
        %s730 = sand.u32 1, 7
        %s731 = ssub.s32 1, %s730
        %s732 = scalar_lea.vmem %s703, %s731
        %s733 = ssub.s32 1, %s730
        %s734 = scalar_lea.vmem %s704, %s733 [#allocation2]
        %s735 = sshllo.u32 0, %s730
        loop: start=0, step=1, limit=1
        $region461: #{model_forward.3} parent=459 // loop_pre_header
          _
        $region462: #{model_forward.3} parent=459 // loop_header
          %s737 = sphi 0, %s741
          %p738 = scmp.ge.s32.totalorder %s737, 1
          %s742 = sphi %s732, %s732
          %s743 = sphi %s734, %s734
        $region463: #{model_forward.3} parent=459 // loop_header_branch
          %740 = sbr.rel (%p738) target = $region467
        $region464: #{model_forward.3} parent=459 // loop_body
          %v744 = vld [vmem:[%s742] sm:%s735]
          %745 = vst [vmem:[%s743] sm:%s735] %v744
        $region465: #{model_forward.3} parent=459 // loop_footer
          %s741 = sadd.s32 1, %s737
        $region466: #{model_forward.3} parent=459 // loop_footer_branch
          %736 = sbr.rel target = $region462
        $region467: #{model_forward.3} parent=459 // loop_exit
          _
      $region460: #{model_forward.3} parent=444 // pred_fallthru
        _
    $region445: #{model_forward.3} parent=1 // pred_fallthru
      _
    // Predicated region
    $region446: #{model_forward.3} parent=1 // pred_check
      %p711 = pneg %p707
    $region447: #{model_forward.3} parent=1 // pred_check_branch
      %713 = sbr.rel (%p711) target = $region449
    $region448: #{model_forward.3} parent=1 // pred_region
      %s714 = sshllo.u32 0, 1
      loop: start=0, step=1, limit=1
      $region450: #{model_forward.3} parent=448 // loop_pre_header
        _
      $region451: #{model_forward.3} parent=448 // loop_header
        %s716 = sphi 0, %s720
        %p717 = scmp.ge.s32.totalorder %s716, 1
        %s721 = sphi %s703, %s703
        %s722 = sphi %s704, %s704
      $region452: #{model_forward.3} parent=448 // loop_header_branch
        %719 = sbr.rel (%p717) target = $region456
      $region453: #{model_forward.3} parent=448 // loop_body
        %v723 = vld [vmem:[%s721] sm:%s714]
        %724 = vst [vmem:[%s722] sm:%s714] %v723
      $region454: #{model_forward.3} parent=448 // loop_footer
        %s720 = sadd.s32 1, %s716
      $region455: #{model_forward.3} parent=448 // loop_footer_branch
        %715 = sbr.rel target = $region451
      $region456: #{model_forward.3} parent=448 // loop_exit
        _
    $region449: #{model_forward.3} parent=1 // pred_fallthru
      _
    // Predicated region
    $region468: #{model_forward.3} parent=1 // pred_check
      _
    $region469: #{model_forward.3} parent=1 // pred_check_branch
      %748 = sbr.rel (0) target = $region471
    $region470: #{model_forward.3} parent=1 // pred_region
      %749 = vsyncadd %s705, 16
    $region471: #{model_forward.3} parent=1 // pred_fallthru
      _
    %s750 = scalar_lea.vmem %s4, %s46
    %s751 = scalar_lea.vmem [#allocation2], 15
    %s752 = scalar_lea.sflag [#allocation3], 15
    %p754 = scmp.lt.u32.totalorder 1, 8
    %p755 = pneg %p754
    // Predicated region
    $region472: #{model_forward.3} parent=1 // pred_check
      _
    $region473: #{model_forward.3} parent=1 // pred_check_branch
      %757 = sbr.rel (%p754) target = $region475
    $region474: #{model_forward.3} parent=1 // pred_region
      %s772 = sand.u32 1, 7
      %p773 = scmp.eq.s32.totalorder %s772, 0
      %p774 = pneg %p773
      // Predicated region
      $region487: #{model_forward.3} parent=474 // pred_check
        _
      $region488: #{model_forward.3} parent=474 // pred_check_branch
        %776 = sbr.rel (%p773) target = $region490
      $region489: #{model_forward.3} parent=474 // pred_region
        %s777 = sand.u32 1, 7
        %s778 = ssub.s32 1, %s777
        %s779 = scalar_lea.vmem %s750, %s778
        %s780 = ssub.s32 1, %s777
        %s781 = scalar_lea.vmem %s751, %s780 [#allocation2]
        %s782 = sshllo.u32 0, %s777
        loop: start=0, step=1, limit=1
        $region491: #{model_forward.3} parent=489 // loop_pre_header
          _
        $region492: #{model_forward.3} parent=489 // loop_header
          %s784 = sphi 0, %s788
          %p785 = scmp.ge.s32.totalorder %s784, 1
          %s789 = sphi %s779, %s779
          %s790 = sphi %s781, %s781
        $region493: #{model_forward.3} parent=489 // loop_header_branch
          %787 = sbr.rel (%p785) target = $region497
        $region494: #{model_forward.3} parent=489 // loop_body
          %v791 = vld [vmem:[%s789] sm:%s782]
          %792 = vst [vmem:[%s790] sm:%s782] %v791
        $region495: #{model_forward.3} parent=489 // loop_footer
          %s788 = sadd.s32 1, %s784
        $region496: #{model_forward.3} parent=489 // loop_footer_branch
          %783 = sbr.rel target = $region492
        $region497: #{model_forward.3} parent=489 // loop_exit
          _
      $region490: #{model_forward.3} parent=474 // pred_fallthru
        _
    $region475: #{model_forward.3} parent=1 // pred_fallthru
      _
    // Predicated region
    $region476: #{model_forward.3} parent=1 // pred_check
      %p758 = pneg %p754
    $region477: #{model_forward.3} parent=1 // pred_check_branch
      %760 = sbr.rel (%p758) target = $region479
    $region478: #{model_forward.3} parent=1 // pred_region
      %s761 = sshllo.u32 0, 1
      loop: start=0, step=1, limit=1
      $region480: #{model_forward.3} parent=478 // loop_pre_header
        _
      $region481: #{model_forward.3} parent=478 // loop_header
        %s763 = sphi 0, %s767
        %p764 = scmp.ge.s32.totalorder %s763, 1
        %s768 = sphi %s750, %s750
        %s769 = sphi %s751, %s751
      $region482: #{model_forward.3} parent=478 // loop_header_branch
        %766 = sbr.rel (%p764) target = $region486
      $region483: #{model_forward.3} parent=478 // loop_body
        %v770 = vld [vmem:[%s768] sm:%s761]
        %771 = vst [vmem:[%s769] sm:%s761] %v770
      $region484: #{model_forward.3} parent=478 // loop_footer
        %s767 = sadd.s32 1, %s763
      $region485: #{model_forward.3} parent=478 // loop_footer_branch
        %762 = sbr.rel target = $region481
      $region486: #{model_forward.3} parent=478 // loop_exit
        _
    $region479: #{model_forward.3} parent=1 // pred_fallthru
      _
    // Predicated region
    $region498: #{model_forward.3} parent=1 // pred_check
      _
    $region499: #{model_forward.3} parent=1 // pred_check_branch
      %795 = sbr.rel (0) target = $region501
    $region500: #{model_forward.3} parent=1 // pred_region
      %796 = vsyncadd %s752, 16
    $region501: #{model_forward.3} parent=1 // pred_fallthru
      _
    %s797 = smul.u32 1, 1
    %s798 = sshll.u32 %s797, 4
    %799 = dma.done [#allocation3], %s798
    %s800 = sshll.u32 %s797, 4
    %801 = dma.done %s94, %s800
    %s802 = sshll.u32 %s797, 4
    %803 = dma.done %s141, %s802
    %s804 = sshll.u32 %s797, 4
    %805 = dma.done %s188, %s804
    %s806 = sshll.u32 %s797, 4
    %807 = dma.done %s235, %s806
    %s808 = sshll.u32 %s797, 4
    %809 = dma.done %s282, %s808
    %s810 = sshll.u32 %s797, 4
    %811 = dma.done %s329, %s810
    %s812 = sshll.u32 %s797, 4
    %813 = dma.done %s376, %s812
    %s814 = sshll.u32 %s797, 4
    %815 = dma.done %s423, %s814
    %s816 = sshll.u32 %s797, 4
    %817 = dma.done %s470, %s816
    %s818 = sshll.u32 %s797, 4
    %819 = dma.done %s517, %s818
    %s820 = sshll.u32 %s797, 4
    %821 = dma.done %s564, %s820
    %s822 = sshll.u32 %s797, 4
    %823 = dma.done %s611, %s822
    %s824 = sshll.u32 %s797, 4
    %825 = dma.done %s658, %s824
    %s826 = sshll.u32 %s797, 4
    %827 = dma.done %s705, %s826
    %s828 = sshll.u32 %s797, 4
    %829 = dma.done %s752, %s828
    %v830 = vld [vmem:[#allocation2] sm:$0xff]
    %v831 = vld [vmem:[#allocation2 + $0x8] sm:$0xff]
    %v832 = vld [vmem:[%s2] sm:$0xff]
    %v833 = vld [vmem:[%s2 + $0x8] sm:$0xff]
    %v834 = vld [vmem:[%s2 + $0x10] sm:$0xff]
    %v835 = vld [vmem:[%s2 + $0x18] sm:$0xff]
    %v836 = vld [vmem:[%s2 + $0x20] sm:$0xff]
    %v837 = vld [vmem:[%s2 + $0x28] sm:$0xff]
    %v838 = vld [vmem:[%s2 + $0x30] sm:$0xff]
    %v839 = vld [vmem:[%s2 + $0x38] sm:$0xff]
    %v840 = vld [vmem:[%s2 + $0x40] sm:$0xff]
    %v841 = vld [vmem:[%s2 + $0x48] sm:$0xff]
    %v842 = vld [vmem:[%s2 + $0x50] sm:$0xff]
    %v843 = vld [vmem:[%s2 + $0x58] sm:$0xff]
    %v844 = vld [vmem:[%s2 + $0x60] sm:$0xff]
    %v845 = vld [vmem:[%s2 + $0x68] sm:$0xff]
    %v846 = vld [vmem:[%s2 + $0x70] sm:$0xff]
    %v847 = vld [vmem:[%s2 + $0x78] sm:$0xff]
    %v848 = vld [vmem:[%s3] sm:$0x1]
    %v850 = vlaneseq
    %v851 = vshrl.u32 %v850, 7
    %v852 = vsub.s32 0, %v851
    %v853 = vrot.slane %v848, %v852
    %855 = vmatprep.subr.mxu0 0.0
    %856 = vmatpush1.msra.mxu0 %v832
    %857 = vmatprep.subr.mxu0 0.0
    %858 = vmatpush1.msra.mxu0 %v833
    %859 = vmatprep.subr.mxu0 0.0
    %860 = vmatpush1.msra.mxu0 %v834
    %861 = vmatprep.subr.mxu0 0.0
    %862 = vmatpush1.msra.mxu0 %v835
    %863 = vmatprep.subr.mxu0 0.0
    %864 = vmatpush1.msra.mxu0 %v836
    %865 = vmatprep.subr.mxu0 0.0
    %866 = vmatpush1.msra.mxu0 %v837
    %867 = vmatprep.subr.mxu0 0.0
    %868 = vmatpush1.msra.mxu0 %v838
    %869 = vmatprep.subr.mxu0 0.0
    %870 = vmatpush1.msra.mxu0 %v839
    %871 = vmatprep.subr.mxu0 0.0
    %872 = vmatpush1.msra.mxu0 %v840
    %873 = vmatprep.subr.mxu0 0.0
    %874 = vmatpush1.msra.mxu0 %v841
    %875 = vmatprep.subr.mxu0 0.0
    %876 = vmatpush1.msra.mxu0 %v842
    %877 = vmatprep.subr.mxu0 0.0
    %878 = vmatpush1.msra.mxu0 %v843
    %879 = vmatprep.subr.mxu0 0.0
    %880 = vmatpush1.msra.mxu0 %v844
    %881 = vmatprep.subr.mxu0 0.0
    %882 = vmatpush1.msra.mxu0 %v845
    %883 = vmatprep.subr.mxu0 0.0
    %884 = vmatpush1.msra.mxu0 %v846
    %885 = vmatprep.subr.mxu0 0.0
    %886 = vmatpush1.msra.mxu0 %v847
    %887 = vmatprep.subr.mxu0 0.0
    %888 = vmatpush1.msra.mxu0 0.0
    %889 = vmatprep.subr.mxu0 0.0
    %890 = vmatpush1.msra.mxu0 0.0
    %891 = vmatprep.subr.mxu0 0.0
    %892 = vmatpush1.msra.mxu0 0.0
    %893 = vmatprep.subr.mxu0 0.0
    %894 = vmatpush1.msra.mxu0 0.0
    %895 = vmatprep.subr.mxu0 0.0
    %896 = vmatpush1.msra.mxu0 0.0
    %897 = vmatprep.subr.mxu0 0.0
    %898 = vmatpush1.msra.mxu0 0.0
    %899 = vmatprep.subr.mxu0 0.0
    %900 = vmatpush1.msra.mxu0 0.0
    %901 = vmatprep.subr.mxu0 0.0
    %902 = vmatpush1.msra.mxu0 0.0
    %903 = vmatprep.subr.mxu0 0.0
    %904 = vmatpush1.msra.mxu0 0.0
    %905 = vmatprep.subr.mxu0 0.0
    %906 = vmatpush1.msra.mxu0 0.0
    %907 = vmatprep.subr.mxu0 0.0
    %908 = vmatpush1.msra.mxu0 0.0
    %909 = vmatprep.subr.mxu0 0.0
    %910 = vmatpush1.msra.mxu0 0.0
    %911 = vmatprep.subr.mxu0 0.0
    %912 = vmatpush1.msra.mxu0 0.0
    %913 = vmatprep.subr.mxu0 0.0
    %914 = vmatpush1.msra.mxu0 0.0
    %915 = vmatprep.subr.mxu0 0.0
    %916 = vmatpush1.msra.mxu0 0.0
    %917 = vmatprep.subr.mxu0 0.0
    %918 = vmatpush1.msra.mxu0 0.0
    %919 = vmatprep.mubr.f32.mxu0 0.0
    %920 = vmatmul.mubr.f32.gmra.mrb[0].mxu0 %v830
    %v921 = vpop.f32.mrb[0].mxu0
    %v922 = vadd.f32 %v853, %v921
    %v923 = vpop.f32.mrb[0].mxu0
    %924 = vmatprep.mubr.f32.mxu0 0.0
    %925 = vmatmul.mubr.f32.gmra.mrb[0].mxu0 %v831
    %v926 = vpop.f32.mrb[0].mxu0
    %v927 = vadd.f32 %v853, %v926
    %v928 = vpop.f32.mrb[0].mxu0
    %929 = vdwg.mxu0
    %v930 = vld [vmem:[%s1] sm:$0xff]
    %v931 = vld [vmem:[%s1 + $0x8] sm:$0xff]
    %v932 = vadd.f32 %v930, %v922
    %v933 = vadd.f32 %v931, %v927
    %vm934 = vcmask 15360
    %935 = vst.msk [vmem:[%s5] sm:$0xff] %vm934, %v932
    %936 = vst.msk [vmem:[%s5 + $0x8] sm:$0xff] %vm934, %v933
    // Predicated region
    $region502: #{model_forward.3} parent=1 // pred_check
      _
    $region503: #{model_forward.3} parent=1 // pred_check_branch
      %938 = sbr.rel (0) target = $region505
    $region504: #{model_forward.3} parent=1 // pred_region
      _
    $region505: #{model_forward.3} parent=1 // pred_fallthru
      _
    // Predicated region
    $region506: #{model_forward.3} parent=1 // pred_check
      _
    $region507: #{model_forward.3} parent=1 // pred_check_branch
      %940 = sbr.rel (0) target = $region509
    $region508: #{model_forward.3} parent=1 // pred_region
      _
    $region509: #{model_forward.3} parent=1 // pred_fallthru
      _
    %941 = vsyncpa [#allocation5], 1
  %942 = vsyncmov [#allocation3]
  %s943 = vpop.sfrf %942
  %p944 = scmp.eq.s32.totalorder %s943, 0
  %p945 = pneg %p944
  %947 = shalt.err (%p945)
  %s948 = scalar_lea.sflag [#allocation3], 1
  %949 = vsyncmov %s948
  %s950 = vpop.sfrf %949
  %p951 = scmp.eq.s32.totalorder %s950, 0
  %p952 = pneg %p951
  %954 = shalt.err (%p952)
  %s955 = scalar_lea.sflag [#allocation3], 2
  %956 = vsyncmov %s955
  %s957 = vpop.sfrf %956
  %p958 = scmp.eq.s32.totalorder %s957, 0
  %p959 = pneg %p958
  %961 = shalt.err (%p959)
  %s962 = scalar_lea.sflag [#allocation3], 3
  %963 = vsyncmov %s962
  %s964 = vpop.sfrf %963
  %p965 = scmp.eq.s32.totalorder %s964, 0
  %p966 = pneg %p965
  %968 = shalt.err (%p966)
  %s969 = scalar_lea.sflag [#allocation3], 4
  %970 = vsyncmov %s969
  %s971 = vpop.sfrf %970
  %p972 = scmp.eq.s32.totalorder %s971, 0
  %p973 = pneg %p972
  %975 = shalt.err (%p973)
  %s976 = scalar_lea.sflag [#allocation3], 5
  %977 = vsyncmov %s976
  %s978 = vpop.sfrf %977
  %p979 = scmp.eq.s32.totalorder %s978, 0
  %p980 = pneg %p979
  %982 = shalt.err (%p980)
  %s983 = scalar_lea.sflag [#allocation3], 6
  %984 = vsyncmov %s983
  %s985 = vpop.sfrf %984
  %p986 = scmp.eq.s32.totalorder %s985, 0
  %p987 = pneg %p986
  %989 = shalt.err (%p987)
  %s990 = scalar_lea.sflag [#allocation3], 7
  %991 = vsyncmov %s990
  %s992 = vpop.sfrf %991
  %p993 = scmp.eq.s32.totalorder %s992, 0
  %p994 = pneg %p993
  %996 = shalt.err (%p994)
  %s997 = scalar_lea.sflag [#allocation3], 8
  %998 = vsyncmov %s997
  %s999 = vpop.sfrf %998
  %p1000 = scmp.eq.s32.totalorder %s999, 0
  %p1001 = pneg %p1000
  %1003 = shalt.err (%p1001)
  %s1004 = scalar_lea.sflag [#allocation3], 9
  %1005 = vsyncmov %s1004
  %s1006 = vpop.sfrf %1005
  %p1007 = scmp.eq.s32.totalorder %s1006, 0
  %p1008 = pneg %p1007
  %1010 = shalt.err (%p1008)
  %s1011 = scalar_lea.sflag [#allocation3], 10
  %1012 = vsyncmov %s1011
  %s1013 = vpop.sfrf %1012
  %p1014 = scmp.eq.s32.totalorder %s1013, 0
  %p1015 = pneg %p1014
  %1017 = shalt.err (%p1015)
  %s1018 = scalar_lea.sflag [#allocation3], 11
  %1019 = vsyncmov %s1018
  %s1020 = vpop.sfrf %1019
  %p1021 = scmp.eq.s32.totalorder %s1020, 0
  %p1022 = pneg %p1021
  %1024 = shalt.err (%p1022)
  %s1025 = scalar_lea.sflag [#allocation3], 12
  %1026 = vsyncmov %s1025
  %s1027 = vpop.sfrf %1026
  %p1028 = scmp.eq.s32.totalorder %s1027, 0
  %p1029 = pneg %p1028
  %1031 = shalt.err (%p1029)
  %s1032 = scalar_lea.sflag [#allocation3], 13
  %1033 = vsyncmov %s1032
  %s1034 = vpop.sfrf %1033
  %p1035 = scmp.eq.s32.totalorder %s1034, 0
  %p1036 = pneg %p1035
  %1038 = shalt.err (%p1036)
  %s1039 = scalar_lea.sflag [#allocation3], 14
  %1040 = vsyncmov %s1039
  %s1041 = vpop.sfrf %1040
  %p1042 = scmp.eq.s32.totalorder %s1041, 0
  %p1043 = pneg %p1042
  %1045 = shalt.err (%p1043)
  %s1046 = scalar_lea.sflag [#allocation3], 15
  %1047 = vsyncmov %s1046
  %s1048 = vpop.sfrf %1047
  %p1049 = scmp.eq.s32.totalorder %s1048, 0
  %p1050 = pneg %p1049
  %1052 = shalt.err (%p1050)

// kernel: model_forward.2
$region0: #{model_forward.2}
  #allocation0 [shape = 'u32[]', space=smem, size = 0x4, offset = 0x4, fixed_abs, tag = 'smem constant byte address 0x4 - core index']
  #allocation1 [shape = 'u32[144,128]{1,0:T(1,128)}', space=vmem, size = 0x12000, scoped, tag = 'internal scratch']
  %s0 = inlined_call_operand.vmem [shape: f32[2,3,256], index: 0, kind: input, shape index: {}]
  %s1 = inlined_call_operand.vmem [shape: f32[64,256], index: 1, kind: input, shape index: {}]
  %s2 = inlined_call_operand.vmem [shape: f32[4], index: 2, kind: input, shape index: {}]
  %s3 = inlined_call_operand.vmem [shape: f32[3,128], index: 3, kind: input, shape index: {}]
  %s4 = inlined_call_operand.vmem [shape: f32[1,128], index: 4, kind: input, shape index: {}]
  %s5 = inlined_call_operand.vmem [shape: f32[3,2], index: 5, kind: input, shape index: {}]
  %s6 = inlined_call_operand.vmem [shape: f32[1,2], index: 6, kind: input, shape index: {}]
  %s7 = inlined_call_operand.vmem [shape: f32[2,1,256], index: 7, kind: output, shape index: {0}]
  %s8 = inlined_call_operand.vmem [shape: f32[2,64,128], index: 8, kind: output, shape index: {1}]
  %s9 = inlined_call_operand.hbm [shape: f32[2,1,2], index: 9, kind: output, shape index: {2}]
  %10 = xla_tuple %s7, %s8, %s9
  %s11 = sld [smem:[#allocation0]]
  $region81: #{model_forward.2} parent=0
    _
  %s13 = ssub.s32 1, %s11
  %s14 = scalar_select 0, %s13, %s11
  $region1: #{model_forward.2} parent=0
    #allocation2 [shape = 'u8[512]{0}', space=smem, size = 0x200, scoped, tag = 'input window, operand 2, single buffered']
    #allocation3 [shape = 's32[2]{0}', space=sflag, size = 0x8, scoped, tag = 'scoped memory for model_forward.2']
    #allocation4 [shape = 's32[2]{0}', space=sflag, size = 0x8, scoped, tag = 'scoped memory for model_forward.2']
    #allocation5 [shape = 'u8[1024]{0}', space=vmem, size = 0x400, scoped, tag = 'output window, operand 2']
    %15 = vsyncpa [#allocation4], 0
    %16 = vsyncpa [#allocation3], 0
    %s17 = scalar_lea.sflag [#allocation3], 1
    %18 = vsyncpa %s17, 0
    loop: start=0, step=1, limit=4
    $region2: #{model_forward.2} parent=1 // loop_pre_header
      _
    $region3: #{model_forward.2} parent=1 // loop_header
      %s20 = sphi 0, %s24
      %p21 = scmp.ge.s32.totalorder %s20, 4
      %s30 = sphi 0, %s32
      %s33 = sphi 0, %s30
      %s34 = sphi 0, %s33
      %s50 = sphi 0, %s34
      %s54 = sphi 0, %s54
      %s56 = sphi 0, %s54
      %s57 = sphi 0, %s56
      %s71 = sphi 0, %s57
      %s75 = sphi 0, %s75
      %s77 = sphi 0, %s75
      %s78 = sphi 0, %s77
      %s92 = sphi 0, %s78
      %s96 = sphi 0, %s96
      %s98 = sphi 0, %s96
      %s99 = sphi 0, %s98
      %s113 = sphi 0, %s99
      %s117 = sphi 0, %s117
      %s119 = sphi 0, %s117
      %s120 = sphi 0, %s119
      %s134 = sphi 0, %s120
      %s138 = sphi 0, %s138
      %s140 = sphi 0, %s138
      %s141 = sphi 0, %s140
      %s155 = sphi 0, %s141
      %s159 = sphi 0, %s159
      %s161 = sphi 0, %s159
      %s162 = sphi 0, %s161
      %s176 = sphi 0, %s162
      %s182 = sphi 0, %s184
      %s185 = sphi 0, %s182
      %s186 = sphi 0, %s185
      %s202 = sphi 0, %s186
      %s208 = sphi 0, %s210
      %s211 = sphi 0, %s208
      %s212 = sphi 0, %s211
      %s228 = sphi 0, %s212
      %s234 = sphi 0, %s236
      %s237 = sphi 0, %s234
      %s238 = sphi 0, %s237
      %s254 = sphi 0, %s238
    $region4: #{model_forward.2} parent=1 // loop_header_branch
      %23 = sbr.rel (%p21) target = $region8
    $region5: #{model_forward.2} parent=1 // loop_body
      %s25 = ssub.s32 %s20, 1
      %s26 = ssub.s32 %s20, 2
      %s27 = sadd.s32 %s20, 1
      %s28 = ssub.s32 %s20, %s27
      %p29 = scmp.eq.s32.totalorder %s28, 0
      %s31 = sadd.s32 %s30, 1
      %s32 = scalar_select %p29, %s30, %s31
      %p35 = pneg %p29
      %p36 = scmp.eq.s32.totalorder %s20, 1
      %p37 = por %p35, %p36
      %p38 = scmp.ne.s32.totalorder %s30, %s33
      %p39 = scmp.eq.s32.totalorder %s20, 0
      %p40 = por %p38, %p39
      %p41 = scmp.ne.s32.totalorder %s30, %s33
      %p42 = scmp.eq.s32.totalorder %s25, 1
      %p43 = por %p41, %p42
      %p44 = scmp.ne.s32.totalorder %s33, %s34
      %p45 = scmp.eq.s32.totalorder %s25, 0
      %p46 = por %p44, %p45
      %p47 = scmp.ne.s32.totalorder %s33, %s34
      %p48 = scmp.eq.s32.totalorder %s26, 1
      %p49 = por %p47, %p48
      %p51 = scmp.ne.s32.totalorder %s34, %s50
      %p52 = scmp.eq.s32.totalorder %s26, 0
      %p53 = por %p51, %p52
      %s55 = sadd.s32 %s54, 1
      %p58 = scmp.eq.s32.totalorder %s20, 1
      %p59 = scmp.ne.s32.totalorder %s54, %s56
      %p60 = scmp.eq.s32.totalorder %s20, 0
      %p61 = por %p59, %p60
      %p62 = scmp.ne.s32.totalorder %s54, %s56
      %p63 = scmp.eq.s32.totalorder %s25, 1
      %p64 = por %p62, %p63
      %p65 = scmp.ne.s32.totalorder %s56, %s57
      %p66 = scmp.eq.s32.totalorder %s25, 0
      %p67 = por %p65, %p66
      %p68 = scmp.ne.s32.totalorder %s56, %s57
      %p69 = scmp.eq.s32.totalorder %s26, 1
      %p70 = por %p68, %p69
      %p72 = scmp.ne.s32.totalorder %s57, %s71
      %p73 = scmp.eq.s32.totalorder %s26, 0
      %p74 = por %p72, %p73
      %s76 = sadd.s32 %s75, 1
      %p79 = scmp.eq.s32.totalorder %s20, 1
      %p80 = scmp.ne.s32.totalorder %s75, %s77
      %p81 = scmp.eq.s32.totalorder %s20, 0
      %p82 = por %p80, %p81
      %p83 = scmp.ne.s32.totalorder %s75, %s77
      %p84 = scmp.eq.s32.totalorder %s25, 1
      %p85 = por %p83, %p84
      %p86 = scmp.ne.s32.totalorder %s77, %s78
      %p87 = scmp.eq.s32.totalorder %s25, 0
      %p88 = por %p86, %p87
      %p89 = scmp.ne.s32.totalorder %s77, %s78
      %p90 = scmp.eq.s32.totalorder %s26, 1
      %p91 = por %p89, %p90
      %p93 = scmp.ne.s32.totalorder %s78, %s92
      %p94 = scmp.eq.s32.totalorder %s26, 0
      %p95 = por %p93, %p94
      %s97 = sadd.s32 %s96, 1
      %p100 = scmp.eq.s32.totalorder %s20, 1
      %p101 = scmp.ne.s32.totalorder %s96, %s98
      %p102 = scmp.eq.s32.totalorder %s20, 0
      %p103 = por %p101, %p102
      %p104 = scmp.ne.s32.totalorder %s96, %s98
      %p105 = scmp.eq.s32.totalorder %s25, 1
      %p106 = por %p104, %p105
      %p107 = scmp.ne.s32.totalorder %s98, %s99
      %p108 = scmp.eq.s32.totalorder %s25, 0
      %p109 = por %p107, %p108
      %p110 = scmp.ne.s32.totalorder %s98, %s99
      %p111 = scmp.eq.s32.totalorder %s26, 1
      %p112 = por %p110, %p111
      %p114 = scmp.ne.s32.totalorder %s99, %s113
      %p115 = scmp.eq.s32.totalorder %s26, 0
      %p116 = por %p114, %p115
      %s118 = sadd.s32 %s117, 1
      %p121 = scmp.eq.s32.totalorder %s20, 1
      %p122 = scmp.ne.s32.totalorder %s117, %s119
      %p123 = scmp.eq.s32.totalorder %s20, 0
      %p124 = por %p122, %p123
      %p125 = scmp.ne.s32.totalorder %s117, %s119
      %p126 = scmp.eq.s32.totalorder %s25, 1
      %p127 = por %p125, %p126
      %p128 = scmp.ne.s32.totalorder %s119, %s120
      %p129 = scmp.eq.s32.totalorder %s25, 0
      %p130 = por %p128, %p129
      %p131 = scmp.ne.s32.totalorder %s119, %s120
      %p132 = scmp.eq.s32.totalorder %s26, 1
      %p133 = por %p131, %p132
      %p135 = scmp.ne.s32.totalorder %s120, %s134
      %p136 = scmp.eq.s32.totalorder %s26, 0
      %p137 = por %p135, %p136
      %s139 = sadd.s32 %s138, 1
      %p142 = scmp.eq.s32.totalorder %s20, 1
      %p143 = scmp.ne.s32.totalorder %s138, %s140
      %p144 = scmp.eq.s32.totalorder %s20, 0
      %p145 = por %p143, %p144
      %p146 = scmp.ne.s32.totalorder %s138, %s140
      %p147 = scmp.eq.s32.totalorder %s25, 1
      %p148 = por %p146, %p147
      %p149 = scmp.ne.s32.totalorder %s140, %s141
      %p150 = scmp.eq.s32.totalorder %s25, 0
      %p151 = por %p149, %p150
      %p152 = scmp.ne.s32.totalorder %s140, %s141
      %p153 = scmp.eq.s32.totalorder %s26, 1
      %p154 = por %p152, %p153
      %p156 = scmp.ne.s32.totalorder %s141, %s155
      %p157 = scmp.eq.s32.totalorder %s26, 0
      %p158 = por %p156, %p157
      %s160 = sadd.s32 %s159, 1
      %p163 = scmp.eq.s32.totalorder %s20, 1
      %p164 = scmp.ne.s32.totalorder %s159, %s161
      %p165 = scmp.eq.s32.totalorder %s20, 0
      %p166 = por %p164, %p165
      %p167 = scmp.ne.s32.totalorder %s159, %s161
      %p168 = scmp.eq.s32.totalorder %s25, 1
      %p169 = por %p167, %p168
      %p170 = scmp.ne.s32.totalorder %s161, %s162
      %p171 = scmp.eq.s32.totalorder %s25, 0
      %p172 = por %p170, %p171
      %p173 = scmp.ne.s32.totalorder %s161, %s162
      %p174 = scmp.eq.s32.totalorder %s26, 1
      %p175 = por %p173, %p174
      %p177 = scmp.ne.s32.totalorder %s162, %s176
      %p178 = scmp.eq.s32.totalorder %s26, 0
      %p179 = por %p177, %p178
      %s180 = ssub.s32 %s20, %s27
      %p181 = scmp.eq.s32.totalorder %s180, 0
      %s183 = sadd.s32 %s182, 1
      %s184 = scalar_select %p181, %s182, %s183
      %p187 = pneg %p181
      %p188 = scmp.eq.s32.totalorder %s20, 1
      %p189 = por %p187, %p188
      %p190 = scmp.ne.s32.totalorder %s182, %s185
      %p191 = scmp.eq.s32.totalorder %s20, 0
      %p192 = por %p190, %p191
      %p193 = scmp.ne.s32.totalorder %s182, %s185
      %p194 = scmp.eq.s32.totalorder %s25, 1
      %p195 = por %p193, %p194
      %p196 = scmp.ne.s32.totalorder %s185, %s186
      %p197 = scmp.eq.s32.totalorder %s25, 0
      %p198 = por %p196, %p197
      %p199 = scmp.ne.s32.totalorder %s185, %s186
      %p200 = scmp.eq.s32.totalorder %s26, 1
      %p201 = por %p199, %p200
      %p203 = scmp.ne.s32.totalorder %s186, %s202
      %p204 = scmp.eq.s32.totalorder %s26, 0
      %p205 = por %p203, %p204
      %s206 = ssub.s32 %s20, %s27
      %p207 = scmp.eq.s32.totalorder %s206, 0
      %s209 = sadd.s32 %s208, 1
      %s210 = scalar_select %p207, %s208, %s209
      %p213 = pneg %p207
      %p214 = scmp.eq.s32.totalorder %s20, 1
      %p215 = por %p213, %p214
      %p216 = scmp.ne.s32.totalorder %s208, %s211
      %p217 = scmp.eq.s32.totalorder %s20, 0
      %p218 = por %p216, %p217
      %p219 = scmp.ne.s32.totalorder %s208, %s211
      %p220 = scmp.eq.s32.totalorder %s25, 1
      %p221 = por %p219, %p220
      %p222 = scmp.ne.s32.totalorder %s211, %s212
      %p223 = scmp.eq.s32.totalorder %s25, 0
      %p224 = por %p222, %p223
      %p225 = scmp.ne.s32.totalorder %s211, %s212
      %p226 = scmp.eq.s32.totalorder %s26, 1
      %p227 = por %p225, %p226
      %p229 = scmp.ne.s32.totalorder %s212, %s228
      %p230 = scmp.eq.s32.totalorder %s26, 0
      %p231 = por %p229, %p230
      %s232 = ssub.s32 %s20, %s27
      %p233 = scmp.eq.s32.totalorder %s232, 0
      %s235 = sadd.s32 %s234, 1
      %s236 = scalar_select %p233, %s234, %s235
      %p239 = pneg %p233
      %p240 = scmp.eq.s32.totalorder %s20, 1
      %p241 = por %p239, %p240
      %p242 = scmp.ne.s32.totalorder %s234, %s237
      %p243 = scmp.eq.s32.totalorder %s20, 0
      %p244 = por %p242, %p243
      %p245 = scmp.ne.s32.totalorder %s234, %s237
      %p246 = scmp.eq.s32.totalorder %s25, 1
      %p247 = por %p245, %p246
      %p248 = scmp.ne.s32.totalorder %s237, %s238
      %p249 = scmp.eq.s32.totalorder %s25, 0
      %p250 = por %p248, %p249
      %p251 = scmp.ne.s32.totalorder %s237, %s238
      %p252 = scmp.eq.s32.totalorder %s26, 1
      %p253 = por %p251, %p252
      %p255 = scmp.ne.s32.totalorder %s238, %s254
      %p256 = scmp.eq.s32.totalorder %s26, 0
      %p257 = por %p255, %p256
      %p258 = scmp.le.s32.totalorder 1, %s20
      %p259 = scmp.lt.s32.totalorder %s20, 3
      %p260 = pnand %p258, %p259
      %p261 = pneg %p260
      // Predicated region
      $region9: #{model_forward.2} parent=5 // pred_check
        _
      $region10: #{model_forward.2} parent=5 // pred_check_branch
        %263 = sbr.rel (%p260) target = $region12
      $region11: #{model_forward.2} parent=5 // pred_region
        %s264 = ssub.s32 %s20, 1
        // Predicated region
        $region13: #{model_forward.2} parent=11 // pred_check
          %p265 = pneg %p67
        $region14: #{model_forward.2} parent=11 // pred_check_branch
          %267 = sbr.rel (%p265) target = $region16
        $region15: #{model_forward.2} parent=11 // pred_region
          _
        $region16: #{model_forward.2} parent=11 // pred_fallthru
          _
        // Predicated region
        $region17: #{model_forward.2} parent=11 // pred_check
          %p268 = pneg %p88
        $region18: #{model_forward.2} parent=11 // pred_check_branch
          %270 = sbr.rel (%p268) target = $region20
        $region19: #{model_forward.2} parent=11 // pred_region
          %s272 = ssub.s32 16, 16
          %273 = vsyncadd [#allocation4], %s272
          %s275 = sshll.u32 %s2, 4
          %s276 = int_to_ptr.vmem [resolvable:$true] %s275
          %278 = dma.vmem_to_smem %s276, 16, [#allocation2], [#allocation4]
        $region20: #{model_forward.2} parent=11 // pred_fallthru
          _
        // Predicated region
        $region21: #{model_forward.2} parent=11 // pred_check
          %p279 = pneg %p109
        $region22: #{model_forward.2} parent=11 // pred_check_branch
          %281 = sbr.rel (%p279) target = $region24
        $region23: #{model_forward.2} parent=11 // pred_region
          _
        $region24: #{model_forward.2} parent=11 // pred_fallthru
          _
        // Predicated region
        $region25: #{model_forward.2} parent=11 // pred_check
          %p282 = pneg %p130
        $region26: #{model_forward.2} parent=11 // pred_check_branch
          %284 = sbr.rel (%p282) target = $region28
        $region27: #{model_forward.2} parent=11 // pred_region
          _
        $region28: #{model_forward.2} parent=11 // pred_fallthru
          _
        // Predicated region
        $region29: #{model_forward.2} parent=11 // pred_check
          %p285 = pneg %p151
        $region30: #{model_forward.2} parent=11 // pred_check_branch
          %287 = sbr.rel (%p285) target = $region32
        $region31: #{model_forward.2} parent=11 // pred_region
          _
        $region32: #{model_forward.2} parent=11 // pred_fallthru
          _
        // Predicated region
        $region33: #{model_forward.2} parent=11 // pred_check
          %p288 = pneg %p172
        $region34: #{model_forward.2} parent=11 // pred_check_branch
          %290 = sbr.rel (%p288) target = $region36
        $region35: #{model_forward.2} parent=11 // pred_region
          _
        $region36: #{model_forward.2} parent=11 // pred_fallthru
          _
      $region12: #{model_forward.2} parent=5 // pred_fallthru
        _
      %p291 = scmp.lt.s32.totalorder %s20, 2
      // Predicated region
      $region37: #{model_forward.2} parent=5 // pred_check
        %p292 = pneg %p291
      $region38: #{model_forward.2} parent=5 // pred_check_branch
        %294 = sbr.rel (%p292) target = $region40
      $region39: #{model_forward.2} parent=5 // pred_region
        // Predicated region
        $region41: #{model_forward.2} parent=39 // pred_check
          %p295 = pneg %p40
        $region42: #{model_forward.2} parent=39 // pred_check_branch
          %297 = sbr.rel (%p295) target = $region44
        $region43: #{model_forward.2} parent=39 // pred_region
          %p298 = scmp.lt.s32.totalorder %s20, 1
          %s299 = scalar_select %p298, %s20, 1
          %s300 = smul.addr %s299, 2
          %s301 = smul.addr %s300, 4
          %s302 = scalar_lea.vmem %s0, %s301
        $region44: #{model_forward.2} parent=39 // pred_fallthru
          _
      $region40: #{model_forward.2} parent=5 // pred_fallthru
        _
      %p303 = scmp.le.s32.totalorder 1, %s20
      %p304 = scmp.lt.s32.totalorder %s20, 3
      %p305 = pnand %p303, %p304
      %p306 = pneg %p305
      // Predicated region
      $region45: #{model_forward.2} parent=5 // pred_check
        _
      $region46: #{model_forward.2} parent=5 // pred_check_branch
        %308 = sbr.rel (%p305) target = $region48
      $region47: #{model_forward.2} parent=5 // pred_region
        %s309 = ssub.s32 %s20, 1
        // Predicated region
        $region49: #{model_forward.2} parent=47 // pred_check
          %p310 = pneg %p88
        $region50: #{model_forward.2} parent=47 // pred_check_branch
          %312 = sbr.rel (%p310) target = $region52
        $region51: #{model_forward.2} parent=47 // pred_region
          %313 = dma.done [#allocation4], 16
        $region52: #{model_forward.2} parent=47 // pred_fallthru
          _
        %314 = sfence
        %p315 = scmp.lt.s32.totalorder %s25, 1
        %s316 = scalar_select %p315, %s25, 1
        %s317 = smul.addr %s316, 2
        %s318 = smul.addr %s317, 4
        %s319 = scalar_lea.vmem %s0, %s318
        %p320 = pneg %p46
        %p321 = pneg %p43
        %p322 = pneg %p67
        %p323 = pneg %p64
        %p324 = pneg %p88
        %p325 = pneg %p85
        %p326 = pneg %p109
        %p327 = pneg %p106
        %p328 = pneg %p130
        %p329 = pneg %p127
        %p330 = pneg %p151
        %p331 = pneg %p148
        %p332 = pneg %p172
        %p333 = pneg %p169
        %p334 = pneg %p198
        %p335 = pneg %p195
        %p336 = scmp.lt.s32.totalorder %s25, 1
        %s337 = scalar_select %p336, %s25, 1
        %s338 = smul.addr %s337, 2
        %s339 = scalar_lea.vmem %s7, %s338
        %p340 = pneg %p224
        %p341 = pneg %p221
        %p342 = scmp.lt.s32.totalorder %s25, 1
        %s343 = scalar_select %p342, %s25, 1
        %s344 = smul.addr %s343, 8
        %s345 = smul.addr %s344, 8
        %s346 = scalar_lea.vmem %s8, %s345
        %p347 = pneg %p250
        %p348 = pneg %p247
        %s349 = sand.u32 %s237, 1
        %s350 = scalar_lea.sflag [#allocation3], %s349
        %s351 = sand.u32 %s237, 1
        %s352 = scalar_lea.vmem [#allocation5], %s351
        %p353 = scmp.lt.s32.totalorder %s25, 1
        %s354 = scalar_select %p353, %s25, 1
        %s355 = smul.addr %s354, 2
        %s356 = smul.addr %s355, 4
        %s357 = scalar_lea.vmem %s0, %s356
        %p358 = scmp.lt.s32.totalorder %s25, 1
        %s359 = scalar_select %p358, %s25, 1
        %s360 = smul.addr %s359, 2
        %s361 = scalar_lea.vmem %s7, %s360
        %p362 = scmp.lt.s32.totalorder %s25, 1
        %s363 = scalar_select %p362, %s25, 1
        %s364 = smul.addr %s363, 8
        %s365 = smul.addr %s364, 8
        %s366 = scalar_lea.vmem %s8, %s365
        %v367 = vld [vmem:[%s357] sm:$0x77]
        %s368 = sld [smem:[#allocation2]]
        %v369 = vstv %s368
        %v370 = vmul.f32 %v369, %v367
        %s371 = sld [smem:[#allocation2 + $0x1]]
        %v372 = vstv %s371
        %v373 = vmul.f32 %v372, %v367
        %v375 = vrot.slane %v373, 5
        %v376 = vrot.slane %v375, 4
        %v378 = vadd.f32 %v370, %v376
        %s379 = sld [smem:[#allocation2 + $0x2]]
        %v380 = vstv %s379
        %v381 = vmul.f32 %v380, %v367
        %v383 = vrot.slane %v381, 6
        %v384 = vrot.slane %v383, 4
        %v386 = vadd.f32 %v378, %v384
        %s387 = sld [smem:[#allocation2 + $0x3]]
        %v388 = vstv %s387
        %v389 = vadd.f32 %v386, %v388
        %v392 = vunpack.c.l.s4 1966171168
        %v393 = vunpack.c.0.s8 %v392
        %v394 = vlaneseq
        %v395 = vshrl.u32 %v394, 7
        %v396 = vsub.s32 %v393, %v395
        %v397 = vrot.slane %v389, %v396
        %v399 = vunpack.c.l.s4 1966171168
        %v400 = vunpack.c.0.s8 %v399
        %v401 = vlaneseq
        %v402 = vshrl.u32 %v401, 7
        %v403 = vsub.s32 %v400, %v402
        %v404 = vrot.slane %v397, %v403
        %v406 = vlaneseq
        %vm407 = vcmp.ge.s32.totalorder %v406, 0
        %vm408 = vcmp.lt.s32.totalorder %v406, 256
        %vm409 = vmand %vm407, %vm408
        %410 = vst.msk [vmem:[%s361] sm:$0x3] %vm409, %v404
        %v411 = vld [vmem:[%s1] sm:$0xff]
        %v412 = vld [vmem:[%s1 + $0x8] sm:$0xff]
        %v413 = vld [vmem:[%s1 + $0x10] sm:$0xff]
        %v414 = vld [vmem:[%s1 + $0x18] sm:$0xff]
        %v415 = vld [vmem:[%s1 + $0x20] sm:$0xff]
        %v416 = vld [vmem:[%s1 + $0x28] sm:$0xff]
        %v417 = vld [vmem:[%s1 + $0x30] sm:$0xff]
        %v418 = vld [vmem:[%s1 + $0x38] sm:$0xff]
        %v419 = vld [vmem:[%s1 + $0x40] sm:$0xff]
        %v420 = vld [vmem:[%s1 + $0x48] sm:$0xff]
        %v421 = vld [vmem:[%s1 + $0x50] sm:$0xff]
        %v422 = vld [vmem:[%s1 + $0x58] sm:$0xff]
        %v423 = vld [vmem:[%s1 + $0x60] sm:$0xff]
        %v424 = vld [vmem:[%s1 + $0x68] sm:$0xff]
        %v425 = vld [vmem:[%s1 + $0x70] sm:$0xff]
        %v426 = vld [vmem:[%s1 + $0x78] sm:$0xff]
        %v428 = vcombine.high %v367, %v367
        %430 = vmatprep.subr.mxu0 %v428
        %431 = vmatpush1.xpose.msra.mxu0 %v367
        %432 = vmatprep.subr.mxu0 0.0
        %433 = vmatpush1.xpose.msra.mxu0 0.0
        %434 = vmatprep.subr.mxu0 0.0
        %435 = vmatpush1.xpose.msra.mxu0 0.0
        %436 = vmatprep.subr.mxu0 0.0
        %437 = vmatpush1.xpose.msra.mxu0 0.0
        %438 = vmatprep.subr.mxu0 0.0
        %439 = vmatpush1.xpose.msra.mxu0 0.0
        %440 = vmatprep.subr.mxu0 0.0
        %441 = vmatpush1.xpose.msra.mxu0 0.0
        %442 = vmatprep.subr.mxu0 0.0
        %443 = vmatpush1.xpose.msra.mxu0 0.0
        %444 = vmatprep.subr.mxu0 0.0
        %445 = vmatpush1.xpose.msra.mxu0 0.0
        %446 = vmatprep.subr.mxu0 0.0
        %447 = vmatpush1.xpose.msra.mxu0 0.0
        %448 = vmatprep.subr.mxu0 0.0
        %449 = vmatpush1.xpose.msra.mxu0 0.0
        %450 = vmatprep.subr.mxu0 0.0
        %451 = vmatpush1.xpose.msra.mxu0 0.0
        %452 = vmatprep.subr.mxu0 0.0
        %453 = vmatpush1.xpose.msra.mxu0 0.0
        %454 = vmatprep.subr.mxu0 0.0
        %455 = vmatpush1.xpose.msra.mxu0 0.0
        %456 = vmatprep.subr.mxu0 0.0
        %457 = vmatpush1.xpose.msra.mxu0 0.0
        %458 = vmatprep.subr.mxu0 0.0
        %459 = vmatpush1.xpose.msra.mxu0 0.0
        %460 = vmatprep.subr.mxu0 0.0
        %461 = vmatpush1.xpose.msra.mxu0 0.0
        %462 = vmatprep.subr.mxu0 0.0
        %463 = vmatpush1.xpose.msra.mxu0 0.0
        %464 = vmatprep.subr.mxu0 0.0
        %465 = vmatpush1.xpose.msra.mxu0 0.0
        %466 = vmatprep.subr.mxu0 0.0
        %467 = vmatpush1.xpose.msra.mxu0 0.0
        %468 = vmatprep.subr.mxu0 0.0
        %469 = vmatpush1.xpose.msra.mxu0 0.0
        %470 = vmatprep.subr.mxu0 0.0
        %471 = vmatpush1.xpose.msra.mxu0 0.0
        %472 = vmatprep.subr.mxu0 0.0
        %473 = vmatpush1.xpose.msra.mxu0 0.0
        %474 = vmatprep.subr.mxu0 0.0
        %475 = vmatpush1.xpose.msra.mxu0 0.0
        %476 = vmatprep.subr.mxu0 0.0
        %477 = vmatpush1.xpose.msra.mxu0 0.0
        %478 = vmatprep.subr.mxu0 0.0
        %479 = vmatpush1.xpose.msra.mxu0 0.0
        %480 = vmatprep.subr.mxu0 0.0
        %481 = vmatpush1.xpose.msra.mxu0 0.0
        %482 = vmatprep.subr.mxu0 0.0
        %483 = vmatpush1.xpose.msra.mxu0 0.0
        %484 = vmatprep.subr.mxu0 0.0
        %485 = vmatpush1.xpose.msra.mxu0 0.0
        %486 = vmatprep.subr.mxu0 0.0
        %487 = vmatpush1.xpose.msra.mxu0 0.0
        %488 = vmatprep.subr.mxu0 0.0
        %489 = vmatpush1.xpose.msra.mxu0 0.0
        %490 = vmatprep.subr.mxu0 0.0
        %491 = vmatpush1.xpose.msra.mxu0 0.0
        %492 = vmatprep.subr.mxu0 0.0
        %493 = vmatpush1.xpose.msra.mxu0 0.0
        %494 = vmatprep.mubr.f32.mxu0 %v412
        %495 = vmatmul.mubr.f32.gmra.mrb[0].mxu0 %v411
        %v496 = vpop.f32.mrb[0].mxu0
        %v497 = vadd.f32 0.0, %v496
        %v498 = vpop.f32.mrb[0].mxu0
        %499 = vmatprep.mubr.f32.mxu0 %v414
        %500 = vmatmul.mubr.f32.gmra.mrb[0].mxu0 %v413
        %v501 = vpop.f32.mrb[0].mxu0
        %v502 = vadd.f32 0.0, %v501
        %v503 = vpop.f32.mrb[0].mxu0
        %504 = vmatprep.mubr.f32.mxu0 %v416
        %505 = vmatmul.mubr.f32.gmra.mrb[0].mxu0 %v415
        %v506 = vpop.f32.mrb[0].mxu0
        %v507 = vadd.f32 0.0, %v506
        %v508 = vpop.f32.mrb[0].mxu0
        %509 = vmatprep.mubr.f32.mxu0 %v418
        %510 = vmatmul.mubr.f32.gmra.mrb[0].mxu0 %v417
        %v511 = vpop.f32.mrb[0].mxu0
        %v512 = vadd.f32 0.0, %v511
        %v513 = vpop.f32.mrb[0].mxu0
        %514 = vmatprep.mubr.f32.mxu0 %v420
        %515 = vmatmul.mubr.f32.gmra.mrb[0].mxu0 %v419
        %v516 = vpop.f32.mrb[0].mxu0
        %v517 = vadd.f32 0.0, %v516
        %v518 = vpop.f32.mrb[0].mxu0
        %519 = vmatprep.mubr.f32.mxu0 %v422
        %520 = vmatmul.mubr.f32.gmra.mrb[0].mxu0 %v421
        %v521 = vpop.f32.mrb[0].mxu0
        %v522 = vadd.f32 0.0, %v521
        %v523 = vpop.f32.mrb[0].mxu0
        %524 = vmatprep.mubr.f32.mxu0 %v424
        %525 = vmatmul.mubr.f32.gmra.mrb[0].mxu0 %v423
        %v526 = vpop.f32.mrb[0].mxu0
        %v527 = vadd.f32 0.0, %v526
        %v528 = vpop.f32.mrb[0].mxu0
        %529 = vmatprep.mubr.f32.mxu0 %v426
        %530 = vmatmul.mubr.f32.gmra.mrb[0].mxu0 %v425
        %v531 = vpop.f32.mrb[0].mxu0
        %v532 = vadd.f32 0.0, %v531
        %v533 = vpop.f32.mrb[0].mxu0
        %534 = vdwg.mxu0
        %v535 = vld [vmem:[%s3] sm:$0x1]
        %537 = vset.pattern.permute.xlu0 0
        %538 = vperm.xlu0 %537, %v497
        %v539 = vpop.permute.xlu0 %538
        %542 = vset.pattern.permute.xlu0 0
        %543 = vperm.xlu0 %542, %v502
        %v544 = vpop.permute.xlu0 %543
        %547 = vset.pattern.permute.xlu0 0
        %548 = vperm.xlu0 %547, %v507
        %v549 = vpop.permute.xlu0 %548
        %552 = vset.pattern.permute.xlu0 0
        %553 = vperm.xlu0 %552, %v512
        %v554 = vpop.permute.xlu0 %553
        %557 = vset.pattern.permute.xlu0 0
        %558 = vperm.xlu0 %557, %v517
        %v559 = vpop.permute.xlu0 %558
        %562 = vset.pattern.permute.xlu0 0
        %563 = vperm.xlu0 %562, %v522
        %v564 = vpop.permute.xlu0 %563
        %567 = vset.pattern.permute.xlu0 0
        %568 = vperm.xlu0 %567, %v527
        %v569 = vpop.permute.xlu0 %568
        %572 = vset.pattern.permute.xlu0 0
        %573 = vperm.xlu0 %572, %v532
        %v574 = vpop.permute.xlu0 %573
        %v576 = vlaneseq
        %v577 = vshrl.u32 %v576, 7
        %v578 = vsub.s32 0, %v577
        %v579 = vrot.slane %v535, %v578
        %v580 = vmul.f32 %v539, %v579
        %v581 = vmul.f32 %v544, %v579
        %v582 = vmul.f32 %v549, %v579
        %v583 = vmul.f32 %v554, %v579
        %v584 = vmul.f32 %v559, %v579
        %v585 = vmul.f32 %v564, %v579
        %v586 = vmul.f32 %v569, %v579
        %v587 = vmul.f32 %v574, %v579
        %v588 = vld [vmem:[%s3 + $0x1] sm:$0x1]
        %589 = vset.pattern.permute.xlu0 1
        %590 = vperm.xlu0 %589, %v497
        %v591 = vpop.permute.xlu0 %590
        %593 = vset.pattern.permute.xlu0 1
        %594 = vperm.xlu0 %593, %v502
        %v595 = vpop.permute.xlu0 %594
        %597 = vset.pattern.permute.xlu0 1
        %598 = vperm.xlu0 %597, %v507
        %v599 = vpop.permute.xlu0 %598
        %601 = vset.pattern.permute.xlu0 1
        %602 = vperm.xlu0 %601, %v512
        %v603 = vpop.permute.xlu0 %602
        %605 = vset.pattern.permute.xlu0 1
        %606 = vperm.xlu0 %605, %v517
        %v607 = vpop.permute.xlu0 %606
        %609 = vset.pattern.permute.xlu0 1
        %610 = vperm.xlu0 %609, %v522
        %v611 = vpop.permute.xlu0 %610
        %613 = vset.pattern.permute.xlu0 1
        %614 = vperm.xlu0 %613, %v527
        %v615 = vpop.permute.xlu0 %614
        %617 = vset.pattern.permute.xlu0 1
        %618 = vperm.xlu0 %617, %v532
        %v619 = vpop.permute.xlu0 %618
        %v621 = vlaneseq
        %v622 = vshrl.u32 %v621, 7
        %v623 = vsub.s32 0, %v622
        %v624 = vrot.slane %v588, %v623
        %v625 = vmul.f32 %v591, %v624
        %v626 = vmul.f32 %v595, %v624
        %v627 = vmul.f32 %v599, %v624
        %v628 = vmul.f32 %v603, %v624
        %v629 = vmul.f32 %v607, %v624
        %v630 = vmul.f32 %v611, %v624
        %v631 = vmul.f32 %v615, %v624
        %v632 = vmul.f32 %v619, %v624
        %v633 = vadd.f32 %v580, %v625
        %v634 = vadd.f32 %v581, %v626
        %v635 = vadd.f32 %v582, %v627
        %v636 = vadd.f32 %v583, %v628
        %v637 = vadd.f32 %v584, %v629
        %v638 = vadd.f32 %v585, %v630
        %v639 = vadd.f32 %v586, %v631
        %v640 = vadd.f32 %v587, %v632
        %v641 = vld [vmem:[%s3 + $0x2] sm:$0x1]
        %642 = vset.pattern.permute.xlu0 2
        %643 = vperm.xlu0 %642, %v497
        %v644 = vpop.permute.xlu0 %643
        %646 = vset.pattern.permute.xlu0 2
        %647 = vperm.xlu0 %646, %v502
        %v648 = vpop.permute.xlu0 %647
        %650 = vset.pattern.permute.xlu0 2
        %651 = vperm.xlu0 %650, %v507
        %v652 = vpop.permute.xlu0 %651
        %654 = vset.pattern.permute.xlu0 2
        %655 = vperm.xlu0 %654, %v512
        %v656 = vpop.permute.xlu0 %655
        %658 = vset.pattern.permute.xlu0 2
        %659 = vperm.xlu0 %658, %v517
        %v660 = vpop.permute.xlu0 %659
        %662 = vset.pattern.permute.xlu0 2
        %663 = vperm.xlu0 %662, %v522
        %v664 = vpop.permute.xlu0 %663
        %666 = vset.pattern.permute.xlu0 2
        %667 = vperm.xlu0 %666, %v527
        %v668 = vpop.permute.xlu0 %667
        %670 = vset.pattern.permute.xlu0 2
        %671 = vperm.xlu0 %670, %v532
        %v672 = vpop.permute.xlu0 %671
        %v674 = vlaneseq
        %v675 = vshrl.u32 %v674, 7
        %v676 = vsub.s32 0, %v675
        %v677 = vrot.slane %v641, %v676
        %v678 = vmul.f32 %v644, %v677
        %v679 = vmul.f32 %v648, %v677
        %v680 = vmul.f32 %v652, %v677
        %v681 = vmul.f32 %v656, %v677
        %v682 = vmul.f32 %v660, %v677
        %v683 = vmul.f32 %v664, %v677
        %v684 = vmul.f32 %v668, %v677
        %v685 = vmul.f32 %v672, %v677
        %v686 = vadd.f32 %v633, %v678
        %v687 = vadd.f32 %v634, %v679
        %v688 = vadd.f32 %v635, %v680
        %v689 = vadd.f32 %v636, %v681
        %v690 = vadd.f32 %v637, %v682
        %v691 = vadd.f32 %v638, %v683
        %v692 = vadd.f32 %v639, %v684
        %v693 = vadd.f32 %v640, %v685
        %v694 = vld [vmem:[%s4] sm:$0x1]
        %v696 = vlaneseq
        %v697 = vshrl.u32 %v696, 7
        %v698 = vsub.s32 0, %v697
        %v699 = vrot.slane %v694, %v698
        %v701 = vadd.f32 %v686, %v699
        %v702 = vadd.f32 %v687, %v699
        %v703 = vadd.f32 %v688, %v699
        %v704 = vadd.f32 %v689, %v699
        %v705 = vadd.f32 %v690, %v699
        %v706 = vadd.f32 %v691, %v699
        %v707 = vadd.f32 %v692, %v699
        %v708 = vadd.f32 %v693, %v699
        %709 = vst [vmem:[%s366] sm:$0xff] %v701
        %710 = vst [vmem:[%s366 + $0x8] sm:$0xff] %v702
        %711 = vst [vmem:[%s366 + $0x10] sm:$0xff] %v703
        %712 = vst [vmem:[%s366 + $0x18] sm:$0xff] %v704
        %713 = vst [vmem:[%s366 + $0x20] sm:$0xff] %v705
        %714 = vst [vmem:[%s366 + $0x28] sm:$0xff] %v706
        %715 = vst [vmem:[%s366 + $0x30] sm:$0xff] %v707
        %716 = vst [vmem:[%s366 + $0x38] sm:$0xff] %v708
        %vm717 = vcmask 1042432
        %v718 = vsel %vm717, %v367, 0.0
        %v719 = vsel %vm717, %v428, 0.0
        %v720 = vadd.f32 %v718, %v719
        %721 = vadd.xlane.f32.xlu0 %v720
        %v722 = vpop.xlane.xlu0 %721
        %v723 = vrcp.pop 256.0
        %v724 = vmul.f32 %v722, %v723
        %v725 = vld [vmem:[%s5] sm:$0x7]
        %v726 = vmul.f32 %v724, %v725
        %vm727 = vcmask 10240
        %v728 = vsel %vm727, %v726, 0.0
        %v729 = vrot.slane %v728, 4
        %v730 = vadd.f32 %v728, %v729
        %v731 = vrot.slane %v730, 2
        %v732 = vadd.f32 %v730, %v731
        %v733 = vrot.slane %v732, 1
        %v734 = vadd.f32 %v732, %v733
        %v735 = vld [vmem:[%s6] sm:$0x1]
        %v736 = vadd.f32 %v734, %v735
        %v737 = vxor.u32 %v736, 2147483648
        %v738 = vmul.f32 %v737, 1.442695
        %v739 = vpow.pop %v738
        %v740 = vadd.f32 %v739, 1.0
        %v741 = vrcp.pop %v740
        %v742 = vmul.f32 1.0, %v741
        %vm743 = vcmask 8192
        %744 = vst.msk [vmem:[%s352] sm:$0x1] %vm743, %v742
        %p745 = scmp.lt.s32.totalorder %s25, 1
        %s746 = scalar_select %p745, %s25, 1
        %s747 = smul.addr %s746, 2
        %s748 = scalar_lea.vmem %s7, %s747
        %p749 = scmp.lt.s32.totalorder %s25, 1
        %s750 = scalar_select %p749, %s25, 1
        %s751 = smul.addr %s750, 8
        %s752 = smul.addr %s751, 8
        %s753 = scalar_lea.vmem %s8, %s752
        %s754 = sand.u32 %s237, 1
        %s755 = scalar_lea.sflag [#allocation3], %s754
        %s756 = sand.u32 %s237, 1
        %s757 = scalar_lea.vmem [#allocation5], %s756
        // Predicated region
        $region53: #{model_forward.2} parent=47 // pred_check
          %p758 = pneg %p195
        $region54: #{model_forward.2} parent=47 // pred_check_branch
          %760 = sbr.rel (%p758) target = $region56
        $region55: #{model_forward.2} parent=47 // pred_region
          _
        $region56: #{model_forward.2} parent=47 // pred_fallthru
          _
        // Predicated region
        $region57: #{model_forward.2} parent=47 // pred_check
          %p761 = pneg %p221
        $region58: #{model_forward.2} parent=47 // pred_check_branch
          %763 = sbr.rel (%p761) target = $region60
        $region59: #{model_forward.2} parent=47 // pred_region
          _
        $region60: #{model_forward.2} parent=47 // pred_fallthru
          _
        // Predicated region
        $region61: #{model_forward.2} parent=47 // pred_check
          %p764 = pneg %p247
        $region62: #{model_forward.2} parent=47 // pred_check_branch
          %766 = sbr.rel (%p764) target = $region64
        $region63: #{model_forward.2} parent=47 // pred_region
          %s768 = ssub.s32 16, 16
          %769 = vsyncadd %s755, %s768
          %s770 = smul.addr %s25, 16
          %s771 = scalar_lea.hbm %s9, %s770
          %s773 = sshll.u32 %s757, 4
          %s774 = int_to_ptr.vmem [resolvable:$true] %s773
          %776 = dma.vmem_to_hbm [thread:$0]  %s774, 16, %s771, %s755
        $region64: #{model_forward.2} parent=47 // pred_fallthru
          _
      $region48: #{model_forward.2} parent=5 // pred_fallthru
        _
      %p777 = scmp.le.s32.totalorder 2, %s20
      // Predicated region
      $region65: #{model_forward.2} parent=5 // pred_check
        %p778 = pneg %p777
      $region66: #{model_forward.2} parent=5 // pred_check_branch
        %780 = sbr.rel (%p778) target = $region68
      $region67: #{model_forward.2} parent=5 // pred_region
        %s781 = ssub.s32 %s20, 2
        // Predicated region
        $region69: #{model_forward.2} parent=67 // pred_check
          %p782 = pneg %p201
        $region70: #{model_forward.2} parent=67 // pred_check_branch
          %784 = sbr.rel (%p782) target = $region72
        $region71: #{model_forward.2} parent=67 // pred_region
          %p785 = scmp.lt.s32.totalorder %s26, 1
          %s786 = scalar_select %p785, %s26, 1
          %s787 = smul.addr %s786, 2
          %s788 = scalar_lea.vmem %s7, %s787
        $region72: #{model_forward.2} parent=67 // pred_fallthru
          _
        // Predicated region
        $region73: #{model_forward.2} parent=67 // pred_check
          %p789 = pneg %p227
        $region74: #{model_forward.2} parent=67 // pred_check_branch
          %791 = sbr.rel (%p789) target = $region76
        $region75: #{model_forward.2} parent=67 // pred_region
          %p792 = scmp.lt.s32.totalorder %s26, 1
          %s793 = scalar_select %p792, %s26, 1
          %s794 = smul.addr %s793, 8
          %s795 = smul.addr %s794, 8
          %s796 = scalar_lea.vmem %s8, %s795
        $region76: #{model_forward.2} parent=67 // pred_fallthru
          _
        // Predicated region
        $region77: #{model_forward.2} parent=67 // pred_check
          %p797 = pneg %p253
        $region78: #{model_forward.2} parent=67 // pred_check_branch
          %799 = sbr.rel (%p797) target = $region80
        $region79: #{model_forward.2} parent=67 // pred_region
          %s800 = sand.u32 %s238, 1
          %s801 = scalar_lea.sflag [#allocation3], %s800
          %s802 = sand.u32 %s238, 1
          %s803 = scalar_lea.vmem [#allocation5], %s802
          %804 = dma.done %s801, 16
        $region80: #{model_forward.2} parent=67 // pred_fallthru
          _
      $region68: #{model_forward.2} parent=5 // pred_fallthru
        _
    $region6: #{model_forward.2} parent=1 // loop_footer
      %s24 = sadd.s32 1, %s20
    $region7: #{model_forward.2} parent=1 // loop_footer_branch
      %19 = sbr.rel target = $region3
    $region8: #{model_forward.2} parent=1 // loop_exit
      _
    %805 = vsyncpa [#allocation3], 1
    %s806 = scalar_lea.sflag [#allocation3], 1
    %807 = vsyncpa %s806, 1
    %808 = vsyncpa [#allocation4], 1
    %s809 = scalar_lea.sflag [#allocation4], 1
    %810 = vsyncpa %s809, 1

</llo_original>
